<compile_context>
chip_gen: v6e
topology: v6e:2x2x1
jax: 0.10.0
libtpu: 0.0.40
codegen_flags: <defaults>
</compile_context>

<pallas_src>
import jax
import jax.numpy as jnp
from jax.experimental import pallas as pl
from jax.experimental.pallas import tpu as pltpu

LANE = 128          # vreg lane width (last dim)
SUBLANE = 8         # f32 sublane count (second-to-last dim)
MIN_SPLIT_ROWS = 256  # only split one tile across 2 cores if each half keeps >= this


def _round_up(x, m):
    return (x + m - 1) // m * m


def _tpu_kind():
    try:
        return jax.devices()[0].device_kind.lower()
    except Exception:
        return ""


def decoder_kernel(e_ref,
                   w1_ref, b1_ref,
                   w2_ref, b2_ref,
                   w3_ref, b3_ref,
                   w4_ref, b4_ref,
                   out_ref):
    # bf16 operands on the MXU, f32 accumulation, f32 bias+ReLU epilogue (VPU).
    x = e_ref[...].astype(jnp.bfloat16)

    # Layer 1: (T, 8) @ (8, 128) -> (T, 128), ReLU
    h = jnp.dot(x, w1_ref[...], preferred_element_type=jnp.float32)
    h = jnp.maximum(h + b1_ref[...], 0.0)

    # Layer 2: (T, 128) @ (128, 512) -> (T, 512), ReLU
    h = jnp.dot(h.astype(jnp.bfloat16), w2_ref[...],
                preferred_element_type=jnp.float32)
    h = jnp.maximum(h + b2_ref[...], 0.0)

    # Layer 3: (T, 512) @ (512, 1024) -> (T, 1024), ReLU
    h = jnp.dot(h.astype(jnp.bfloat16), w3_ref[...],
                preferred_element_type=jnp.float32)
    h = jnp.maximum(h + b3_ref[...], 0.0)

    # Layer 4: (T, 1024) @ (1024, out_dim-padded) -> (T, out_dim), no activation
    h = jnp.dot(h.astype(jnp.bfloat16), w4_ref[...],
                preferred_element_type=jnp.float32)
    out_ref[...] = (h + b4_ref[...]).astype(out_ref.dtype)


def decoder_forward(E, params, *, batch_tile=1024):
    """E: (B, embed_dim) float32. params: dict of transposed f32 weights/biases."""
    B, embed_dim = E.shape
    param_dim = params["w4"].shape[1]

    kind = _tpu_kind()
    wide_mxu = ("v6" in kind) or ("v7" in kind)   # 256-wide MXU columns
    num_tc = 2 if "v7" in kind else 1             # TensorCores per chip
    # 64 MiB scoped VMEM on 128-MiB chips (v5e/v6e); stay at 32 MiB on v7x
    # whose physical VMEM is 64 MiB per TensorCore.
    vmem_limit = (32 if "v7" in kind else 64) * 1024 * 1024

    # bf16 weights (MXU-native), f32 biases (tiny; epilogue stays f32).
    w1 = params["w1"].astype(jnp.bfloat16)
    w2 = params["w2"].astype(jnp.bfloat16)
    w3 = params["w3"].astype(jnp.bfloat16)
    b1, b2, b3 = params["b1"], params["b2"], params["b3"]

    # Lane-dense output: on v6e/v7x pad layer-4 N to 256 to fill the 256-wide
    # MXU; 128 already fills v5e's 128x128 MXU. Sliced back outside.
    lane_mult = 256 if wide_mxu else LANE
    out_dim = _round_up(param_dim, lane_mult)
    w4 = jnp.pad(params["w4"],
                 ((0, 0), (0, out_dim - param_dim))).astype(jnp.bfloat16)
    b4 = jnp.pad(params["b4"], ((0, 0), (0, out_dim - param_dim)))

    # Batch tiling: large sublane-aligned tile; amortizes the ~0.35 us per
    # grid-step overhead and fills MXU rows. Batch is zero-padded to a tile
    # multiple and sliced back.
    tile = max(SUBLANE,
               _round_up(min(batch_tile, _round_up(B, SUBLANE)), SUBLANE))
    padded_B = _round_up(B, tile)
    # Core-count-aware split: only on 2-TC chips, only when the whole batch
    # fits in a single tile, and only when each half still has substantial
    # MXU work (>= MIN_SPLIT_ROWS rows). On 1-TC chips the grid is a serial
    # loop, so splitting would only add per-step overhead.
    if (num_tc >= 2 and padded_B == tile and tile >= 2 * MIN_SPLIT_ROWS
            and (tile // 2) % SUBLANE == 0):
        tile //= 2
    padded_B = _round_up(B, tile)
    if padded_B != B:
        E = jnp.pad(E, ((0, padded_B - B), (0, 0)))

    grid = (padded_B // tile,)

    # Advisory cost estimate so XLA schedules the surrounding pad/slice and
    # upstream producers correctly around the custom call.
    flops = 2 * padded_B * (embed_dim * 128 + 128 * 512 + 512 * 1024
                            + 1024 * out_dim)
    bytes_accessed = int(
        E.size * E.dtype.itemsize
        + sum(int(a.size) * a.dtype.itemsize
              for a in (w1, b1, w2, b2, w3, b3, w4, b4))
        + padded_B * out_dim * 4)
    cost = pl.CostEstimate(flops=flops, transcendentals=0,
                           bytes_accessed=bytes_accessed)

    def build(single_buffer_weights):
        def bcast_spec(shape):
            # Weights/biases are grid-invariant (same block every step);
            # single-buffering frees ~1.4 MB of dead double-buffer VMEM.
            if single_buffer_weights:
                return pl.BlockSpec(shape, lambda i: (0, 0),
                                    pipeline_mode=pl.Buffered(1))
            return pl.BlockSpec(shape, lambda i: (0, 0))

        return pl.pallas_call(
            decoder_kernel,
            out_shape=jax.ShapeDtypeStruct((padded_B, out_dim), jnp.float32),
            grid_spec=pltpu.PrefetchScalarGridSpec(
                num_scalar_prefetch=0,
                grid=grid,
                in_specs=[
                    pl.BlockSpec((tile, embed_dim), lambda i: (i, 0)),
                    bcast_spec(w1.shape), bcast_spec(b1.shape),
                    bcast_spec(w2.shape), bcast_spec(b2.shape),
                    bcast_spec(w3.shape), bcast_spec(b3.shape),
                    bcast_spec(w4.shape), bcast_spec(b4.shape),
                ],
                out_specs=pl.BlockSpec((tile, out_dim), lambda i: (i, 0)),
            ),
            compiler_params=pltpu.CompilerParams(
                dimension_semantics=("parallel",),
                vmem_limit_bytes=vmem_limit,
            ),
            cost_estimate=cost,
        )

    args = (E, w1, b1, w2, b2, w3, b3, w4, b4)
    try:
        out = build(True)(*args)
    except Exception:
        # Portable fallback: some JAX versions reject pipeline_mode on the
        # top-level pallas_call pipeline; default double-buffering of the
        # ~1.65 MB weight set still fits comfortably in the VMEM budget.
        out = build(False)(*args)

    # Strip batch padding and the lane padding of the last layer.
    return out[:B, :param_dim]


def init_decoder_params(key, embed_dim=8, param_dim=100):
    """Deterministic synthetic init. Weights stored transposed: (in, out), f32."""
    dims = [(embed_dim, 128), (128, 512), (512, 1024), (1024, param_dim)]
    params = {}
    keys = jax.random.split(key, 2 * len(dims))
    for idx, (din, dout) in enumerate(dims):
        kw, kb = keys[2 * idx], keys[2 * idx + 1]
        scale = 1.0 / jnp.sqrt(jnp.float32(din))
        params[f"w{idx+1}"] = (
            jax.random.uniform(kw, (din, dout), jnp.float32, -1.0, 1.0) * scale
        )
        params[f"b{idx+1}"] = (
            jax.random.uniform(kb, (1, dout), jnp.float32, -1.0, 1.0) * scale
        )
    return params


def decoder_reference(E, params):
    h = jnp.maximum(E @ params["w1"] + params["b1"], 0.0)
    h = jnp.maximum(h @ params["w2"] + params["b2"], 0.0)
    h = jnp.maximum(h @ params["w3"] + params["b3"], 0.0)
    return h @ params["w4"] + params["b4"]


if __name__ == "__main__":
    key = jax.random.PRNGKey(0)
    k_param, k_input = jax.random.split(key)

    embed_dim, param_dim, batch = 8, 100, 16
    params = init_decoder_params(k_param, embed_dim=embed_dim, param_dim=param_dim)
    E = jax.random.normal(k_input, (batch, embed_dim), dtype=jnp.float32)

    out = decoder_forward(E, params)
    out = jax.block_until_ready(out)

    ref = decoder_reference(E, params)
    assert out.shape == (batch, param_dim)
    # bf16 MXU operands with f32 accumulation -> compare to the f32 reference
    # with a correspondingly loose tolerance.
    assert jnp.allclose(out, ref, atol=3e-2, rtol=3e-2), "mismatch vs reference"

    print("KERNEL_OK")
</pallas_src>

<mosaic_0001>
module attributes {stable_mosaic.version = 11 : i64} {
  func.func @decoder_kernel(%arg0: i32, %arg1: memref<16x8xf32, #tpu.memory_space<vmem>>, %arg2: memref<8x128xbf16, #tpu.memory_space<vmem>>, %arg3: memref<1x128xf32, #tpu.memory_space<vmem>>, %arg4: memref<128x512xbf16, #tpu.memory_space<vmem>>, %arg5: memref<1x512xf32, #tpu.memory_space<vmem>>, %arg6: memref<512x1024xbf16, #tpu.memory_space<vmem>>, %arg7: memref<1x1024xf32, #tpu.memory_space<vmem>>, %arg8: memref<1024x128xbf16, #tpu.memory_space<vmem>>, %arg9: memref<1x128xf32, #tpu.memory_space<vmem>>, %arg10: memref<16x128xf32, #tpu.memory_space<vmem>>) attributes {dimension_semantics = [#tpu.dimension_semantics<parallel>], iteration_bounds = array<i64: 1>, scalar_prefetch = 0 : i64, scratch_operands = 0 : i64, tpu.core_type = #tpu.core_type<tc>, window_params = [{transform_indices = @transform_0, window_bounds = array<i64: 16, 8>}, {pipeline_mode = #tpu.pipeline_mode<synchronous>, transform_indices = @transform_1, window_bounds = array<i64: 8, 128>}, {pipeline_mode = #tpu.pipeline_mode<synchronous>, transform_indices = @transform_2, window_bounds = array<i64: 1, 128>}, {pipeline_mode = #tpu.pipeline_mode<synchronous>, transform_indices = @transform_3, window_bounds = array<i64: 128, 512>}, {pipeline_mode = #tpu.pipeline_mode<synchronous>, transform_indices = @transform_4, window_bounds = array<i64: 1, 512>}, {pipeline_mode = #tpu.pipeline_mode<synchronous>, transform_indices = @transform_5, window_bounds = array<i64: 512, 1024>}, {pipeline_mode = #tpu.pipeline_mode<synchronous>, transform_indices = @transform_6, window_bounds = array<i64: 1, 1024>}, {pipeline_mode = #tpu.pipeline_mode<synchronous>, transform_indices = @transform_7, window_bounds = array<i64: 1024, 128>}, {pipeline_mode = #tpu.pipeline_mode<synchronous>, transform_indices = @transform_8, window_bounds = array<i64: 1, 128>}, {transform_indices = @transform_9, window_bounds = array<i64: 16, 128>}]} {
    %c0 = arith.constant 0 : index
    %c0_0 = arith.constant 0 : index
    %0 = vector.load %arg1[%c0, %c0_0] : memref<16x8xf32, #tpu.memory_space<vmem>>, vector<16x8xf32>
    %1 = arith.truncf %0 : vector<16x8xf32> to vector<16x8xbf16>
    %c0_1 = arith.constant 0 : index
    %c0_2 = arith.constant 0 : index
    %2 = vector.load %arg2[%c0_1, %c0_2] : memref<8x128xbf16, #tpu.memory_space<vmem>>, vector<8x128xbf16>
    %cst = arith.constant dense<0.000000e+00> : vector<16x128xf32>
    %3 = tpu.matmul %1, %2, %cst {dimension_numbers = #tpu.dot_dimension_numbers<[1], [0], [0], [1], [0, 0, 1, 1], [], []>} : vector<16x8xbf16>, vector<8x128xbf16>, vector<16x128xf32> -> vector<16x128xf32>
    %c0_3 = arith.constant 0 : index
    %c0_4 = arith.constant 0 : index
    %4 = vector.load %arg3[%c0_3, %c0_4] : memref<1x128xf32, #tpu.memory_space<vmem>>, vector<1x128xf32>
    %5 = vector.broadcast %4 : vector<1x128xf32> to vector<16x128xf32>
    %6 = arith.addf %3, %5 : vector<16x128xf32>
    %cst_5 = arith.constant 0.000000e+00 : f32
    %7 = vector.broadcast %cst_5 : f32 to vector<16x128xf32>
    %8 = arith.maximumf %6, %7 : vector<16x128xf32>
    %9 = arith.truncf %8 : vector<16x128xf32> to vector<16x128xbf16>
    %c0_6 = arith.constant 0 : index
    %c0_7 = arith.constant 0 : index
    %10 = vector.load %arg4[%c0_6, %c0_7] : memref<128x512xbf16, #tpu.memory_space<vmem>>, vector<128x512xbf16>
    %cst_8 = arith.constant dense<0.000000e+00> : vector<16x512xf32>
    %11 = tpu.matmul %9, %10, %cst_8 {dimension_numbers = #tpu.dot_dimension_numbers<[1], [0], [0], [1], [0, 0, 1, 1], [], []>} : vector<16x128xbf16>, vector<128x512xbf16>, vector<16x512xf32> -> vector<16x512xf32>
    %c0_9 = arith.constant 0 : index
    %c0_10 = arith.constant 0 : index
    %12 = vector.load %arg5[%c0_9, %c0_10] : memref<1x512xf32, #tpu.memory_space<vmem>>, vector<1x512xf32>
    %13 = vector.broadcast %12 : vector<1x512xf32> to vector<16x512xf32>
    %14 = arith.addf %11, %13 : vector<16x512xf32>
    %cst_11 = arith.constant 0.000000e+00 : f32
    %15 = vector.broadcast %cst_11 : f32 to vector<16x512xf32>
    %16 = arith.maximumf %14, %15 : vector<16x512xf32>
    %17 = arith.truncf %16 : vector<16x512xf32> to vector<16x512xbf16>
    %c0_12 = arith.constant 0 : index
    %c0_13 = arith.constant 0 : index
    %18 = vector.load %arg6[%c0_12, %c0_13] : memref<512x1024xbf16, #tpu.memory_space<vmem>>, vector<512x1024xbf16>
    %cst_14 = arith.constant dense<0.000000e+00> : vector<16x1024xf32>
    %19 = tpu.matmul %17, %18, %cst_14 {dimension_numbers = #tpu.dot_dimension_numbers<[1], [0], [0], [1], [0, 0, 1, 1], [], []>} : vector<16x512xbf16>, vector<512x1024xbf16>, vector<16x1024xf32> -> vector<16x1024xf32>
    %c0_15 = arith.constant 0 : index
    %c0_16 = arith.constant 0 : index
    %20 = vector.load %arg7[%c0_15, %c0_16] : memref<1x1024xf32, #tpu.memory_space<vmem>>, vector<1x1024xf32>
    %21 = vector.broadcast %20 : vector<1x1024xf32> to vector<16x1024xf32>
    %22 = arith.addf %19, %21 : vector<16x1024xf32>
    %cst_17 = arith.constant 0.000000e+00 : f32
    %23 = vector.broadcast %cst_17 : f32 to vector<16x1024xf32>
    %24 = arith.maximumf %22, %23 : vector<16x1024xf32>
    %25 = arith.truncf %24 : vector<16x1024xf32> to vector<16x1024xbf16>
    %c0_18 = arith.constant 0 : index
    %c0_19 = arith.constant 0 : index
    %26 = vector.load %arg8[%c0_18, %c0_19] : memref<1024x128xbf16, #tpu.memory_space<vmem>>, vector<1024x128xbf16>
    %cst_20 = arith.constant dense<0.000000e+00> : vector<16x128xf32>
    %27 = tpu.matmul %25, %26, %cst_20 {dimension_numbers = #tpu.dot_dimension_numbers<[1], [0], [0], [1], [0, 0, 1, 1], [], []>} : vector<16x1024xbf16>, vector<1024x128xbf16>, vector<16x128xf32> -> vector<16x128xf32>
    %c0_21 = arith.constant 0 : index
    %c0_22 = arith.constant 0 : index
    %28 = vector.load %arg9[%c0_21, %c0_22] : memref<1x128xf32, #tpu.memory_space<vmem>>, vector<1x128xf32>
    %29 = vector.broadcast %28 : vector<1x128xf32> to vector<16x128xf32>
    %30 = arith.addf %27, %29 : vector<16x128xf32>
    %c0_23 = arith.constant 0 : index
    %c0_24 = arith.constant 0 : index
    %31 = vector.load %arg10[%c0_23, %c0_24] : memref<16x128xf32, #tpu.memory_space<vmem>>, vector<16x128xf32>
    tpu.vector_store %arg10[%c0_23, %c0_24], %30 {strides = array<i32>} : memref<16x128xf32, #tpu.memory_space<vmem>>, vector<16x128xf32>,
    return
  }
  func.func @transform_0(%arg0: i32) -> (i32, i32) {
    %c0_i32 = arith.constant 0 : i32
    %c0_i32_0 = arith.constant 0 : i32
    return %arg0, %c0_i32 : i32, i32
  }
  func.func @transform_1(%arg0: i32) -> (i32, i32) {
    %c0_i32 = arith.constant 0 : i32
    %c0_i32_0 = arith.constant 0 : i32
    %c0_i32_1 = arith.constant 0 : i32
    return %c0_i32, %c0_i32_0 : i32, i32
  }
  func.func @transform_2(%arg0: i32) -> (i32, i32) {
    %c0_i32 = arith.constant 0 : i32
    %c0_i32_0 = arith.constant 0 : i32
    %c0_i32_1 = arith.constant 0 : i32
    return %c0_i32, %c0_i32_0 : i32, i32
  }
  func.func @transform_3(%arg0: i32) -> (i32, i32) {
    %c0_i32 = arith.constant 0 : i32
    %c0_i32_0 = arith.constant 0 : i32
    %c0_i32_1 = arith.constant 0 : i32
    return %c0_i32, %c0_i32_0 : i32, i32
  }
  func.func @transform_4(%arg0: i32) -> (i32, i32) {
    %c0_i32 = arith.constant 0 : i32
    %c0_i32_0 = arith.constant 0 : i32
    %c0_i32_1 = arith.constant 0 : i32
    return %c0_i32, %c0_i32_0 : i32, i32
  }
  func.func @transform_5(%arg0: i32) -> (i32, i32) {
    %c0_i32 = arith.constant 0 : i32
    %c0_i32_0 = arith.constant 0 : i32
    %c0_i32_1 = arith.constant 0 : i32
    return %c0_i32, %c0_i32_0 : i32, i32
  }
  func.func @transform_6(%arg0: i32) -> (i32, i32) {
    %c0_i32 = arith.constant 0 : i32
    %c0_i32_0 = arith.constant 0 : i32
    %c0_i32_1 = arith.constant 0 : i32
    return %c0_i32, %c0_i32_0 : i32, i32
  }
  func.func @transform_7(%arg0: i32) -> (i32, i32) {
    %c0_i32 = arith.constant 0 : i32
    %c0_i32_0 = arith.constant 0 : i32
    %c0_i32_1 = arith.constant 0 : i32
    return %c0_i32, %c0_i32_0 : i32, i32
  }
  func.func @transform_8(%arg0: i32) -> (i32, i32) {
    %c0_i32 = arith.constant 0 : i32
    %c0_i32_0 = arith.constant 0 : i32
    %c0_i32_1 = arith.constant 0 : i32
    return %c0_i32, %c0_i32_0 : i32, i32
  }
  func.func @transform_9(%arg0: i32) -> (i32, i32) {
    %c0_i32 = arith.constant 0 : i32
    %c0_i32_0 = arith.constant 0 : i32
    return %arg0, %c0_i32 : i32, i32
  }
}

module attributes {stable_mosaic.version = 11 : i64} {
  func.func @decoder_kernel(%arg0: i32, %arg1: memref<16x8xf32, #tpu.memory_space<vmem>>, %arg2: memref<8x128xbf16, #tpu.memory_space<vmem>>, %arg3: memref<1x128xf32, #tpu.memory_space<vmem>>, %arg4: memref<128x512xbf16, #tpu.memory_space<vmem>>, %arg5: memref<1x512xf32, #tpu.memory_space<vmem>>, %arg6: memref<512x1024xbf16, #tpu.memory_space<vmem>>, %arg7: memref<1x1024xf32, #tpu.memory_space<vmem>>, %arg8: memref<1024x128xbf16, #tpu.memory_space<vmem>>, %arg9: memref<1x128xf32, #tpu.memory_space<vmem>>, %arg10: memref<16x128xf32, #tpu.memory_space<vmem>>) attributes {dimension_semantics = [#tpu.dimension_semantics<parallel>], iteration_bounds = array<i64: 1>, scalar_prefetch = 0 : i64, scratch_operands = 0 : i64, tpu.core_type = #tpu.core_type<tc>, window_params = [{transform_indices = @transform_0, window_bounds = array<i64: 16, 8>}, {pipeline_mode = #tpu.pipeline_mode<synchronous>, transform_indices = @transform_1, window_bounds = array<i64: 8, 128>}, {pipeline_mode = #tpu.pipeline_mode<synchronous>, transform_indices = @transform_2, window_bounds = array<i64: 1, 128>}, {pipeline_mode = #tpu.pipeline_mode<synchronous>, transform_indices = @transform_3, window_bounds = array<i64: 128, 512>}, {pipeline_mode = #tpu.pipeline_mode<synchronous>, transform_indices = @transform_4, window_bounds = array<i64: 1, 512>}, {pipeline_mode = #tpu.pipeline_mode<synchronous>, transform_indices = @transform_5, window_bounds = array<i64: 512, 1024>}, {pipeline_mode = #tpu.pipeline_mode<synchronous>, transform_indices = @transform_6, window_bounds = array<i64: 1, 1024>}, {pipeline_mode = #tpu.pipeline_mode<synchronous>, transform_indices = @transform_7, window_bounds = array<i64: 1024, 128>}, {pipeline_mode = #tpu.pipeline_mode<synchronous>, transform_indices = @transform_8, window_bounds = array<i64: 1, 128>}, {transform_indices = @transform_9, window_bounds = array<i64: 16, 128>}]} {
    %c0 = arith.constant 0 : index
    %c0_0 = arith.constant 0 : index
    %0 = vector.load %arg1[%c0, %c0_0] : memref<16x8xf32, #tpu.memory_space<vmem>>, vector<16x8xf32>
    %1 = arith.truncf %0 : vector<16x8xf32> to vector<16x8xbf16>
    %c0_1 = arith.constant 0 : index
    %c0_2 = arith.constant 0 : index
    %2 = vector.load %arg2[%c0_1, %c0_2] : memref<8x128xbf16, #tpu.memory_space<vmem>>, vector<8x128xbf16>
    %cst = arith.constant dense<0.000000e+00> : vector<16x128xf32>
    %3 = tpu.matmul %1, %2, %cst {dimension_numbers = #tpu.dot_dimension_numbers<[1], [0], [0], [1], [0, 0, 1, 1], [], []>} : vector<16x8xbf16>, vector<8x128xbf16>, vector<16x128xf32> -> vector<16x128xf32>
    %c0_3 = arith.constant 0 : index
    %c0_4 = arith.constant 0 : index
    %4 = vector.load %arg3[%c0_3, %c0_4] : memref<1x128xf32, #tpu.memory_space<vmem>>, vector<1x128xf32>
    %5 = vector.broadcast %4 : vector<1x128xf32> to vector<16x128xf32>
    %6 = arith.addf %3, %5 : vector<16x128xf32>
    %cst_5 = arith.constant 0.000000e+00 : f32
    %7 = vector.broadcast %cst_5 : f32 to vector<16x128xf32>
    %8 = arith.maximumf %6, %7 : vector<16x128xf32>
    %9 = arith.truncf %8 : vector<16x128xf32> to vector<16x128xbf16>
    %c0_6 = arith.constant 0 : index
    %c0_7 = arith.constant 0 : index
    %10 = vector.load %arg4[%c0_6, %c0_7] : memref<128x512xbf16, #tpu.memory_space<vmem>>, vector<128x512xbf16>
    %cst_8 = arith.constant dense<0.000000e+00> : vector<16x512xf32>
    %11 = tpu.matmul %9, %10, %cst_8 {dimension_numbers = #tpu.dot_dimension_numbers<[1], [0], [0], [1], [0, 0, 1, 1], [], []>} : vector<16x128xbf16>, vector<128x512xbf16>, vector<16x512xf32> -> vector<16x512xf32>
    %c0_9 = arith.constant 0 : index
    %c0_10 = arith.constant 0 : index
    %12 = vector.load %arg5[%c0_9, %c0_10] : memref<1x512xf32, #tpu.memory_space<vmem>>, vector<1x512xf32>
    %13 = vector.broadcast %12 : vector<1x512xf32> to vector<16x512xf32>
    %14 = arith.addf %11, %13 : vector<16x512xf32>
    %cst_11 = arith.constant 0.000000e+00 : f32
    %15 = vector.broadcast %cst_11 : f32 to vector<16x512xf32>
    %16 = arith.maximumf %14, %15 : vector<16x512xf32>
    %17 = arith.truncf %16 : vector<16x512xf32> to vector<16x512xbf16>
    %c0_12 = arith.constant 0 : index
    %c0_13 = arith.constant 0 : index
    %18 = vector.load %arg6[%c0_12, %c0_13] : memref<512x1024xbf16, #tpu.memory_space<vmem>>, vector<512x1024xbf16>
    %cst_14 = arith.constant dense<0.000000e+00> : vector<16x1024xf32>
    %19 = tpu.matmul %17, %18, %cst_14 {dimension_numbers = #tpu.dot_dimension_numbers<[1], [0], [0], [1], [0, 0, 1, 1], [], []>} : vector<16x512xbf16>, vector<512x1024xbf16>, vector<16x1024xf32> -> vector<16x1024xf32>
    %c0_15 = arith.constant 0 : index
    %c0_16 = arith.constant 0 : index
    %20 = vector.load %arg7[%c0_15, %c0_16] : memref<1x1024xf32, #tpu.memory_space<vmem>>, vector<1x1024xf32>
    %21 = vector.broadcast %20 : vector<1x1024xf32> to vector<16x1024xf32>
    %22 = arith.addf %19, %21 : vector<16x1024xf32>
    %cst_17 = arith.constant 0.000000e+00 : f32
    %23 = vector.broadcast %cst_17 : f32 to vector<16x1024xf32>
    %24 = arith.maximumf %22, %23 : vector<16x1024xf32>
    %25 = arith.truncf %24 : vector<16x1024xf32> to vector<16x1024xbf16>
    %c0_18 = arith.constant 0 : index
    %c0_19 = arith.constant 0 : index
    %26 = vector.load %arg8[%c0_18, %c0_19] : memref<1024x128xbf16, #tpu.memory_space<vmem>>, vector<1024x128xbf16>
    %cst_20 = arith.constant dense<0.000000e+00> : vector<16x128xf32>
    %27 = tpu.matmul %25, %26, %cst_20 {dimension_numbers = #tpu.dot_dimension_numbers<[1], [0], [0], [1], [0, 0, 1, 1], [], []>} : vector<16x1024xbf16>, vector<1024x128xbf16>, vector<16x128xf32> -> vector<16x128xf32>
    %c0_21 = arith.constant 0 : index
    %c0_22 = arith.constant 0 : index
    %28 = vector.load %arg9[%c0_21, %c0_22] : memref<1x128xf32, #tpu.memory_space<vmem>>, vector<1x128xf32>
    %29 = vector.broadcast %28 : vector<1x128xf32> to vector<16x128xf32>
    %30 = arith.addf %27, %29 : vector<16x128xf32>
    %c0_23 = arith.constant 0 : index
    %c0_24 = arith.constant 0 : index
    %31 = vector.load %arg10[%c0_23, %c0_24] : memref<16x128xf32, #tpu.memory_space<vmem>>, vector<16x128xf32>
    tpu.vector_store %arg10[%c0_23, %c0_24], %30 {strides = array<i32>} : memref<16x128xf32, #tpu.memory_space<vmem>>, vector<16x128xf32>,
    return
  }
  func.func @transform_0(%arg0: i32) -> (i32, i32) {
    %c0_i32 = arith.constant 0 : i32
    %c0_i32_0 = arith.constant 0 : i32
    return %arg0, %c0_i32 : i32, i32
  }
  func.func @transform_1(%arg0: i32) -> (i32, i32) {
    %c0_i32 = arith.constant 0 : i32
    %c0_i32_0 = arith.constant 0 : i32
    %c0_i32_1 = arith.constant 0 : i32
    return %c0_i32, %c0_i32_0 : i32, i32
  }
  func.func @transform_2(%arg0: i32) -> (i32, i32) {
    %c0_i32 = arith.constant 0 : i32
    %c0_i32_0 = arith.constant 0 : i32
    %c0_i32_1 = arith.constant 0 : i32
    return %c0_i32, %c0_i32_0 : i32, i32
  }
  func.func @transform_3(%arg0: i32) -> (i32, i32) {
    %c0_i32 = arith.constant 0 : i32
    %c0_i32_0 = arith.constant 0 : i32
    %c0_i32_1 = arith.constant 0 : i32
    return %c0_i32, %c0_i32_0 : i32, i32
  }
  func.func @transform_4(%arg0: i32) -> (i32, i32) {
    %c0_i32 = arith.constant 0 : i32
    %c0_i32_0 = arith.constant 0 : i32
    %c0_i32_1 = arith.constant 0 : i32
    return %c0_i32, %c0_i32_0 : i32, i32
  }
  func.func @transform_5(%arg0: i32) -> (i32, i32) {
    %c0_i32 = arith.constant 0 : i32
    %c0_i32_0 = arith.constant 0 : i32
    %c0_i32_1 = arith.constant 0 : i32
    return %c0_i32, %c0_i32_0 : i32, i32
  }
  func.func @transform_6(%arg0: i32) -> (i32, i32) {
    %c0_i32 = arith.constant 0 : i32
    %c0_i32_0 = arith.constant 0 : i32
    %c0_i32_1 = arith.constant 0 : i32
    return %c0_i32, %c0_i32_0 : i32, i32
  }
  func.func @transform_7(%arg0: i32) -> (i32, i32) {
    %c0_i32 = arith.constant 0 : i32
    %c0_i32_0 = arith.constant 0 : i32
    %c0_i32_1 = arith.constant 0 : i32
    return %c0_i32, %c0_i32_0 : i32, i32
  }
  func.func @transform_8(%arg0: i32) -> (i32, i32) {
    %c0_i32 = arith.constant 0 : i32
    %c0_i32_0 = arith.constant 0 : i32
    %c0_i32_1 = arith.constant 0 : i32
    return %c0_i32, %c0_i32_0 : i32, i32
  }
  func.func @transform_9(%arg0: i32) -> (i32, i32) {
    %c0_i32 = arith.constant 0 : i32
    %c0_i32_0 = arith.constant 0 : i32
    return %arg0, %c0_i32 : i32, i32
  }
}

</mosaic_0001>

<llo_original>
// kernel: tpu_custom_call.1
$region0: #{tpu_custom_call.1}
  #allocation0 [shape = 'u32[]', space=smem, size = 0x4, offset = 0x4, fixed_abs, tag = 'smem constant byte address 0x4 - core index']
  #allocation1 [shape = 'u32[144,128]{1,0:T(1,128)}', space=vmem, size = 0x12000, scoped, tag = 'internal scratch']
  %s0 = inlined_call_operand.vmem [shape: f32[16,8], index: 0, kind: input, shape index: {}]
  %s1 = inlined_call_operand.vmem [shape: bf16[8,128], index: 1, kind: input, shape index: {}]
  %s2 = inlined_call_operand.vmem [shape: f32[1,128], index: 2, kind: input, shape index: {}]
  %s3 = inlined_call_operand.hbm [shape: bf16[128,512], index: 3, kind: input, shape index: {}]
  %s4 = inlined_call_operand.vmem [shape: f32[1,512], index: 4, kind: input, shape index: {}]
  %s5 = inlined_call_operand.hbm [shape: bf16[512,1024], index: 5, kind: input, shape index: {}]
  %s6 = inlined_call_operand.vmem [shape: f32[1,1024], index: 6, kind: input, shape index: {}]
  %s7 = inlined_call_operand.hbm [shape: bf16[1024,128], index: 7, kind: input, shape index: {}]
  %s8 = inlined_call_operand.vmem [shape: f32[1,128], index: 8, kind: input, shape index: {}]
  %s9 = inlined_call_operand.hbm [shape: f32[16,128], index: 9, kind: output, shape index: {}]
  %s10 = sld [smem:[#allocation0]]
  $region58: #{tpu_custom_call.1} parent=0
    _
  %s12 = ssub.s32 1, %s10
  %s13 = scalar_select 0, %s12, %s10
  $region1: #{tpu_custom_call.1} parent=0
    #allocation2 [shape = 'u8[131072]{0}', space=vmem, size = 0x20000, scoped, tag = 'input window, operand 3, single buffered']
    #allocation3 [shape = 's32[1]{0}', space=sflag, size = 0x4, scoped, tag = 'scoped memory for tpu_custom_call.1']
    #allocation4 [shape = 's32[1]{0}', space=sflag, size = 0x4, scoped, tag = 'scoped memory for tpu_custom_call.1']
    #allocation5 [shape = 'u8[1048576]{0}', space=vmem, size = 0x100000, scoped, tag = 'input window, operand 5, single buffered']
    #allocation6 [shape = 's32[1]{0}', space=sflag, size = 0x4, scoped, tag = 'scoped memory for tpu_custom_call.1']
    #allocation7 [shape = 'u8[262144]{0}', space=vmem, size = 0x40000, scoped, tag = 'input window, operand 7, single buffered']
    #allocation8 [shape = 'u8[8192]{0}', space=vmem, size = 0x2000, scoped, tag = 'output window, operand 0, single buffered']
    %14 = vsyncpa [#allocation3], 0
    %15 = vsyncpa [#allocation6], 0
    %16 = vsyncpa [#allocation4], 0
    // Predicated region
    $region2: #{tpu_custom_call.1} parent=1 // pred_check
      _
    $region3: #{tpu_custom_call.1} parent=1 // pred_check_branch
      %18 = sbr.rel (0) target = $region5
    $region4: #{tpu_custom_call.1} parent=1 // pred_region
      _
    $region5: #{tpu_custom_call.1} parent=1 // pred_fallthru
      _
    // Predicated region
    $region6: #{tpu_custom_call.1} parent=1 // pred_check
      _
    $region7: #{tpu_custom_call.1} parent=1 // pred_check_branch
      %20 = sbr.rel (0) target = $region9
    $region8: #{tpu_custom_call.1} parent=1 // pred_region
      _
    $region9: #{tpu_custom_call.1} parent=1 // pred_fallthru
      _
    // Predicated region
    $region10: #{tpu_custom_call.1} parent=1 // pred_check
      _
    $region11: #{tpu_custom_call.1} parent=1 // pred_check_branch
      %22 = sbr.rel (0) target = $region13
    $region12: #{tpu_custom_call.1} parent=1 // pred_region
      _
    $region13: #{tpu_custom_call.1} parent=1 // pred_fallthru
      _
    // Predicated region
    $region14: #{tpu_custom_call.1} parent=1 // pred_check
      _
    $region15: #{tpu_custom_call.1} parent=1 // pred_check_branch
      %24 = sbr.rel (0) target = $region17
    $region16: #{tpu_custom_call.1} parent=1 // pred_region
      %s26 = ssub.s32 4096, 4096
      %27 = vsyncadd [#allocation3], %s26
      %s28 = sshll.u32 [#allocation2], 4
      %s29 = int_to_ptr.vmem [resolvable:$true] %s28
      %34 = dma.hbm_to_vmem [thread:$0]  %s3, 4096, %s29, [#allocation3], 256, 256, 16
    $region17: #{tpu_custom_call.1} parent=1 // pred_fallthru
      _
    // Predicated region
    $region18: #{tpu_custom_call.1} parent=1 // pred_check
      _
    $region19: #{tpu_custom_call.1} parent=1 // pred_check_branch
      %36 = sbr.rel (0) target = $region21
    $region20: #{tpu_custom_call.1} parent=1 // pred_region
      _
    $region21: #{tpu_custom_call.1} parent=1 // pred_fallthru
      _
    // Predicated region
    $region22: #{tpu_custom_call.1} parent=1 // pred_check
      _
    $region23: #{tpu_custom_call.1} parent=1 // pred_check_branch
      %38 = sbr.rel (0) target = $region25
    $region24: #{tpu_custom_call.1} parent=1 // pred_region
      %s40 = ssub.s32 32768, 32768
      %41 = vsyncadd [#allocation6], %s40
      %s42 = sshll.u32 [#allocation5], 4
      %s43 = int_to_ptr.vmem [resolvable:$true] %s42
      %48 = dma.hbm_to_vmem [thread:$0]  %s5, 32768, %s43, [#allocation6], 512, 512, 32
    $region25: #{tpu_custom_call.1} parent=1 // pred_fallthru
      _
    // Predicated region
    $region26: #{tpu_custom_call.1} parent=1 // pred_check
      _
    $region27: #{tpu_custom_call.1} parent=1 // pred_check_branch
      %50 = sbr.rel (0) target = $region29
    $region28: #{tpu_custom_call.1} parent=1 // pred_region
      _
    $region29: #{tpu_custom_call.1} parent=1 // pred_fallthru
      _
    // Predicated region
    $region30: #{tpu_custom_call.1} parent=1 // pred_check
      _
    $region31: #{tpu_custom_call.1} parent=1 // pred_check_branch
      %52 = sbr.rel (0) target = $region33
    $region32: #{tpu_custom_call.1} parent=1 // pred_region
      %s54 = ssub.s32 8192, 8192
      %55 = vsyncadd [#allocation6], %s54
      %s56 = sshll.u32 [#allocation7], 4
      %s57 = int_to_ptr.vmem [resolvable:$true] %s56
      %62 = dma.hbm_to_vmem [thread:$0]  %s7, 8192, %s57, [#allocation6], 64, 64, 4
    $region33: #{tpu_custom_call.1} parent=1 // pred_fallthru
      _
    // Predicated region
    $region34: #{tpu_custom_call.1} parent=1 // pred_check
      _
    $region35: #{tpu_custom_call.1} parent=1 // pred_check_branch
      %64 = sbr.rel (0) target = $region37
    $region36: #{tpu_custom_call.1} parent=1 // pred_region
      _
    $region37: #{tpu_custom_call.1} parent=1 // pred_fallthru
      _
    // Predicated region
    $region38: #{tpu_custom_call.1} parent=1 // pred_check
      _
    $region39: #{tpu_custom_call.1} parent=1 // pred_check_branch
      %66 = sbr.rel (0) target = $region41
    $region40: #{tpu_custom_call.1} parent=1 // pred_region
      %67 = dma.done [#allocation3], 4096
    $region41: #{tpu_custom_call.1} parent=1 // pred_fallthru
      _
    // Predicated region
    $region42: #{tpu_custom_call.1} parent=1 // pred_check
      _
    $region43: #{tpu_custom_call.1} parent=1 // pred_check_branch
      %69 = sbr.rel (0) target = $region45
    $region44: #{tpu_custom_call.1} parent=1 // pred_region
      %70 = dma.done [#allocation6], 32768
    $region45: #{tpu_custom_call.1} parent=1 // pred_fallthru
      _
    // Predicated region
    $region46: #{tpu_custom_call.1} parent=1 // pred_check
      _
    $region47: #{tpu_custom_call.1} parent=1 // pred_check_branch
      %72 = sbr.rel (0) target = $region49
    $region48: #{tpu_custom_call.1} parent=1 // pred_region
      %73 = dma.done [#allocation6], 8192
    $region49: #{tpu_custom_call.1} parent=1 // pred_fallthru
      _
    %v75 = vld [vmem:[%s0] sm:$0xff]
    %v76 = vld [vmem:[%s0 + $0x8] sm:$0xff]
    %v77 = vpack.c.bf16 %v76, %v75
    %v78 = vld [vmem:[%s1] sm:$0xf]
    %v79 = vld [vmem:[%s2] sm:$0x1]
    %v81 = vlaneseq
    %v82 = vshrl.u32 %v81, 7
    %v83 = vsub.s32 0, %v82
    %v84 = vrot.slane %v79, %v83
    %vm86 = vcmask 64512
    %v88 = vsel %vm86, %v77, 0
    %vm90 = vcmask 1043456
    %v92 = vsel %vm90, %v78, 0
    %94 = vmatprep.subr.bf16.mxu0 0
    %95 = vmatpush1.bf16.msra.mxu0 0
    %96 = vmatprep.subr.bf16.mxu0 0
    %97 = vmatpush1.bf16.msra.mxu0 0
    %98 = vmatprep.subr.bf16.mxu0 0
    %99 = vmatpush1.bf16.msra.mxu0 0
    %100 = vmatprep.subr.bf16.mxu0 0
    %101 = vmatpush1.bf16.msra.mxu0 0
    %102 = vmatprep.subr.bf16.mxu0 0
    %103 = vmatpush1.bf16.msra.mxu0 0
    %104 = vmatprep.subr.bf16.mxu0 0
    %105 = vmatpush1.bf16.msra.mxu0 0
    %106 = vmatprep.subr.bf16.mxu0 0
    %107 = vmatpush1.bf16.msra.mxu0 0
    %108 = vmatprep.subr.bf16.mxu0 0
    %109 = vmatpush1.bf16.msra.mxu0 %v92
    %110 = vmatprep.subr.bf16.mxu0 0
    %111 = vmatpush2.bf16.msra.mxu0 0
    %112 = vmatprep.subr.bf16.mxu0 0
    %113 = vmatpush2.bf16.msra.mxu0 0
    %114 = vmatprep.subr.bf16.mxu0 0
    %115 = vmatpush2.bf16.msra.mxu0 0
    %116 = vmatprep.subr.bf16.mxu0 0
    %117 = vmatpush2.bf16.msra.mxu0 0
    %118 = vmatprep.subr.bf16.mxu0 0
    %119 = vmatpush2.bf16.msra.mxu0 0
    %120 = vmatprep.subr.bf16.mxu0 0
    %121 = vmatpush2.bf16.msra.mxu0 0
    %122 = vmatprep.subr.bf16.mxu0 0
    %123 = vmatpush2.bf16.msra.mxu0 0
    %124 = vmatprep.subr.bf16.mxu0 0
    %125 = vmatpush2.bf16.msra.mxu0 0
    %126 = vmatprep.mubr.bf16.mxu0 0
    %127 = vmatmul.mubr.bf16.gmra.mxu0 %v88
    %v128 = vpop.f32.mrf.mxu0
    %v129 = vadd.f32 %v84, %v128
    %v130 = vpop.f32.mrf.mxu0
    %v131 = vpop.f32.mrf.mxu0
    %v132 = vadd.f32 %v84, %v131
    %v133 = vpop.f32.mrf.mxu0
    %134 = vdwg.mxu0
    %v135 = vmax.f32 %v129, 0.0
    %v136 = vmax.f32 %v132, 0.0
    %v137 = vpack.c.bf16 %v136, %v135
    %v138 = vld [vmem:[#allocation2] sm:$0xff]
    %v139 = vld [vmem:[#allocation2 + $0x8] sm:$0xff]
    %v140 = vld [vmem:[#allocation2 + $0x10] sm:$0xff]
    %v141 = vld [vmem:[#allocation2 + $0x18] sm:$0xff]
    %v142 = vld [vmem:[#allocation2 + $0x20] sm:$0xff]
    %v143 = vld [vmem:[#allocation2 + $0x28] sm:$0xff]
    %v144 = vld [vmem:[#allocation2 + $0x30] sm:$0xff]
    %v145 = vld [vmem:[#allocation2 + $0x38] sm:$0xff]
    %v146 = vld [vmem:[#allocation2 + $0x40] sm:$0xff]
    %v147 = vld [vmem:[#allocation2 + $0x48] sm:$0xff]
    %v148 = vld [vmem:[#allocation2 + $0x50] sm:$0xff]
    %v149 = vld [vmem:[#allocation2 + $0x58] sm:$0xff]
    %v150 = vld [vmem:[#allocation2 + $0x60] sm:$0xff]
    %v151 = vld [vmem:[#allocation2 + $0x68] sm:$0xff]
    %v152 = vld [vmem:[#allocation2 + $0x70] sm:$0xff]
    %v153 = vld [vmem:[#allocation2 + $0x78] sm:$0xff]
    %v154 = vld [vmem:[#allocation2 + $0x80] sm:$0xff]
    %v155 = vld [vmem:[#allocation2 + $0x88] sm:$0xff]
    %v156 = vld [vmem:[#allocation2 + $0x90] sm:$0xff]
    %v157 = vld [vmem:[#allocation2 + $0x98] sm:$0xff]
    %v158 = vld [vmem:[#allocation2 + $0xa0] sm:$0xff]
    %v159 = vld [vmem:[#allocation2 + $0xa8] sm:$0xff]
    %v160 = vld [vmem:[#allocation2 + $0xb0] sm:$0xff]
    %v161 = vld [vmem:[#allocation2 + $0xb8] sm:$0xff]
    %v162 = vld [vmem:[#allocation2 + $0xc0] sm:$0xff]
    %v163 = vld [vmem:[#allocation2 + $0xc8] sm:$0xff]
    %v164 = vld [vmem:[#allocation2 + $0xd0] sm:$0xff]
    %v165 = vld [vmem:[#allocation2 + $0xd8] sm:$0xff]
    %v166 = vld [vmem:[#allocation2 + $0xe0] sm:$0xff]
    %v167 = vld [vmem:[#allocation2 + $0xe8] sm:$0xff]
    %v168 = vld [vmem:[#allocation2 + $0xf0] sm:$0xff]
    %v169 = vld [vmem:[#allocation2 + $0xf8] sm:$0xff]
    %v170 = vld [vmem:[%s4] sm:$0xf]
    %v172 = vlaneseq
    %v173 = vshrl.u32 %v172, 7
    %v174 = vsub.s32 0, %v173
    %v175 = vrot.slane %v170, %v174
    %v176 = vlaneseq
    %v177 = vshrl.u32 %v176, 7
    %v178 = vsub.s32 1, %v177
    %v179 = vrot.slane %v170, %v178
    %v180 = vlaneseq
    %v181 = vshrl.u32 %v180, 7
    %v182 = vsub.s32 2, %v181
    %v183 = vrot.slane %v170, %v182
    %v184 = vlaneseq
    %v185 = vshrl.u32 %v184, 7
    %v186 = vsub.s32 3, %v185
    %v187 = vrot.slane %v170, %v186
    %v224 = vunpack.c.l.b16 %v138
    %v225 = vunpack.c.h.b16 %v138
    %v226 = vunpack.c.l.b16 %v139
    %v227 = vunpack.c.h.b16 %v139
    %v228 = vunpack.c.l.b16 %v140
    %v229 = vunpack.c.h.b16 %v140
    %v230 = vunpack.c.l.b16 %v141
    %v231 = vunpack.c.h.b16 %v141
    %v232 = vunpack.c.l.b16 %v142
    %v233 = vunpack.c.h.b16 %v142
    %v234 = vunpack.c.l.b16 %v143
    %v235 = vunpack.c.h.b16 %v143
    %v236 = vunpack.c.l.b16 %v144
    %v237 = vunpack.c.h.b16 %v144
    %v238 = vunpack.c.l.b16 %v145
    %v239 = vunpack.c.h.b16 %v145
    %v240 = vunpack.c.l.b16 %v146
    %v241 = vunpack.c.h.b16 %v146
    %v242 = vunpack.c.l.b16 %v147
    %v243 = vunpack.c.h.b16 %v147
    %v244 = vunpack.c.l.b16 %v148
    %v245 = vunpack.c.h.b16 %v148
    %v246 = vunpack.c.l.b16 %v149
    %v247 = vunpack.c.h.b16 %v149
    %v248 = vunpack.c.l.b16 %v150
    %v249 = vunpack.c.h.b16 %v150
    %v250 = vunpack.c.l.b16 %v151
    %v251 = vunpack.c.h.b16 %v151
    %v252 = vunpack.c.l.b16 %v152
    %v253 = vunpack.c.h.b16 %v152
    %v254 = vunpack.c.l.b16 %v153
    %v255 = vunpack.c.h.b16 %v153
    %v256 = vunpack.c.l.b16 %v154
    %v257 = vunpack.c.h.b16 %v154
    %v258 = vunpack.c.l.b16 %v155
    %v259 = vunpack.c.h.b16 %v155
    %v260 = vunpack.c.l.b16 %v156
    %v261 = vunpack.c.h.b16 %v156
    %v262 = vunpack.c.l.b16 %v157
    %v263 = vunpack.c.h.b16 %v157
    %v264 = vunpack.c.l.b16 %v158
    %v265 = vunpack.c.h.b16 %v158
    %v266 = vunpack.c.l.b16 %v159
    %v267 = vunpack.c.h.b16 %v159
    %v268 = vunpack.c.l.b16 %v160
    %v269 = vunpack.c.h.b16 %v160
    %v270 = vunpack.c.l.b16 %v161
    %v271 = vunpack.c.h.b16 %v161
    %v272 = vunpack.c.l.b16 %v162
    %v273 = vunpack.c.h.b16 %v162
    %v274 = vunpack.c.l.b16 %v163
    %v275 = vunpack.c.h.b16 %v163
    %v276 = vunpack.c.l.b16 %v164
    %v277 = vunpack.c.h.b16 %v164
    %v278 = vunpack.c.l.b16 %v165
    %v279 = vunpack.c.h.b16 %v165
    %v280 = vunpack.c.l.b16 %v166
    %v281 = vunpack.c.h.b16 %v166
    %v282 = vunpack.c.l.b16 %v167
    %v283 = vunpack.c.h.b16 %v167
    %v284 = vunpack.c.l.b16 %v168
    %v285 = vunpack.c.h.b16 %v168
    %v286 = vunpack.c.l.b16 %v169
    %v287 = vunpack.c.h.b16 %v169
    %v288 = vpack.c.b16 %v228, %v224
    %v289 = vpack.c.b16 %v229, %v225
    %v290 = vpack.c.b16 %v230, %v226
    %v291 = vpack.c.b16 %v231, %v227
    %v292 = vpack.c.b16 %v236, %v232
    %v293 = vpack.c.b16 %v237, %v233
    %v294 = vpack.c.b16 %v238, %v234
    %v295 = vpack.c.b16 %v239, %v235
    %v296 = vpack.c.b16 %v244, %v240
    %v297 = vpack.c.b16 %v245, %v241
    %v298 = vpack.c.b16 %v246, %v242
    %v299 = vpack.c.b16 %v247, %v243
    %v300 = vpack.c.b16 %v252, %v248
    %v301 = vpack.c.b16 %v253, %v249
    %v302 = vpack.c.b16 %v254, %v250
    %v303 = vpack.c.b16 %v255, %v251
    %v304 = vpack.c.b16 %v260, %v256
    %v305 = vpack.c.b16 %v261, %v257
    %v306 = vpack.c.b16 %v262, %v258
    %v307 = vpack.c.b16 %v263, %v259
    %v308 = vpack.c.b16 %v268, %v264
    %v309 = vpack.c.b16 %v269, %v265
    %v310 = vpack.c.b16 %v270, %v266
    %v311 = vpack.c.b16 %v271, %v267
    %v312 = vpack.c.b16 %v276, %v272
    %v313 = vpack.c.b16 %v277, %v273
    %v314 = vpack.c.b16 %v278, %v274
    %v315 = vpack.c.b16 %v279, %v275
    %v316 = vpack.c.b16 %v284, %v280
    %v317 = vpack.c.b16 %v285, %v281
    %v318 = vpack.c.b16 %v286, %v282
    %v319 = vpack.c.b16 %v287, %v283
    %352 = vmatprep.subr.bf16.mxu0 %v317
    %353 = vmatpush1.bf16.msra.mxu0 %v316
    %354 = vmatprep.subr.bf16.mxu0 %v313
    %355 = vmatpush1.bf16.msra.mxu0 %v312
    %356 = vmatprep.subr.bf16.mxu0 %v309
    %357 = vmatpush1.bf16.msra.mxu0 %v308
    %358 = vmatprep.subr.bf16.mxu0 %v305
    %359 = vmatpush1.bf16.msra.mxu0 %v304
    %360 = vmatprep.subr.bf16.mxu0 %v301
    %361 = vmatpush1.bf16.msra.mxu0 %v300
    %362 = vmatprep.subr.bf16.mxu0 %v297
    %363 = vmatpush1.bf16.msra.mxu0 %v296
    %364 = vmatprep.subr.bf16.mxu0 %v293
    %365 = vmatpush1.bf16.msra.mxu0 %v292
    %366 = vmatprep.subr.bf16.mxu0 %v289
    %367 = vmatpush1.bf16.msra.mxu0 %v288
    %368 = vmatprep.subr.bf16.mxu0 0
    %369 = vmatpush2.bf16.msra.mxu0 0
    %370 = vmatprep.subr.bf16.mxu0 0
    %371 = vmatpush2.bf16.msra.mxu0 0
    %372 = vmatprep.subr.bf16.mxu0 0
    %373 = vmatpush2.bf16.msra.mxu0 0
    %374 = vmatprep.subr.bf16.mxu0 0
    %375 = vmatpush2.bf16.msra.mxu0 0
    %376 = vmatprep.subr.bf16.mxu0 0
    %377 = vmatpush2.bf16.msra.mxu0 0
    %378 = vmatprep.subr.bf16.mxu0 0
    %379 = vmatpush2.bf16.msra.mxu0 0
    %380 = vmatprep.subr.bf16.mxu0 0
    %381 = vmatpush2.bf16.msra.mxu0 0
    %382 = vmatprep.subr.bf16.mxu0 0
    %383 = vmatpush2.bf16.msra.mxu0 0
    %384 = vmatprep.mubr.bf16.mxu0 0
    %385 = vmatmul.mubr.bf16.gmra.mxu0 %v137
    %v386 = vpop.f32.mrf.mxu0
    %v387 = vadd.f32 %v175, %v386
    %v388 = vpop.f32.mrf.mxu0
    %v389 = vadd.f32 %v179, %v388
    %v390 = vpop.f32.mrf.mxu0
    %v391 = vadd.f32 %v175, %v390
    %v392 = vpop.f32.mrf.mxu0
    %v393 = vadd.f32 %v179, %v392
    %394 = vdwg.mxu0
    %395 = vmatprep.subr.bf16.mxu0 %v319
    %396 = vmatpush1.bf16.msra.mxu0 %v318
    %397 = vmatprep.subr.bf16.mxu0 %v315
    %398 = vmatpush1.bf16.msra.mxu0 %v314
    %399 = vmatprep.subr.bf16.mxu0 %v311
    %400 = vmatpush1.bf16.msra.mxu0 %v310
    %401 = vmatprep.subr.bf16.mxu0 %v307
    %402 = vmatpush1.bf16.msra.mxu0 %v306
    %403 = vmatprep.subr.bf16.mxu0 %v303
    %404 = vmatpush1.bf16.msra.mxu0 %v302
    %405 = vmatprep.subr.bf16.mxu0 %v299
    %406 = vmatpush1.bf16.msra.mxu0 %v298
    %407 = vmatprep.subr.bf16.mxu0 %v295
    %408 = vmatpush1.bf16.msra.mxu0 %v294
    %409 = vmatprep.subr.bf16.mxu0 %v291
    %410 = vmatpush1.bf16.msra.mxu0 %v290
    %411 = vmatprep.subr.bf16.mxu0 0
    %412 = vmatpush2.bf16.msra.mxu0 0
    %413 = vmatprep.subr.bf16.mxu0 0
    %414 = vmatpush2.bf16.msra.mxu0 0
    %415 = vmatprep.subr.bf16.mxu0 0
    %416 = vmatpush2.bf16.msra.mxu0 0
    %417 = vmatprep.subr.bf16.mxu0 0
    %418 = vmatpush2.bf16.msra.mxu0 0
    %419 = vmatprep.subr.bf16.mxu0 0
    %420 = vmatpush2.bf16.msra.mxu0 0
    %421 = vmatprep.subr.bf16.mxu0 0
    %422 = vmatpush2.bf16.msra.mxu0 0
    %423 = vmatprep.subr.bf16.mxu0 0
    %424 = vmatpush2.bf16.msra.mxu0 0
    %425 = vmatprep.subr.bf16.mxu0 0
    %426 = vmatpush2.bf16.msra.mxu0 0
    %427 = vmatprep.mubr.bf16.mxu0 0
    %428 = vmatmul.mubr.bf16.gmra.mxu0 %v137
    %v429 = vpop.f32.mrf.mxu0
    %v430 = vadd.f32 %v183, %v429
    %v431 = vpop.f32.mrf.mxu0
    %v432 = vadd.f32 %v187, %v431
    %v433 = vpop.f32.mrf.mxu0
    %v434 = vadd.f32 %v183, %v433
    %v435 = vpop.f32.mrf.mxu0
    %v436 = vadd.f32 %v187, %v435
    %437 = vdwg.mxu0
    %v438 = vmax.f32 %v387, 0.0
    %v439 = vmax.f32 %v389, 0.0
    %v440 = vmax.f32 %v430, 0.0
    %v441 = vmax.f32 %v432, 0.0
    %v442 = vmax.f32 %v391, 0.0
    %v443 = vmax.f32 %v393, 0.0
    %v444 = vmax.f32 %v434, 0.0
    %v445 = vmax.f32 %v436, 0.0
    %v446 = vpack.c.bf16 %v442, %v438
    %v447 = vpack.c.bf16 %v443, %v439
    %v448 = vpack.c.bf16 %v444, %v440
    %v449 = vpack.c.bf16 %v445, %v441
    %v450 = vld [vmem:[#allocation5] sm:$0xff]
    %v451 = vld [vmem:[#allocation5 + $0x8] sm:$0xff]
    %v452 = vld [vmem:[#allocation5 + $0x10] sm:$0xff]
    %v453 = vld [vmem:[#allocation5 + $0x18] sm:$0xff]
    %v454 = vld [vmem:[#allocation5 + $0x20] sm:$0xff]
    %v455 = vld [vmem:[#allocation5 + $0x28] sm:$0xff]
    %v456 = vld [vmem:[#allocation5 + $0x30] sm:$0xff]
    %v457 = vld [vmem:[#allocation5 + $0x38] sm:$0xff]
    %v458 = vld [vmem:[#allocation5 + $0x40] sm:$0xff]
    %v459 = vld [vmem:[#allocation5 + $0x48] sm:$0xff]
    %v460 = vld [vmem:[#allocation5 + $0x50] sm:$0xff]
    %v461 = vld [vmem:[#allocation5 + $0x58] sm:$0xff]
    %v462 = vld [vmem:[#allocation5 + $0x60] sm:$0xff]
    %v463 = vld [vmem:[#allocation5 + $0x68] sm:$0xff]
    %v464 = vld [vmem:[#allocation5 + $0x70] sm:$0xff]
    %v465 = vld [vmem:[#allocation5 + $0x78] sm:$0xff]
    %v466 = vld [vmem:[#allocation5 + $0x80] sm:$0xff]
    %v467 = vld [vmem:[#allocation5 + $0x88] sm:$0xff]
    %v468 = vld [vmem:[#allocation5 + $0x90] sm:$0xff]
    %v469 = vld [vmem:[#allocation5 + $0x98] sm:$0xff]
    %v470 = vld [vmem:[#allocation5 + $0xa0] sm:$0xff]
    %v471 = vld [vmem:[#allocation5 + $0xa8] sm:$0xff]
    %v472 = vld [vmem:[#allocation5 + $0xb0] sm:$0xff]
    %v473 = vld [vmem:[#allocation5 + $0xb8] sm:$0xff]
    %v474 = vld [vmem:[#allocation5 + $0xc0] sm:$0xff]
    %v475 = vld [vmem:[#allocation5 + $0xc8] sm:$0xff]
    %v476 = vld [vmem:[#allocation5 + $0xd0] sm:$0xff]
    %v477 = vld [vmem:[#allocation5 + $0xd8] sm:$0xff]
    %v478 = vld [vmem:[#allocation5 + $0xe0] sm:$0xff]
    %v479 = vld [vmem:[#allocation5 + $0xe8] sm:$0xff]
    %v480 = vld [vmem:[#allocation5 + $0xf0] sm:$0xff]
    %v481 = vld [vmem:[#allocation5 + $0xf8] sm:$0xff]
    %v482 = vld [vmem:[#allocation5 + $0x100] sm:$0xff]
    %v483 = vld [vmem:[#allocation5 + $0x108] sm:$0xff]
    %v484 = vld [vmem:[#allocation5 + $0x110] sm:$0xff]
    %v485 = vld [vmem:[#allocation5 + $0x118] sm:$0xff]
    %v486 = vld [vmem:[#allocation5 + $0x120] sm:$0xff]
    %v487 = vld [vmem:[#allocation5 + $0x128] sm:$0xff]
    %v488 = vld [vmem:[#allocation5 + $0x130] sm:$0xff]
    %v489 = vld [vmem:[#allocation5 + $0x138] sm:$0xff]
    %v490 = vld [vmem:[#allocation5 + $0x140] sm:$0xff]
    %v491 = vld [vmem:[#allocation5 + $0x148] sm:$0xff]
    %v492 = vld [vmem:[#allocation5 + $0x150] sm:$0xff]
    %v493 = vld [vmem:[#allocation5 + $0x158] sm:$0xff]
    %v494 = vld [vmem:[#allocation5 + $0x160] sm:$0xff]
    %v495 = vld [vmem:[#allocation5 + $0x168] sm:$0xff]
    %v496 = vld [vmem:[#allocation5 + $0x170] sm:$0xff]
    %v497 = vld [vmem:[#allocation5 + $0x178] sm:$0xff]
    %v498 = vld [vmem:[#allocation5 + $0x180] sm:$0xff]
    %v499 = vld [vmem:[#allocation5 + $0x188] sm:$0xff]
    %v500 = vld [vmem:[#allocation5 + $0x190] sm:$0xff]
    %v501 = vld [vmem:[#allocation5 + $0x198] sm:$0xff]
    %v502 = vld [vmem:[#allocation5 + $0x1a0] sm:$0xff]
    %v503 = vld [vmem:[#allocation5 + $0x1a8] sm:$0xff]
    %v504 = vld [vmem:[#allocation5 + $0x1b0] sm:$0xff]
    %v505 = vld [vmem:[#allocation5 + $0x1b8] sm:$0xff]
    %v506 = vld [vmem:[#allocation5 + $0x1c0] sm:$0xff]
    %v507 = vld [vmem:[#allocation5 + $0x1c8] sm:$0xff]
    %v508 = vld [vmem:[#allocation5 + $0x1d0] sm:$0xff]
    %v509 = vld [vmem:[#allocation5 + $0x1d8] sm:$0xff]
    %v510 = vld [vmem:[#allocation5 + $0x1e0] sm:$0xff]
    %v511 = vld [vmem:[#allocation5 + $0x1e8] sm:$0xff]
    %v512 = vld [vmem:[#allocation5 + $0x1f0] sm:$0xff]
    %v513 = vld [vmem:[#allocation5 + $0x1f8] sm:$0xff]
    %v514 = vld [vmem:[#allocation5 + $0x200] sm:$0xff]
    %v515 = vld [vmem:[#allocation5 + $0x208] sm:$0xff]
    %v516 = vld [vmem:[#allocation5 + $0x210] sm:$0xff]
    %v517 = vld [vmem:[#allocation5 + $0x218] sm:$0xff]
    %v518 = vld [vmem:[#allocation5 + $0x220] sm:$0xff]
    %v519 = vld [vmem:[#allocation5 + $0x228] sm:$0xff]
    %v520 = vld [vmem:[#allocation5 + $0x230] sm:$0xff]
    %v521 = vld [vmem:[#allocation5 + $0x238] sm:$0xff]
    %v522 = vld [vmem:[#allocation5 + $0x240] sm:$0xff]
    %v523 = vld [vmem:[#allocation5 + $0x248] sm:$0xff]
    %v524 = vld [vmem:[#allocation5 + $0x250] sm:$0xff]
    %v525 = vld [vmem:[#allocation5 + $0x258] sm:$0xff]
    %v526 = vld [vmem:[#allocation5 + $0x260] sm:$0xff]
    %v527 = vld [vmem:[#allocation5 + $0x268] sm:$0xff]
    %v528 = vld [vmem:[#allocation5 + $0x270] sm:$0xff]
    %v529 = vld [vmem:[#allocation5 + $0x278] sm:$0xff]
    %v530 = vld [vmem:[#allocation5 + $0x280] sm:$0xff]
    %v531 = vld [vmem:[#allocation5 + $0x288] sm:$0xff]
    %v532 = vld [vmem:[#allocation5 + $0x290] sm:$0xff]
    %v533 = vld [vmem:[#allocation5 + $0x298] sm:$0xff]
    %v534 = vld [vmem:[#allocation5 + $0x2a0] sm:$0xff]
    %v535 = vld [vmem:[#allocation5 + $0x2a8] sm:$0xff]
    %v536 = vld [vmem:[#allocation5 + $0x2b0] sm:$0xff]
    %v537 = vld [vmem:[#allocation5 + $0x2b8] sm:$0xff]
    %v538 = vld [vmem:[#allocation5 + $0x2c0] sm:$0xff]
    %v539 = vld [vmem:[#allocation5 + $0x2c8] sm:$0xff]
    %v540 = vld [vmem:[#allocation5 + $0x2d0] sm:$0xff]
    %v541 = vld [vmem:[#allocation5 + $0x2d8] sm:$0xff]
    %v542 = vld [vmem:[#allocation5 + $0x2e0] sm:$0xff]
    %v543 = vld [vmem:[#allocation5 + $0x2e8] sm:$0xff]
    %v544 = vld [vmem:[#allocation5 + $0x2f0] sm:$0xff]
    %v545 = vld [vmem:[#allocation5 + $0x2f8] sm:$0xff]
    %v546 = vld [vmem:[#allocation5 + $0x300] sm:$0xff]
    %v547 = vld [vmem:[#allocation5 + $0x308] sm:$0xff]
    %v548 = vld [vmem:[#allocation5 + $0x310] sm:$0xff]
    %v549 = vld [vmem:[#allocation5 + $0x318] sm:$0xff]
    %v550 = vld [vmem:[#allocation5 + $0x320] sm:$0xff]
    %v551 = vld [vmem:[#allocation5 + $0x328] sm:$0xff]
    %v552 = vld [vmem:[#allocation5 + $0x330] sm:$0xff]
    %v553 = vld [vmem:[#allocation5 + $0x338] sm:$0xff]
    %v554 = vld [vmem:[#allocation5 + $0x340] sm:$0xff]
    %v555 = vld [vmem:[#allocation5 + $0x348] sm:$0xff]
    %v556 = vld [vmem:[#allocation5 + $0x350] sm:$0xff]
    %v557 = vld [vmem:[#allocation5 + $0x358] sm:$0xff]
    %v558 = vld [vmem:[#allocation5 + $0x360] sm:$0xff]
    %v559 = vld [vmem:[#allocation5 + $0x368] sm:$0xff]
    %v560 = vld [vmem:[#allocation5 + $0x370] sm:$0xff]
    %v561 = vld [vmem:[#allocation5 + $0x378] sm:$0xff]
    %v562 = vld [vmem:[#allocation5 + $0x380] sm:$0xff]
    %v563 = vld [vmem:[#allocation5 + $0x388] sm:$0xff]
    %v564 = vld [vmem:[#allocation5 + $0x390] sm:$0xff]
    %v565 = vld [vmem:[#allocation5 + $0x398] sm:$0xff]
    %v566 = vld [vmem:[#allocation5 + $0x3a0] sm:$0xff]
    %v567 = vld [vmem:[#allocation5 + $0x3a8] sm:$0xff]
    %v568 = vld [vmem:[#allocation5 + $0x3b0] sm:$0xff]
    %v569 = vld [vmem:[#allocation5 + $0x3b8] sm:$0xff]
    %v570 = vld [vmem:[#allocation5 + $0x3c0] sm:$0xff]
    %v571 = vld [vmem:[#allocation5 + $0x3c8] sm:$0xff]
    %v572 = vld [vmem:[#allocation5 + $0x3d0] sm:$0xff]
    %v573 = vld [vmem:[#allocation5 + $0x3d8] sm:$0xff]
    %v574 = vld [vmem:[#allocation5 + $0x3e0] sm:$0xff]
    %v575 = vld [vmem:[#allocation5 + $0x3e8] sm:$0xff]
    %v576 = vld [vmem:[#allocation5 + $0x3f0] sm:$0xff]
    %v577 = vld [vmem:[#allocation5 + $0x3f8] sm:$0xff]
    %v578 = vld [vmem:[#allocation5 + $0x400] sm:$0xff]
    %v579 = vld [vmem:[#allocation5 + $0x408] sm:$0xff]
    %v580 = vld [vmem:[#allocation5 + $0x410] sm:$0xff]
    %v581 = vld [vmem:[#allocation5 + $0x418] sm:$0xff]
    %v582 = vld [vmem:[#allocation5 + $0x420] sm:$0xff]
    %v583 = vld [vmem:[#allocation5 + $0x428] sm:$0xff]
    %v584 = vld [vmem:[#allocation5 + $0x430] sm:$0xff]
    %v585 = vld [vmem:[#allocation5 + $0x438] sm:$0xff]
    %v586 = vld [vmem:[#allocation5 + $0x440] sm:$0xff]
    %v587 = vld [vmem:[#allocation5 + $0x448] sm:$0xff]
    %v588 = vld [vmem:[#allocation5 + $0x450] sm:$0xff]
    %v589 = vld [vmem:[#allocation5 + $0x458] sm:$0xff]
    %v590 = vld [vmem:[#allocation5 + $0x460] sm:$0xff]
    %v591 = vld [vmem:[#allocation5 + $0x468] sm:$0xff]
    %v592 = vld [vmem:[#allocation5 + $0x470] sm:$0xff]
    %v593 = vld [vmem:[#allocation5 + $0x478] sm:$0xff]
    %v594 = vld [vmem:[#allocation5 + $0x480] sm:$0xff]
    %v595 = vld [vmem:[#allocation5 + $0x488] sm:$0xff]
    %v596 = vld [vmem:[#allocation5 + $0x490] sm:$0xff]
    %v597 = vld [vmem:[#allocation5 + $0x498] sm:$0xff]
    %v598 = vld [vmem:[#allocation5 + $0x4a0] sm:$0xff]
    %v599 = vld [vmem:[#allocation5 + $0x4a8] sm:$0xff]
    %v600 = vld [vmem:[#allocation5 + $0x4b0] sm:$0xff]
    %v601 = vld [vmem:[#allocation5 + $0x4b8] sm:$0xff]
    %v602 = vld [vmem:[#allocation5 + $0x4c0] sm:$0xff]
    %v603 = vld [vmem:[#allocation5 + $0x4c8] sm:$0xff]
    %v604 = vld [vmem:[#allocation5 + $0x4d0] sm:$0xff]
    %v605 = vld [vmem:[#allocation5 + $0x4d8] sm:$0xff]
    %v606 = vld [vmem:[#allocation5 + $0x4e0] sm:$0xff]
    %v607 = vld [vmem:[#allocation5 + $0x4e8] sm:$0xff]
    %v608 = vld [vmem:[#allocation5 + $0x4f0] sm:$0xff]
    %v609 = vld [vmem:[#allocation5 + $0x4f8] sm:$0xff]
    %v610 = vld [vmem:[#allocation5 + $0x500] sm:$0xff]
    %v611 = vld [vmem:[#allocation5 + $0x508] sm:$0xff]
    %v612 = vld [vmem:[#allocation5 + $0x510] sm:$0xff]
    %v613 = vld [vmem:[#allocation5 + $0x518] sm:$0xff]
    %v614 = vld [vmem:[#allocation5 + $0x520] sm:$0xff]
    %v615 = vld [vmem:[#allocation5 + $0x528] sm:$0xff]
    %v616 = vld [vmem:[#allocation5 + $0x530] sm:$0xff]
    %v617 = vld [vmem:[#allocation5 + $0x538] sm:$0xff]
    %v618 = vld [vmem:[#allocation5 + $0x540] sm:$0xff]
    %v619 = vld [vmem:[#allocation5 + $0x548] sm:$0xff]
    %v620 = vld [vmem:[#allocation5 + $0x550] sm:$0xff]
    %v621 = vld [vmem:[#allocation5 + $0x558] sm:$0xff]
    %v622 = vld [vmem:[#allocation5 + $0x560] sm:$0xff]
    %v623 = vld [vmem:[#allocation5 + $0x568] sm:$0xff]
    %v624 = vld [vmem:[#allocation5 + $0x570] sm:$0xff]
    %v625 = vld [vmem:[#allocation5 + $0x578] sm:$0xff]
    %v626 = vld [vmem:[#allocation5 + $0x580] sm:$0xff]
    %v627 = vld [vmem:[#allocation5 + $0x588] sm:$0xff]
    %v628 = vld [vmem:[#allocation5 + $0x590] sm:$0xff]
    %v629 = vld [vmem:[#allocation5 + $0x598] sm:$0xff]
    %v630 = vld [vmem:[#allocation5 + $0x5a0] sm:$0xff]
    %v631 = vld [vmem:[#allocation5 + $0x5a8] sm:$0xff]
    %v632 = vld [vmem:[#allocation5 + $0x5b0] sm:$0xff]
    %v633 = vld [vmem:[#allocation5 + $0x5b8] sm:$0xff]
    %v634 = vld [vmem:[#allocation5 + $0x5c0] sm:$0xff]
    %v635 = vld [vmem:[#allocation5 + $0x5c8] sm:$0xff]
    %v636 = vld [vmem:[#allocation5 + $0x5d0] sm:$0xff]
    %v637 = vld [vmem:[#allocation5 + $0x5d8] sm:$0xff]
    %v638 = vld [vmem:[#allocation5 + $0x5e0] sm:$0xff]
    %v639 = vld [vmem:[#allocation5 + $0x5e8] sm:$0xff]
    %v640 = vld [vmem:[#allocation5 + $0x5f0] sm:$0xff]
    %v641 = vld [vmem:[#allocation5 + $0x5f8] sm:$0xff]
    %v642 = vld [vmem:[#allocation5 + $0x600] sm:$0xff]
    %v643 = vld [vmem:[#allocation5 + $0x608] sm:$0xff]
    %v644 = vld [vmem:[#allocation5 + $0x610] sm:$0xff]
    %v645 = vld [vmem:[#allocation5 + $0x618] sm:$0xff]
    %v646 = vld [vmem:[#allocation5 + $0x620] sm:$0xff]
    %v647 = vld [vmem:[#allocation5 + $0x628] sm:$0xff]
    %v648 = vld [vmem:[#allocation5 + $0x630] sm:$0xff]
    %v649 = vld [vmem:[#allocation5 + $0x638] sm:$0xff]
    %v650 = vld [vmem:[#allocation5 + $0x640] sm:$0xff]
    %v651 = vld [vmem:[#allocation5 + $0x648] sm:$0xff]
    %v652 = vld [vmem:[#allocation5 + $0x650] sm:$0xff]
    %v653 = vld [vmem:[#allocation5 + $0x658] sm:$0xff]
    %v654 = vld [vmem:[#allocation5 + $0x660] sm:$0xff]
    %v655 = vld [vmem:[#allocation5 + $0x668] sm:$0xff]
    %v656 = vld [vmem:[#allocation5 + $0x670] sm:$0xff]
    %v657 = vld [vmem:[#allocation5 + $0x678] sm:$0xff]
    %v658 = vld [vmem:[#allocation5 + $0x680] sm:$0xff]
    %v659 = vld [vmem:[#allocation5 + $0x688] sm:$0xff]
    %v660 = vld [vmem:[#allocation5 + $0x690] sm:$0xff]
    %v661 = vld [vmem:[#allocation5 + $0x698] sm:$0xff]
    %v662 = vld [vmem:[#allocation5 + $0x6a0] sm:$0xff]
    %v663 = vld [vmem:[#allocation5 + $0x6a8] sm:$0xff]
    %v664 = vld [vmem:[#allocation5 + $0x6b0] sm:$0xff]
    %v665 = vld [vmem:[#allocation5 + $0x6b8] sm:$0xff]
    %v666 = vld [vmem:[#allocation5 + $0x6c0] sm:$0xff]
    %v667 = vld [vmem:[#allocation5 + $0x6c8] sm:$0xff]
    %v668 = vld [vmem:[#allocation5 + $0x6d0] sm:$0xff]
    %v669 = vld [vmem:[#allocation5 + $0x6d8] sm:$0xff]
    %v670 = vld [vmem:[#allocation5 + $0x6e0] sm:$0xff]
    %v671 = vld [vmem:[#allocation5 + $0x6e8] sm:$0xff]
    %v672 = vld [vmem:[#allocation5 + $0x6f0] sm:$0xff]
    %v673 = vld [vmem:[#allocation5 + $0x6f8] sm:$0xff]
    %v674 = vld [vmem:[#allocation5 + $0x700] sm:$0xff]
    %v675 = vld [vmem:[#allocation5 + $0x708] sm:$0xff]
    %v676 = vld [vmem:[#allocation5 + $0x710] sm:$0xff]
    %v677 = vld [vmem:[#allocation5 + $0x718] sm:$0xff]
    %v678 = vld [vmem:[#allocation5 + $0x720] sm:$0xff]
    %v679 = vld [vmem:[#allocation5 + $0x728] sm:$0xff]
    %v680 = vld [vmem:[#allocation5 + $0x730] sm:$0xff]
    %v681 = vld [vmem:[#allocation5 + $0x738] sm:$0xff]
    %v682 = vld [vmem:[#allocation5 + $0x740] sm:$0xff]
    %v683 = vld [vmem:[#allocation5 + $0x748] sm:$0xff]
    %v684 = vld [vmem:[#allocation5 + $0x750] sm:$0xff]
    %v685 = vld [vmem:[#allocation5 + $0x758] sm:$0xff]
    %v686 = vld [vmem:[#allocation5 + $0x760] sm:$0xff]
    %v687 = vld [vmem:[#allocation5 + $0x768] sm:$0xff]
    %v688 = vld [vmem:[#allocation5 + $0x770] sm:$0xff]
    %v689 = vld [vmem:[#allocation5 + $0x778] sm:$0xff]
    %v690 = vld [vmem:[#allocation5 + $0x780] sm:$0xff]
    %v691 = vld [vmem:[#allocation5 + $0x788] sm:$0xff]
    %v692 = vld [vmem:[#allocation5 + $0x790] sm:$0xff]
    %v693 = vld [vmem:[#allocation5 + $0x798] sm:$0xff]
    %v694 = vld [vmem:[#allocation5 + $0x7a0] sm:$0xff]
    %v695 = vld [vmem:[#allocation5 + $0x7a8] sm:$0xff]
    %v696 = vld [vmem:[#allocation5 + $0x7b0] sm:$0xff]
    %v697 = vld [vmem:[#allocation5 + $0x7b8] sm:$0xff]
    %v698 = vld [vmem:[#allocation5 + $0x7c0] sm:$0xff]
    %v699 = vld [vmem:[#allocation5 + $0x7c8] sm:$0xff]
    %v700 = vld [vmem:[#allocation5 + $0x7d0] sm:$0xff]
    %v701 = vld [vmem:[#allocation5 + $0x7d8] sm:$0xff]
    %v702 = vld [vmem:[#allocation5 + $0x7e0] sm:$0xff]
    %v703 = vld [vmem:[#allocation5 + $0x7e8] sm:$0xff]
    %v704 = vld [vmem:[#allocation5 + $0x7f0] sm:$0xff]
    %v705 = vld [vmem:[#allocation5 + $0x7f8] sm:$0xff]
    %v706 = vld [vmem:[%s6] sm:$0xff]
    %v708 = vlaneseq
    %v709 = vshrl.u32 %v708, 7
    %v710 = vsub.s32 0, %v709
    %v711 = vrot.slane %v706, %v710
    %v712 = vlaneseq
    %v713 = vshrl.u32 %v712, 7
    %v714 = vsub.s32 1, %v713
    %v715 = vrot.slane %v706, %v714
    %v716 = vlaneseq
    %v717 = vshrl.u32 %v716, 7
    %v718 = vsub.s32 2, %v717
    %v719 = vrot.slane %v706, %v718
    %v720 = vlaneseq
    %v721 = vshrl.u32 %v720, 7
    %v722 = vsub.s32 3, %v721
    %v723 = vrot.slane %v706, %v722
    %v724 = vlaneseq
    %v725 = vshrl.u32 %v724, 7
    %v726 = vsub.s32 4, %v725
    %v727 = vrot.slane %v706, %v726
    %v728 = vlaneseq
    %v729 = vshrl.u32 %v728, 7
    %v730 = vsub.s32 5, %v729
    %v731 = vrot.slane %v706, %v730
    %v732 = vlaneseq
    %v733 = vshrl.u32 %v732, 7
    %v734 = vsub.s32 6, %v733
    %v735 = vrot.slane %v706, %v734
    %v736 = vlaneseq
    %v737 = vshrl.u32 %v736, 7
    %v738 = vsub.s32 7, %v737
    %v739 = vrot.slane %v706, %v738
    %v1004 = vunpack.c.l.b16 %v450
    %v1005 = vunpack.c.h.b16 %v450
    %v1006 = vunpack.c.l.b16 %v451
    %v1007 = vunpack.c.h.b16 %v451
    %v1008 = vunpack.c.l.b16 %v452
    %v1009 = vunpack.c.h.b16 %v452
    %v1010 = vunpack.c.l.b16 %v453
    %v1011 = vunpack.c.h.b16 %v453
    %v1012 = vunpack.c.l.b16 %v454
    %v1013 = vunpack.c.h.b16 %v454
    %v1014 = vunpack.c.l.b16 %v455
    %v1015 = vunpack.c.h.b16 %v455
    %v1016 = vunpack.c.l.b16 %v456
    %v1017 = vunpack.c.h.b16 %v456
    %v1018 = vunpack.c.l.b16 %v457
    %v1019 = vunpack.c.h.b16 %v457
    %v1020 = vunpack.c.l.b16 %v458
    %v1021 = vunpack.c.h.b16 %v458
    %v1022 = vunpack.c.l.b16 %v459
    %v1023 = vunpack.c.h.b16 %v459
    %v1024 = vunpack.c.l.b16 %v460
    %v1025 = vunpack.c.h.b16 %v460
    %v1026 = vunpack.c.l.b16 %v461
    %v1027 = vunpack.c.h.b16 %v461
    %v1028 = vunpack.c.l.b16 %v462
    %v1029 = vunpack.c.h.b16 %v462
    %v1030 = vunpack.c.l.b16 %v463
    %v1031 = vunpack.c.h.b16 %v463
    %v1032 = vunpack.c.l.b16 %v464
    %v1033 = vunpack.c.h.b16 %v464
    %v1034 = vunpack.c.l.b16 %v465
    %v1035 = vunpack.c.h.b16 %v465
    %v1036 = vunpack.c.l.b16 %v466
    %v1037 = vunpack.c.h.b16 %v466
    %v1038 = vunpack.c.l.b16 %v467
    %v1039 = vunpack.c.h.b16 %v467
    %v1040 = vunpack.c.l.b16 %v468
    %v1041 = vunpack.c.h.b16 %v468
    %v1042 = vunpack.c.l.b16 %v469
    %v1043 = vunpack.c.h.b16 %v469
    %v1044 = vunpack.c.l.b16 %v470
    %v1045 = vunpack.c.h.b16 %v470
    %v1046 = vunpack.c.l.b16 %v471
    %v1047 = vunpack.c.h.b16 %v471
    %v1048 = vunpack.c.l.b16 %v472
    %v1049 = vunpack.c.h.b16 %v472
    %v1050 = vunpack.c.l.b16 %v473
    %v1051 = vunpack.c.h.b16 %v473
    %v1052 = vunpack.c.l.b16 %v474
    %v1053 = vunpack.c.h.b16 %v474
    %v1054 = vunpack.c.l.b16 %v475
    %v1055 = vunpack.c.h.b16 %v475
    %v1056 = vunpack.c.l.b16 %v476
    %v1057 = vunpack.c.h.b16 %v476
    %v1058 = vunpack.c.l.b16 %v477
    %v1059 = vunpack.c.h.b16 %v477
    %v1060 = vunpack.c.l.b16 %v478
    %v1061 = vunpack.c.h.b16 %v478
    %v1062 = vunpack.c.l.b16 %v479
    %v1063 = vunpack.c.h.b16 %v479
    %v1064 = vunpack.c.l.b16 %v480
    %v1065 = vunpack.c.h.b16 %v480
    %v1066 = vunpack.c.l.b16 %v481
    %v1067 = vunpack.c.h.b16 %v481
    %v1068 = vunpack.c.l.b16 %v482
    %v1069 = vunpack.c.h.b16 %v482
    %v1070 = vunpack.c.l.b16 %v483
    %v1071 = vunpack.c.h.b16 %v483
    %v1072 = vunpack.c.l.b16 %v484
    %v1073 = vunpack.c.h.b16 %v484
    %v1074 = vunpack.c.l.b16 %v485
    %v1075 = vunpack.c.h.b16 %v485
    %v1076 = vunpack.c.l.b16 %v486
    %v1077 = vunpack.c.h.b16 %v486
    %v1078 = vunpack.c.l.b16 %v487
    %v1079 = vunpack.c.h.b16 %v487
    %v1080 = vunpack.c.l.b16 %v488
    %v1081 = vunpack.c.h.b16 %v488
    %v1082 = vunpack.c.l.b16 %v489
    %v1083 = vunpack.c.h.b16 %v489
    %v1084 = vunpack.c.l.b16 %v490
    %v1085 = vunpack.c.h.b16 %v490
    %v1086 = vunpack.c.l.b16 %v491
    %v1087 = vunpack.c.h.b16 %v491
    %v1088 = vunpack.c.l.b16 %v492
    %v1089 = vunpack.c.h.b16 %v492
    %v1090 = vunpack.c.l.b16 %v493
    %v1091 = vunpack.c.h.b16 %v493
    %v1092 = vunpack.c.l.b16 %v494
    %v1093 = vunpack.c.h.b16 %v494
    %v1094 = vunpack.c.l.b16 %v495
    %v1095 = vunpack.c.h.b16 %v495
    %v1096 = vunpack.c.l.b16 %v496
    %v1097 = vunpack.c.h.b16 %v496
    %v1098 = vunpack.c.l.b16 %v497
    %v1099 = vunpack.c.h.b16 %v497
    %v1100 = vunpack.c.l.b16 %v498
    %v1101 = vunpack.c.h.b16 %v498
    %v1102 = vunpack.c.l.b16 %v499
    %v1103 = vunpack.c.h.b16 %v499
    %v1104 = vunpack.c.l.b16 %v500
    %v1105 = vunpack.c.h.b16 %v500
    %v1106 = vunpack.c.l.b16 %v501
    %v1107 = vunpack.c.h.b16 %v501
    %v1108 = vunpack.c.l.b16 %v502
    %v1109 = vunpack.c.h.b16 %v502
    %v1110 = vunpack.c.l.b16 %v503
    %v1111 = vunpack.c.h.b16 %v503
    %v1112 = vunpack.c.l.b16 %v504
    %v1113 = vunpack.c.h.b16 %v504
    %v1114 = vunpack.c.l.b16 %v505
    %v1115 = vunpack.c.h.b16 %v505
    %v1116 = vunpack.c.l.b16 %v506
    %v1117 = vunpack.c.h.b16 %v506
    %v1118 = vunpack.c.l.b16 %v507
    %v1119 = vunpack.c.h.b16 %v507
    %v1120 = vunpack.c.l.b16 %v508
    %v1121 = vunpack.c.h.b16 %v508
    %v1122 = vunpack.c.l.b16 %v509
    %v1123 = vunpack.c.h.b16 %v509
    %v1124 = vunpack.c.l.b16 %v510
    %v1125 = vunpack.c.h.b16 %v510
    %v1126 = vunpack.c.l.b16 %v511
    %v1127 = vunpack.c.h.b16 %v511
    %v1128 = vunpack.c.l.b16 %v512
    %v1129 = vunpack.c.h.b16 %v512
    %v1130 = vunpack.c.l.b16 %v513
    %v1131 = vunpack.c.h.b16 %v513
    %v1132 = vunpack.c.l.b16 %v514
    %v1133 = vunpack.c.h.b16 %v514
    %v1134 = vunpack.c.l.b16 %v515
    %v1135 = vunpack.c.h.b16 %v515
    %v1136 = vunpack.c.l.b16 %v516
    %v1137 = vunpack.c.h.b16 %v516
    %v1138 = vunpack.c.l.b16 %v517
    %v1139 = vunpack.c.h.b16 %v517
    %v1140 = vunpack.c.l.b16 %v518
    %v1141 = vunpack.c.h.b16 %v518
    %v1142 = vunpack.c.l.b16 %v519
    %v1143 = vunpack.c.h.b16 %v519
    %v1144 = vunpack.c.l.b16 %v520
    %v1145 = vunpack.c.h.b16 %v520
    %v1146 = vunpack.c.l.b16 %v521
    %v1147 = vunpack.c.h.b16 %v521
    %v1148 = vunpack.c.l.b16 %v522
    %v1149 = vunpack.c.h.b16 %v522
    %v1150 = vunpack.c.l.b16 %v523
    %v1151 = vunpack.c.h.b16 %v523
    %v1152 = vunpack.c.l.b16 %v524
    %v1153 = vunpack.c.h.b16 %v524
    %v1154 = vunpack.c.l.b16 %v525
    %v1155 = vunpack.c.h.b16 %v525
    %v1156 = vunpack.c.l.b16 %v526
    %v1157 = vunpack.c.h.b16 %v526
    %v1158 = vunpack.c.l.b16 %v527
    %v1159 = vunpack.c.h.b16 %v527
    %v1160 = vunpack.c.l.b16 %v528
    %v1161 = vunpack.c.h.b16 %v528
    %v1162 = vunpack.c.l.b16 %v529
    %v1163 = vunpack.c.h.b16 %v529
    %v1164 = vunpack.c.l.b16 %v530
    %v1165 = vunpack.c.h.b16 %v530
    %v1166 = vunpack.c.l.b16 %v531
    %v1167 = vunpack.c.h.b16 %v531
    %v1168 = vunpack.c.l.b16 %v532
    %v1169 = vunpack.c.h.b16 %v532
    %v1170 = vunpack.c.l.b16 %v533
    %v1171 = vunpack.c.h.b16 %v533
    %v1172 = vunpack.c.l.b16 %v534
    %v1173 = vunpack.c.h.b16 %v534
    %v1174 = vunpack.c.l.b16 %v535
    %v1175 = vunpack.c.h.b16 %v535
    %v1176 = vunpack.c.l.b16 %v536
    %v1177 = vunpack.c.h.b16 %v536
    %v1178 = vunpack.c.l.b16 %v537
    %v1179 = vunpack.c.h.b16 %v537
    %v1180 = vunpack.c.l.b16 %v538
    %v1181 = vunpack.c.h.b16 %v538
    %v1182 = vunpack.c.l.b16 %v539
    %v1183 = vunpack.c.h.b16 %v539
    %v1184 = vunpack.c.l.b16 %v540
    %v1185 = vunpack.c.h.b16 %v540
    %v1186 = vunpack.c.l.b16 %v541
    %v1187 = vunpack.c.h.b16 %v541
    %v1188 = vunpack.c.l.b16 %v542
    %v1189 = vunpack.c.h.b16 %v542
    %v1190 = vunpack.c.l.b16 %v543
    %v1191 = vunpack.c.h.b16 %v543
    %v1192 = vunpack.c.l.b16 %v544
    %v1193 = vunpack.c.h.b16 %v544
    %v1194 = vunpack.c.l.b16 %v545
    %v1195 = vunpack.c.h.b16 %v545
    %v1196 = vunpack.c.l.b16 %v546
    %v1197 = vunpack.c.h.b16 %v546
    %v1198 = vunpack.c.l.b16 %v547
    %v1199 = vunpack.c.h.b16 %v547
    %v1200 = vunpack.c.l.b16 %v548
    %v1201 = vunpack.c.h.b16 %v548
    %v1202 = vunpack.c.l.b16 %v549
    %v1203 = vunpack.c.h.b16 %v549
    %v1204 = vunpack.c.l.b16 %v550
    %v1205 = vunpack.c.h.b16 %v550
    %v1206 = vunpack.c.l.b16 %v551
    %v1207 = vunpack.c.h.b16 %v551
    %v1208 = vunpack.c.l.b16 %v552
    %v1209 = vunpack.c.h.b16 %v552
    %v1210 = vunpack.c.l.b16 %v553
    %v1211 = vunpack.c.h.b16 %v553
    %v1212 = vunpack.c.l.b16 %v554
    %v1213 = vunpack.c.h.b16 %v554
    %v1214 = vunpack.c.l.b16 %v555
    %v1215 = vunpack.c.h.b16 %v555
    %v1216 = vunpack.c.l.b16 %v556
    %v1217 = vunpack.c.h.b16 %v556
    %v1218 = vunpack.c.l.b16 %v557
    %v1219 = vunpack.c.h.b16 %v557
    %v1220 = vunpack.c.l.b16 %v558
    %v1221 = vunpack.c.h.b16 %v558
    %v1222 = vunpack.c.l.b16 %v559
    %v1223 = vunpack.c.h.b16 %v559
    %v1224 = vunpack.c.l.b16 %v560
    %v1225 = vunpack.c.h.b16 %v560
    %v1226 = vunpack.c.l.b16 %v561
    %v1227 = vunpack.c.h.b16 %v561
    %v1228 = vunpack.c.l.b16 %v562
    %v1229 = vunpack.c.h.b16 %v562
    %v1230 = vunpack.c.l.b16 %v563
    %v1231 = vunpack.c.h.b16 %v563
    %v1232 = vunpack.c.l.b16 %v564
    %v1233 = vunpack.c.h.b16 %v564
    %v1234 = vunpack.c.l.b16 %v565
    %v1235 = vunpack.c.h.b16 %v565
    %v1236 = vunpack.c.l.b16 %v566
    %v1237 = vunpack.c.h.b16 %v566
    %v1238 = vunpack.c.l.b16 %v567
    %v1239 = vunpack.c.h.b16 %v567
    %v1240 = vunpack.c.l.b16 %v568
    %v1241 = vunpack.c.h.b16 %v568
    %v1242 = vunpack.c.l.b16 %v569
    %v1243 = vunpack.c.h.b16 %v569
    %v1244 = vunpack.c.l.b16 %v570
    %v1245 = vunpack.c.h.b16 %v570
    %v1246 = vunpack.c.l.b16 %v571
    %v1247 = vunpack.c.h.b16 %v571
    %v1248 = vunpack.c.l.b16 %v572
    %v1249 = vunpack.c.h.b16 %v572
    %v1250 = vunpack.c.l.b16 %v573
    %v1251 = vunpack.c.h.b16 %v573
    %v1252 = vunpack.c.l.b16 %v574
    %v1253 = vunpack.c.h.b16 %v574
    %v1254 = vunpack.c.l.b16 %v575
    %v1255 = vunpack.c.h.b16 %v575
    %v1256 = vunpack.c.l.b16 %v576
    %v1257 = vunpack.c.h.b16 %v576
    %v1258 = vunpack.c.l.b16 %v577
    %v1259 = vunpack.c.h.b16 %v577
    %v1260 = vunpack.c.l.b16 %v578
    %v1261 = vunpack.c.h.b16 %v578
    %v1262 = vunpack.c.l.b16 %v579
    %v1263 = vunpack.c.h.b16 %v579
    %v1264 = vunpack.c.l.b16 %v580
    %v1265 = vunpack.c.h.b16 %v580
    %v1266 = vunpack.c.l.b16 %v581
    %v1267 = vunpack.c.h.b16 %v581
    %v1268 = vunpack.c.l.b16 %v582
    %v1269 = vunpack.c.h.b16 %v582
    %v1270 = vunpack.c.l.b16 %v583
    %v1271 = vunpack.c.h.b16 %v583
    %v1272 = vunpack.c.l.b16 %v584
    %v1273 = vunpack.c.h.b16 %v584
    %v1274 = vunpack.c.l.b16 %v585
    %v1275 = vunpack.c.h.b16 %v585
    %v1276 = vunpack.c.l.b16 %v586
    %v1277 = vunpack.c.h.b16 %v586
    %v1278 = vunpack.c.l.b16 %v587
    %v1279 = vunpack.c.h.b16 %v587
    %v1280 = vunpack.c.l.b16 %v588
    %v1281 = vunpack.c.h.b16 %v588
    %v1282 = vunpack.c.l.b16 %v589
    %v1283 = vunpack.c.h.b16 %v589
    %v1284 = vunpack.c.l.b16 %v590
    %v1285 = vunpack.c.h.b16 %v590
    %v1286 = vunpack.c.l.b16 %v591
    %v1287 = vunpack.c.h.b16 %v591
    %v1288 = vunpack.c.l.b16 %v592
    %v1289 = vunpack.c.h.b16 %v592
    %v1290 = vunpack.c.l.b16 %v593
    %v1291 = vunpack.c.h.b16 %v593
    %v1292 = vunpack.c.l.b16 %v594
    %v1293 = vunpack.c.h.b16 %v594
    %v1294 = vunpack.c.l.b16 %v595
    %v1295 = vunpack.c.h.b16 %v595
    %v1296 = vunpack.c.l.b16 %v596
    %v1297 = vunpack.c.h.b16 %v596
    %v1298 = vunpack.c.l.b16 %v597
    %v1299 = vunpack.c.h.b16 %v597
    %v1300 = vunpack.c.l.b16 %v598
    %v1301 = vunpack.c.h.b16 %v598
    %v1302 = vunpack.c.l.b16 %v599
    %v1303 = vunpack.c.h.b16 %v599
    %v1304 = vunpack.c.l.b16 %v600
    %v1305 = vunpack.c.h.b16 %v600
    %v1306 = vunpack.c.l.b16 %v601
    %v1307 = vunpack.c.h.b16 %v601
    %v1308 = vunpack.c.l.b16 %v602
    %v1309 = vunpack.c.h.b16 %v602
    %v1310 = vunpack.c.l.b16 %v603
    %v1311 = vunpack.c.h.b16 %v603
    %v1312 = vunpack.c.l.b16 %v604
    %v1313 = vunpack.c.h.b16 %v604
    %v1314 = vunpack.c.l.b16 %v605
    %v1315 = vunpack.c.h.b16 %v605
    %v1316 = vunpack.c.l.b16 %v606
    %v1317 = vunpack.c.h.b16 %v606
    %v1318 = vunpack.c.l.b16 %v607
    %v1319 = vunpack.c.h.b16 %v607
    %v1320 = vunpack.c.l.b16 %v608
    %v1321 = vunpack.c.h.b16 %v608
    %v1322 = vunpack.c.l.b16 %v609
    %v1323 = vunpack.c.h.b16 %v609
    %v1324 = vunpack.c.l.b16 %v610
    %v1325 = vunpack.c.h.b16 %v610
    %v1326 = vunpack.c.l.b16 %v611
    %v1327 = vunpack.c.h.b16 %v611
    %v1328 = vunpack.c.l.b16 %v612
    %v1329 = vunpack.c.h.b16 %v612
    %v1330 = vunpack.c.l.b16 %v613
    %v1331 = vunpack.c.h.b16 %v613
    %v1332 = vunpack.c.l.b16 %v614
    %v1333 = vunpack.c.h.b16 %v614
    %v1334 = vunpack.c.l.b16 %v615
    %v1335 = vunpack.c.h.b16 %v615
    %v1336 = vunpack.c.l.b16 %v616
    %v1337 = vunpack.c.h.b16 %v616
    %v1338 = vunpack.c.l.b16 %v617
    %v1339 = vunpack.c.h.b16 %v617
    %v1340 = vunpack.c.l.b16 %v618
    %v1341 = vunpack.c.h.b16 %v618
    %v1342 = vunpack.c.l.b16 %v619
    %v1343 = vunpack.c.h.b16 %v619
    %v1344 = vunpack.c.l.b16 %v620
    %v1345 = vunpack.c.h.b16 %v620
    %v1346 = vunpack.c.l.b16 %v621
    %v1347 = vunpack.c.h.b16 %v621
    %v1348 = vunpack.c.l.b16 %v622
    %v1349 = vunpack.c.h.b16 %v622
    %v1350 = vunpack.c.l.b16 %v623
    %v1351 = vunpack.c.h.b16 %v623
    %v1352 = vunpack.c.l.b16 %v624
    %v1353 = vunpack.c.h.b16 %v624
    %v1354 = vunpack.c.l.b16 %v625
    %v1355 = vunpack.c.h.b16 %v625
    %v1356 = vunpack.c.l.b16 %v626
    %v1357 = vunpack.c.h.b16 %v626
    %v1358 = vunpack.c.l.b16 %v627
    %v1359 = vunpack.c.h.b16 %v627
    %v1360 = vunpack.c.l.b16 %v628
    %v1361 = vunpack.c.h.b16 %v628
    %v1362 = vunpack.c.l.b16 %v629
    %v1363 = vunpack.c.h.b16 %v629
    %v1364 = vunpack.c.l.b16 %v630
    %v1365 = vunpack.c.h.b16 %v630
    %v1366 = vunpack.c.l.b16 %v631
    %v1367 = vunpack.c.h.b16 %v631
    %v1368 = vunpack.c.l.b16 %v632
    %v1369 = vunpack.c.h.b16 %v632
    %v1370 = vunpack.c.l.b16 %v633
    %v1371 = vunpack.c.h.b16 %v633
    %v1372 = vunpack.c.l.b16 %v634
    %v1373 = vunpack.c.h.b16 %v634
    %v1374 = vunpack.c.l.b16 %v635
    %v1375 = vunpack.c.h.b16 %v635
    %v1376 = vunpack.c.l.b16 %v636
    %v1377 = vunpack.c.h.b16 %v636
    %v1378 = vunpack.c.l.b16 %v637
    %v1379 = vunpack.c.h.b16 %v637
    %v1380 = vunpack.c.l.b16 %v638
    %v1381 = vunpack.c.h.b16 %v638
    %v1382 = vunpack.c.l.b16 %v639
    %v1383 = vunpack.c.h.b16 %v639
    %v1384 = vunpack.c.l.b16 %v640
    %v1385 = vunpack.c.h.b16 %v640
    %v1386 = vunpack.c.l.b16 %v641
    %v1387 = vunpack.c.h.b16 %v641
    %v1388 = vunpack.c.l.b16 %v642
    %v1389 = vunpack.c.h.b16 %v642
    %v1390 = vunpack.c.l.b16 %v643
    %v1391 = vunpack.c.h.b16 %v643
    %v1392 = vunpack.c.l.b16 %v644
    %v1393 = vunpack.c.h.b16 %v644
    %v1394 = vunpack.c.l.b16 %v645
    %v1395 = vunpack.c.h.b16 %v645
    %v1396 = vunpack.c.l.b16 %v646
    %v1397 = vunpack.c.h.b16 %v646
    %v1398 = vunpack.c.l.b16 %v647
    %v1399 = vunpack.c.h.b16 %v647
    %v1400 = vunpack.c.l.b16 %v648
    %v1401 = vunpack.c.h.b16 %v648
    %v1402 = vunpack.c.l.b16 %v649
    %v1403 = vunpack.c.h.b16 %v649
    %v1404 = vunpack.c.l.b16 %v650
    %v1405 = vunpack.c.h.b16 %v650
    %v1406 = vunpack.c.l.b16 %v651
    %v1407 = vunpack.c.h.b16 %v651
    %v1408 = vunpack.c.l.b16 %v652
    %v1409 = vunpack.c.h.b16 %v652
    %v1410 = vunpack.c.l.b16 %v653
    %v1411 = vunpack.c.h.b16 %v653
    %v1412 = vunpack.c.l.b16 %v654
    %v1413 = vunpack.c.h.b16 %v654
    %v1414 = vunpack.c.l.b16 %v655
    %v1415 = vunpack.c.h.b16 %v655
    %v1416 = vunpack.c.l.b16 %v656
    %v1417 = vunpack.c.h.b16 %v656
    %v1418 = vunpack.c.l.b16 %v657
    %v1419 = vunpack.c.h.b16 %v657
    %v1420 = vunpack.c.l.b16 %v658
    %v1421 = vunpack.c.h.b16 %v658
    %v1422 = vunpack.c.l.b16 %v659
    %v1423 = vunpack.c.h.b16 %v659
    %v1424 = vunpack.c.l.b16 %v660
    %v1425 = vunpack.c.h.b16 %v660
    %v1426 = vunpack.c.l.b16 %v661
    %v1427 = vunpack.c.h.b16 %v661
    %v1428 = vunpack.c.l.b16 %v662
    %v1429 = vunpack.c.h.b16 %v662
    %v1430 = vunpack.c.l.b16 %v663
    %v1431 = vunpack.c.h.b16 %v663
    %v1432 = vunpack.c.l.b16 %v664
    %v1433 = vunpack.c.h.b16 %v664
    %v1434 = vunpack.c.l.b16 %v665
    %v1435 = vunpack.c.h.b16 %v665
    %v1436 = vunpack.c.l.b16 %v666
    %v1437 = vunpack.c.h.b16 %v666
    %v1438 = vunpack.c.l.b16 %v667
    %v1439 = vunpack.c.h.b16 %v667
    %v1440 = vunpack.c.l.b16 %v668
    %v1441 = vunpack.c.h.b16 %v668
    %v1442 = vunpack.c.l.b16 %v669
    %v1443 = vunpack.c.h.b16 %v669
    %v1444 = vunpack.c.l.b16 %v670
    %v1445 = vunpack.c.h.b16 %v670
    %v1446 = vunpack.c.l.b16 %v671
    %v1447 = vunpack.c.h.b16 %v671
    %v1448 = vunpack.c.l.b16 %v672
    %v1449 = vunpack.c.h.b16 %v672
    %v1450 = vunpack.c.l.b16 %v673
    %v1451 = vunpack.c.h.b16 %v673
    %v1452 = vunpack.c.l.b16 %v674
    %v1453 = vunpack.c.h.b16 %v674
    %v1454 = vunpack.c.l.b16 %v675
    %v1455 = vunpack.c.h.b16 %v675
    %v1456 = vunpack.c.l.b16 %v676
    %v1457 = vunpack.c.h.b16 %v676
    %v1458 = vunpack.c.l.b16 %v677
    %v1459 = vunpack.c.h.b16 %v677
    %v1460 = vunpack.c.l.b16 %v678
    %v1461 = vunpack.c.h.b16 %v678
    %v1462 = vunpack.c.l.b16 %v679
    %v1463 = vunpack.c.h.b16 %v679
    %v1464 = vunpack.c.l.b16 %v680
    %v1465 = vunpack.c.h.b16 %v680
    %v1466 = vunpack.c.l.b16 %v681
    %v1467 = vunpack.c.h.b16 %v681
    %v1468 = vunpack.c.l.b16 %v682
    %v1469 = vunpack.c.h.b16 %v682
    %v1470 = vunpack.c.l.b16 %v683
    %v1471 = vunpack.c.h.b16 %v683
    %v1472 = vunpack.c.l.b16 %v684
    %v1473 = vunpack.c.h.b16 %v684
    %v1474 = vunpack.c.l.b16 %v685
    %v1475 = vunpack.c.h.b16 %v685
    %v1476 = vunpack.c.l.b16 %v686
    %v1477 = vunpack.c.h.b16 %v686
    %v1478 = vunpack.c.l.b16 %v687
    %v1479 = vunpack.c.h.b16 %v687
    %v1480 = vunpack.c.l.b16 %v688
    %v1481 = vunpack.c.h.b16 %v688
    %v1482 = vunpack.c.l.b16 %v689
    %v1483 = vunpack.c.h.b16 %v689
    %v1484 = vunpack.c.l.b16 %v690
    %v1485 = vunpack.c.h.b16 %v690
    %v1486 = vunpack.c.l.b16 %v691
    %v1487 = vunpack.c.h.b16 %v691
    %v1488 = vunpack.c.l.b16 %v692
    %v1489 = vunpack.c.h.b16 %v692
    %v1490 = vunpack.c.l.b16 %v693
    %v1491 = vunpack.c.h.b16 %v693
    %v1492 = vunpack.c.l.b16 %v694
    %v1493 = vunpack.c.h.b16 %v694
    %v1494 = vunpack.c.l.b16 %v695
    %v1495 = vunpack.c.h.b16 %v695
    %v1496 = vunpack.c.l.b16 %v696
    %v1497 = vunpack.c.h.b16 %v696
    %v1498 = vunpack.c.l.b16 %v697
    %v1499 = vunpack.c.h.b16 %v697
    %v1500 = vunpack.c.l.b16 %v698
    %v1501 = vunpack.c.h.b16 %v698
    %v1502 = vunpack.c.l.b16 %v699
    %v1503 = vunpack.c.h.b16 %v699
    %v1504 = vunpack.c.l.b16 %v700
    %v1505 = vunpack.c.h.b16 %v700
    %v1506 = vunpack.c.l.b16 %v701
    %v1507 = vunpack.c.h.b16 %v701
    %v1508 = vunpack.c.l.b16 %v702
    %v1509 = vunpack.c.h.b16 %v702
    %v1510 = vunpack.c.l.b16 %v703
    %v1511 = vunpack.c.h.b16 %v703
    %v1512 = vunpack.c.l.b16 %v704
    %v1513 = vunpack.c.h.b16 %v704
    %v1514 = vunpack.c.l.b16 %v705
    %v1515 = vunpack.c.h.b16 %v705
    %v1516 = vpack.c.b16 %v1012, %v1004
    %v1517 = vpack.c.b16 %v1013, %v1005
    %v1518 = vpack.c.b16 %v1014, %v1006
    %v1519 = vpack.c.b16 %v1015, %v1007
    %v1520 = vpack.c.b16 %v1016, %v1008
    %v1521 = vpack.c.b16 %v1017, %v1009
    %v1522 = vpack.c.b16 %v1018, %v1010
    %v1523 = vpack.c.b16 %v1019, %v1011
    %v1524 = vpack.c.b16 %v1028, %v1020
    %v1525 = vpack.c.b16 %v1029, %v1021
    %v1526 = vpack.c.b16 %v1030, %v1022
    %v1527 = vpack.c.b16 %v1031, %v1023
    %v1528 = vpack.c.b16 %v1032, %v1024
    %v1529 = vpack.c.b16 %v1033, %v1025
    %v1530 = vpack.c.b16 %v1034, %v1026
    %v1531 = vpack.c.b16 %v1035, %v1027
    %v1532 = vpack.c.b16 %v1044, %v1036
    %v1533 = vpack.c.b16 %v1045, %v1037
    %v1534 = vpack.c.b16 %v1046, %v1038
    %v1535 = vpack.c.b16 %v1047, %v1039
    %v1536 = vpack.c.b16 %v1048, %v1040
    %v1537 = vpack.c.b16 %v1049, %v1041
    %v1538 = vpack.c.b16 %v1050, %v1042
    %v1539 = vpack.c.b16 %v1051, %v1043
    %v1540 = vpack.c.b16 %v1060, %v1052
    %v1541 = vpack.c.b16 %v1061, %v1053
    %v1542 = vpack.c.b16 %v1062, %v1054
    %v1543 = vpack.c.b16 %v1063, %v1055
    %v1544 = vpack.c.b16 %v1064, %v1056
    %v1545 = vpack.c.b16 %v1065, %v1057
    %v1546 = vpack.c.b16 %v1066, %v1058
    %v1547 = vpack.c.b16 %v1067, %v1059
    %v1548 = vpack.c.b16 %v1076, %v1068
    %v1549 = vpack.c.b16 %v1077, %v1069
    %v1550 = vpack.c.b16 %v1078, %v1070
    %v1551 = vpack.c.b16 %v1079, %v1071
    %v1552 = vpack.c.b16 %v1080, %v1072
    %v1553 = vpack.c.b16 %v1081, %v1073
    %v1554 = vpack.c.b16 %v1082, %v1074
    %v1555 = vpack.c.b16 %v1083, %v1075
    %v1556 = vpack.c.b16 %v1092, %v1084
    %v1557 = vpack.c.b16 %v1093, %v1085
    %v1558 = vpack.c.b16 %v1094, %v1086
    %v1559 = vpack.c.b16 %v1095, %v1087
    %v1560 = vpack.c.b16 %v1096, %v1088
    %v1561 = vpack.c.b16 %v1097, %v1089
    %v1562 = vpack.c.b16 %v1098, %v1090
    %v1563 = vpack.c.b16 %v1099, %v1091
    %v1564 = vpack.c.b16 %v1108, %v1100
    %v1565 = vpack.c.b16 %v1109, %v1101
    %v1566 = vpack.c.b16 %v1110, %v1102
    %v1567 = vpack.c.b16 %v1111, %v1103
    %v1568 = vpack.c.b16 %v1112, %v1104
    %v1569 = vpack.c.b16 %v1113, %v1105
    %v1570 = vpack.c.b16 %v1114, %v1106
    %v1571 = vpack.c.b16 %v1115, %v1107
    %v1572 = vpack.c.b16 %v1124, %v1116
    %v1573 = vpack.c.b16 %v1125, %v1117
    %v1574 = vpack.c.b16 %v1126, %v1118
    %v1575 = vpack.c.b16 %v1127, %v1119
    %v1576 = vpack.c.b16 %v1128, %v1120
    %v1577 = vpack.c.b16 %v1129, %v1121
    %v1578 = vpack.c.b16 %v1130, %v1122
    %v1579 = vpack.c.b16 %v1131, %v1123
    %v1580 = vpack.c.b16 %v1140, %v1132
    %v1581 = vpack.c.b16 %v1141, %v1133
    %v1582 = vpack.c.b16 %v1142, %v1134
    %v1583 = vpack.c.b16 %v1143, %v1135
    %v1584 = vpack.c.b16 %v1144, %v1136
    %v1585 = vpack.c.b16 %v1145, %v1137
    %v1586 = vpack.c.b16 %v1146, %v1138
    %v1587 = vpack.c.b16 %v1147, %v1139
    %v1588 = vpack.c.b16 %v1156, %v1148
    %v1589 = vpack.c.b16 %v1157, %v1149
    %v1590 = vpack.c.b16 %v1158, %v1150
    %v1591 = vpack.c.b16 %v1159, %v1151
    %v1592 = vpack.c.b16 %v1160, %v1152
    %v1593 = vpack.c.b16 %v1161, %v1153
    %v1594 = vpack.c.b16 %v1162, %v1154
    %v1595 = vpack.c.b16 %v1163, %v1155
    %v1596 = vpack.c.b16 %v1172, %v1164
    %v1597 = vpack.c.b16 %v1173, %v1165
    %v1598 = vpack.c.b16 %v1174, %v1166
    %v1599 = vpack.c.b16 %v1175, %v1167
    %v1600 = vpack.c.b16 %v1176, %v1168
    %v1601 = vpack.c.b16 %v1177, %v1169
    %v1602 = vpack.c.b16 %v1178, %v1170
    %v1603 = vpack.c.b16 %v1179, %v1171
    %v1604 = vpack.c.b16 %v1188, %v1180
    %v1605 = vpack.c.b16 %v1189, %v1181
    %v1606 = vpack.c.b16 %v1190, %v1182
    %v1607 = vpack.c.b16 %v1191, %v1183
    %v1608 = vpack.c.b16 %v1192, %v1184
    %v1609 = vpack.c.b16 %v1193, %v1185
    %v1610 = vpack.c.b16 %v1194, %v1186
    %v1611 = vpack.c.b16 %v1195, %v1187
    %v1612 = vpack.c.b16 %v1204, %v1196
    %v1613 = vpack.c.b16 %v1205, %v1197
    %v1614 = vpack.c.b16 %v1206, %v1198
    %v1615 = vpack.c.b16 %v1207, %v1199
    %v1616 = vpack.c.b16 %v1208, %v1200
    %v1617 = vpack.c.b16 %v1209, %v1201
    %v1618 = vpack.c.b16 %v1210, %v1202
    %v1619 = vpack.c.b16 %v1211, %v1203
    %v1620 = vpack.c.b16 %v1220, %v1212
    %v1621 = vpack.c.b16 %v1221, %v1213
    %v1622 = vpack.c.b16 %v1222, %v1214
    %v1623 = vpack.c.b16 %v1223, %v1215
    %v1624 = vpack.c.b16 %v1224, %v1216
    %v1625 = vpack.c.b16 %v1225, %v1217
    %v1626 = vpack.c.b16 %v1226, %v1218
    %v1627 = vpack.c.b16 %v1227, %v1219
    %v1628 = vpack.c.b16 %v1236, %v1228
    %v1629 = vpack.c.b16 %v1237, %v1229
    %v1630 = vpack.c.b16 %v1238, %v1230
    %v1631 = vpack.c.b16 %v1239, %v1231
    %v1632 = vpack.c.b16 %v1240, %v1232
    %v1633 = vpack.c.b16 %v1241, %v1233
    %v1634 = vpack.c.b16 %v1242, %v1234
    %v1635 = vpack.c.b16 %v1243, %v1235
    %v1636 = vpack.c.b16 %v1252, %v1244
    %v1637 = vpack.c.b16 %v1253, %v1245
    %v1638 = vpack.c.b16 %v1254, %v1246
    %v1639 = vpack.c.b16 %v1255, %v1247
    %v1640 = vpack.c.b16 %v1256, %v1248
    %v1641 = vpack.c.b16 %v1257, %v1249
    %v1642 = vpack.c.b16 %v1258, %v1250
    %v1643 = vpack.c.b16 %v1259, %v1251
    %v1644 = vpack.c.b16 %v1268, %v1260
    %v1645 = vpack.c.b16 %v1269, %v1261
    %v1646 = vpack.c.b16 %v1270, %v1262
    %v1647 = vpack.c.b16 %v1271, %v1263
    %v1648 = vpack.c.b16 %v1272, %v1264
    %v1649 = vpack.c.b16 %v1273, %v1265
    %v1650 = vpack.c.b16 %v1274, %v1266
    %v1651 = vpack.c.b16 %v1275, %v1267
    %v1652 = vpack.c.b16 %v1284, %v1276
    %v1653 = vpack.c.b16 %v1285, %v1277
    %v1654 = vpack.c.b16 %v1286, %v1278
    %v1655 = vpack.c.b16 %v1287, %v1279
    %v1656 = vpack.c.b16 %v1288, %v1280
    %v1657 = vpack.c.b16 %v1289, %v1281
    %v1658 = vpack.c.b16 %v1290, %v1282
    %v1659 = vpack.c.b16 %v1291, %v1283
    %v1660 = vpack.c.b16 %v1300, %v1292
    %v1661 = vpack.c.b16 %v1301, %v1293
    %v1662 = vpack.c.b16 %v1302, %v1294
    %v1663 = vpack.c.b16 %v1303, %v1295
    %v1664 = vpack.c.b16 %v1304, %v1296
    %v1665 = vpack.c.b16 %v1305, %v1297
    %v1666 = vpack.c.b16 %v1306, %v1298
    %v1667 = vpack.c.b16 %v1307, %v1299
    %v1668 = vpack.c.b16 %v1316, %v1308
    %v1669 = vpack.c.b16 %v1317, %v1309
    %v1670 = vpack.c.b16 %v1318, %v1310
    %v1671 = vpack.c.b16 %v1319, %v1311
    %v1672 = vpack.c.b16 %v1320, %v1312
    %v1673 = vpack.c.b16 %v1321, %v1313
    %v1674 = vpack.c.b16 %v1322, %v1314
    %v1675 = vpack.c.b16 %v1323, %v1315
    %v1676 = vpack.c.b16 %v1332, %v1324
    %v1677 = vpack.c.b16 %v1333, %v1325
    %v1678 = vpack.c.b16 %v1334, %v1326
    %v1679 = vpack.c.b16 %v1335, %v1327
    %v1680 = vpack.c.b16 %v1336, %v1328
    %v1681 = vpack.c.b16 %v1337, %v1329
    %v1682 = vpack.c.b16 %v1338, %v1330
    %v1683 = vpack.c.b16 %v1339, %v1331
    %v1684 = vpack.c.b16 %v1348, %v1340
    %v1685 = vpack.c.b16 %v1349, %v1341
    %v1686 = vpack.c.b16 %v1350, %v1342
    %v1687 = vpack.c.b16 %v1351, %v1343
    %v1688 = vpack.c.b16 %v1352, %v1344
    %v1689 = vpack.c.b16 %v1353, %v1345
    %v1690 = vpack.c.b16 %v1354, %v1346
    %v1691 = vpack.c.b16 %v1355, %v1347
    %v1692 = vpack.c.b16 %v1364, %v1356
    %v1693 = vpack.c.b16 %v1365, %v1357
    %v1694 = vpack.c.b16 %v1366, %v1358
    %v1695 = vpack.c.b16 %v1367, %v1359
    %v1696 = vpack.c.b16 %v1368, %v1360
    %v1697 = vpack.c.b16 %v1369, %v1361
    %v1698 = vpack.c.b16 %v1370, %v1362
    %v1699 = vpack.c.b16 %v1371, %v1363
    %v1700 = vpack.c.b16 %v1380, %v1372
    %v1701 = vpack.c.b16 %v1381, %v1373
    %v1702 = vpack.c.b16 %v1382, %v1374
    %v1703 = vpack.c.b16 %v1383, %v1375
    %v1704 = vpack.c.b16 %v1384, %v1376
    %v1705 = vpack.c.b16 %v1385, %v1377
    %v1706 = vpack.c.b16 %v1386, %v1378
    %v1707 = vpack.c.b16 %v1387, %v1379
    %v1708 = vpack.c.b16 %v1396, %v1388
    %v1709 = vpack.c.b16 %v1397, %v1389
    %v1710 = vpack.c.b16 %v1398, %v1390
    %v1711 = vpack.c.b16 %v1399, %v1391
    %v1712 = vpack.c.b16 %v1400, %v1392
    %v1713 = vpack.c.b16 %v1401, %v1393
    %v1714 = vpack.c.b16 %v1402, %v1394
    %v1715 = vpack.c.b16 %v1403, %v1395
    %v1716 = vpack.c.b16 %v1412, %v1404
    %v1717 = vpack.c.b16 %v1413, %v1405
    %v1718 = vpack.c.b16 %v1414, %v1406
    %v1719 = vpack.c.b16 %v1415, %v1407
    %v1720 = vpack.c.b16 %v1416, %v1408
    %v1721 = vpack.c.b16 %v1417, %v1409
    %v1722 = vpack.c.b16 %v1418, %v1410
    %v1723 = vpack.c.b16 %v1419, %v1411
    %v1724 = vpack.c.b16 %v1428, %v1420
    %v1725 = vpack.c.b16 %v1429, %v1421
    %v1726 = vpack.c.b16 %v1430, %v1422
    %v1727 = vpack.c.b16 %v1431, %v1423
    %v1728 = vpack.c.b16 %v1432, %v1424
    %v1729 = vpack.c.b16 %v1433, %v1425
    %v1730 = vpack.c.b16 %v1434, %v1426
    %v1731 = vpack.c.b16 %v1435, %v1427
    %v1732 = vpack.c.b16 %v1444, %v1436
    %v1733 = vpack.c.b16 %v1445, %v1437
    %v1734 = vpack.c.b16 %v1446, %v1438
    %v1735 = vpack.c.b16 %v1447, %v1439
    %v1736 = vpack.c.b16 %v1448, %v1440
    %v1737 = vpack.c.b16 %v1449, %v1441
    %v1738 = vpack.c.b16 %v1450, %v1442
    %v1739 = vpack.c.b16 %v1451, %v1443
    %v1740 = vpack.c.b16 %v1460, %v1452
    %v1741 = vpack.c.b16 %v1461, %v1453
    %v1742 = vpack.c.b16 %v1462, %v1454
    %v1743 = vpack.c.b16 %v1463, %v1455
    %v1744 = vpack.c.b16 %v1464, %v1456
    %v1745 = vpack.c.b16 %v1465, %v1457
    %v1746 = vpack.c.b16 %v1466, %v1458
    %v1747 = vpack.c.b16 %v1467, %v1459
    %v1748 = vpack.c.b16 %v1476, %v1468
    %v1749 = vpack.c.b16 %v1477, %v1469
    %v1750 = vpack.c.b16 %v1478, %v1470
    %v1751 = vpack.c.b16 %v1479, %v1471
    %v1752 = vpack.c.b16 %v1480, %v1472
    %v1753 = vpack.c.b16 %v1481, %v1473
    %v1754 = vpack.c.b16 %v1482, %v1474
    %v1755 = vpack.c.b16 %v1483, %v1475
    %v1756 = vpack.c.b16 %v1492, %v1484
    %v1757 = vpack.c.b16 %v1493, %v1485
    %v1758 = vpack.c.b16 %v1494, %v1486
    %v1759 = vpack.c.b16 %v1495, %v1487
    %v1760 = vpack.c.b16 %v1496, %v1488
    %v1761 = vpack.c.b16 %v1497, %v1489
    %v1762 = vpack.c.b16 %v1498, %v1490
    %v1763 = vpack.c.b16 %v1499, %v1491
    %v1764 = vpack.c.b16 %v1508, %v1500
    %v1765 = vpack.c.b16 %v1509, %v1501
    %v1766 = vpack.c.b16 %v1510, %v1502
    %v1767 = vpack.c.b16 %v1511, %v1503
    %v1768 = vpack.c.b16 %v1512, %v1504
    %v1769 = vpack.c.b16 %v1513, %v1505
    %v1770 = vpack.c.b16 %v1514, %v1506
    %v1771 = vpack.c.b16 %v1515, %v1507
    %2028 = vmatprep.subr.bf16.mxu0 %v1573
    %2029 = vmatpush1.bf16.msra.mxu0 %v1572
    %2030 = vmatprep.subr.bf16.mxu0 %v1565
    %2031 = vmatpush1.bf16.msra.mxu0 %v1564
    %2032 = vmatprep.subr.bf16.mxu0 %v1557
    %2033 = vmatpush1.bf16.msra.mxu0 %v1556
    %2034 = vmatprep.subr.bf16.mxu0 %v1549
    %2035 = vmatpush1.bf16.msra.mxu0 %v1548
    %2036 = vmatprep.subr.bf16.mxu0 %v1541
    %2037 = vmatpush1.bf16.msra.mxu0 %v1540
    %2038 = vmatprep.subr.bf16.mxu0 %v1533
    %2039 = vmatpush1.bf16.msra.mxu0 %v1532
    %2040 = vmatprep.subr.bf16.mxu0 %v1525
    %2041 = vmatpush1.bf16.msra.mxu0 %v1524
    %2042 = vmatprep.subr.bf16.mxu0 %v1517
    %2043 = vmatpush1.bf16.msra.mxu0 %v1516
    %2044 = vmatprep.subr.bf16.mxu0 %v1637
    %2045 = vmatpush2.bf16.msra.mxu0 %v1636
    %2046 = vmatprep.subr.bf16.mxu0 %v1629
    %2047 = vmatpush2.bf16.msra.mxu0 %v1628
    %2048 = vmatprep.subr.bf16.mxu0 %v1621
    %2049 = vmatpush2.bf16.msra.mxu0 %v1620
    %2050 = vmatprep.subr.bf16.mxu0 %v1613
    %2051 = vmatpush2.bf16.msra.mxu0 %v1612
    %2052 = vmatprep.subr.bf16.mxu0 %v1605
    %2053 = vmatpush2.bf16.msra.mxu0 %v1604
    %2054 = vmatprep.subr.bf16.mxu0 %v1597
    %2055 = vmatpush2.bf16.msra.mxu0 %v1596
    %2056 = vmatprep.subr.bf16.mxu0 %v1589
    %2057 = vmatpush2.bf16.msra.mxu0 %v1588
    %2058 = vmatprep.subr.bf16.mxu0 %v1581
    %2059 = vmatpush2.bf16.msra.mxu0 %v1580
    %2060 = vmatprep.mubr.bf16.mxu0 %v447
    %2061 = vmatmul.mubr.bf16.gmra.mxu0 %v446
    %v2062 = vpop.f32.mrf.mxu0
    %v2063 = vadd.f32 %v711, %v2062
    %v2064 = vpop.f32.mrf.mxu0
    %v2065 = vadd.f32 %v715, %v2064
    %v2066 = vpop.f32.mrf.mxu0
    %v2067 = vadd.f32 %v711, %v2066
    %v2068 = vpop.f32.mrf.mxu0
    %v2069 = vadd.f32 %v715, %v2068
    %2070 = vdwg.mxu0
    %2071 = vmatprep.subr.bf16.mxu0 %v1701
    %2072 = vmatpush1.bf16.msra.mxu0 %v1700
    %2073 = vmatprep.subr.bf16.mxu0 %v1693
    %2074 = vmatpush1.bf16.msra.mxu0 %v1692
    %2075 = vmatprep.subr.bf16.mxu0 %v1685
    %2076 = vmatpush1.bf16.msra.mxu0 %v1684
    %2077 = vmatprep.subr.bf16.mxu0 %v1677
    %2078 = vmatpush1.bf16.msra.mxu0 %v1676
    %2079 = vmatprep.subr.bf16.mxu0 %v1669
    %2080 = vmatpush1.bf16.msra.mxu0 %v1668
    %2081 = vmatprep.subr.bf16.mxu0 %v1661
    %2082 = vmatpush1.bf16.msra.mxu0 %v1660
    %2083 = vmatprep.subr.bf16.mxu0 %v1653
    %2084 = vmatpush1.bf16.msra.mxu0 %v1652
    %2085 = vmatprep.subr.bf16.mxu0 %v1645
    %2086 = vmatpush1.bf16.msra.mxu0 %v1644
    %2087 = vmatprep.subr.bf16.mxu0 %v1765
    %2088 = vmatpush2.bf16.msra.mxu0 %v1764
    %2089 = vmatprep.subr.bf16.mxu0 %v1757
    %2090 = vmatpush2.bf16.msra.mxu0 %v1756
    %2091 = vmatprep.subr.bf16.mxu0 %v1749
    %2092 = vmatpush2.bf16.msra.mxu0 %v1748
    %2093 = vmatprep.subr.bf16.mxu0 %v1741
    %2094 = vmatpush2.bf16.msra.mxu0 %v1740
    %2095 = vmatprep.subr.bf16.mxu0 %v1733
    %2096 = vmatpush2.bf16.msra.mxu0 %v1732
    %2097 = vmatprep.subr.bf16.mxu0 %v1725
    %2098 = vmatpush2.bf16.msra.mxu0 %v1724
    %2099 = vmatprep.subr.bf16.mxu0 %v1717
    %2100 = vmatpush2.bf16.msra.mxu0 %v1716
    %2101 = vmatprep.subr.bf16.mxu0 %v1709
    %2102 = vmatpush2.bf16.msra.mxu0 %v1708
    %2103 = vmatprep.mubr.bf16.mxu0 %v449
    %2104 = vmatmul.mubr.bf16.gmra.mxu0 %v448
    %v2105 = vpop.f32.mrf.mxu0
    %v2106 = vadd.f32 %v2063, %v2105
    %v2107 = vpop.f32.mrf.mxu0
    %v2108 = vadd.f32 %v2065, %v2107
    %v2109 = vpop.f32.mrf.mxu0
    %v2110 = vadd.f32 %v2067, %v2109
    %v2111 = vpop.f32.mrf.mxu0
    %v2112 = vadd.f32 %v2069, %v2111
    %2113 = vdwg.mxu0
    %2114 = vmatprep.subr.bf16.mxu0 %v1575
    %2115 = vmatpush1.bf16.msra.mxu0 %v1574
    %2116 = vmatprep.subr.bf16.mxu0 %v1567
    %2117 = vmatpush1.bf16.msra.mxu0 %v1566
    %2118 = vmatprep.subr.bf16.mxu0 %v1559
    %2119 = vmatpush1.bf16.msra.mxu0 %v1558
    %2120 = vmatprep.subr.bf16.mxu0 %v1551
    %2121 = vmatpush1.bf16.msra.mxu0 %v1550
    %2122 = vmatprep.subr.bf16.mxu0 %v1543
    %2123 = vmatpush1.bf16.msra.mxu0 %v1542
    %2124 = vmatprep.subr.bf16.mxu0 %v1535
    %2125 = vmatpush1.bf16.msra.mxu0 %v1534
    %2126 = vmatprep.subr.bf16.mxu0 %v1527
    %2127 = vmatpush1.bf16.msra.mxu0 %v1526
    %2128 = vmatprep.subr.bf16.mxu0 %v1519
    %2129 = vmatpush1.bf16.msra.mxu0 %v1518
    %2130 = vmatprep.subr.bf16.mxu0 %v1639
    %2131 = vmatpush2.bf16.msra.mxu0 %v1638
    %2132 = vmatprep.subr.bf16.mxu0 %v1631
    %2133 = vmatpush2.bf16.msra.mxu0 %v1630
    %2134 = vmatprep.subr.bf16.mxu0 %v1623
    %2135 = vmatpush2.bf16.msra.mxu0 %v1622
    %2136 = vmatprep.subr.bf16.mxu0 %v1615
    %2137 = vmatpush2.bf16.msra.mxu0 %v1614
    %2138 = vmatprep.subr.bf16.mxu0 %v1607
    %2139 = vmatpush2.bf16.msra.mxu0 %v1606
    %2140 = vmatprep.subr.bf16.mxu0 %v1599
    %2141 = vmatpush2.bf16.msra.mxu0 %v1598
    %2142 = vmatprep.subr.bf16.mxu0 %v1591
    %2143 = vmatpush2.bf16.msra.mxu0 %v1590
    %2144 = vmatprep.subr.bf16.mxu0 %v1583
    %2145 = vmatpush2.bf16.msra.mxu0 %v1582
    %2146 = vmatprep.mubr.bf16.mxu0 %v447
    %2147 = vmatmul.mubr.bf16.gmra.mxu0 %v446
    %v2148 = vpop.f32.mrf.mxu0
    %v2149 = vadd.f32 %v719, %v2148
    %v2150 = vpop.f32.mrf.mxu0
    %v2151 = vadd.f32 %v723, %v2150
    %v2152 = vpop.f32.mrf.mxu0
    %v2153 = vadd.f32 %v719, %v2152
    %v2154 = vpop.f32.mrf.mxu0
    %v2155 = vadd.f32 %v723, %v2154
    %2156 = vdwg.mxu0
    %2157 = vmatprep.subr.bf16.mxu0 %v1703
    %2158 = vmatpush1.bf16.msra.mxu0 %v1702
    %2159 = vmatprep.subr.bf16.mxu0 %v1695
    %2160 = vmatpush1.bf16.msra.mxu0 %v1694
    %2161 = vmatprep.subr.bf16.mxu0 %v1687
    %2162 = vmatpush1.bf16.msra.mxu0 %v1686
    %2163 = vmatprep.subr.bf16.mxu0 %v1679
    %2164 = vmatpush1.bf16.msra.mxu0 %v1678
    %2165 = vmatprep.subr.bf16.mxu0 %v1671
    %2166 = vmatpush1.bf16.msra.mxu0 %v1670
    %2167 = vmatprep.subr.bf16.mxu0 %v1663
    %2168 = vmatpush1.bf16.msra.mxu0 %v1662
    %2169 = vmatprep.subr.bf16.mxu0 %v1655
    %2170 = vmatpush1.bf16.msra.mxu0 %v1654
    %2171 = vmatprep.subr.bf16.mxu0 %v1647
    %2172 = vmatpush1.bf16.msra.mxu0 %v1646
    %2173 = vmatprep.subr.bf16.mxu0 %v1767
    %2174 = vmatpush2.bf16.msra.mxu0 %v1766
    %2175 = vmatprep.subr.bf16.mxu0 %v1759
    %2176 = vmatpush2.bf16.msra.mxu0 %v1758
    %2177 = vmatprep.subr.bf16.mxu0 %v1751
    %2178 = vmatpush2.bf16.msra.mxu0 %v1750
    %2179 = vmatprep.subr.bf16.mxu0 %v1743
    %2180 = vmatpush2.bf16.msra.mxu0 %v1742
    %2181 = vmatprep.subr.bf16.mxu0 %v1735
    %2182 = vmatpush2.bf16.msra.mxu0 %v1734
    %2183 = vmatprep.subr.bf16.mxu0 %v1727
    %2184 = vmatpush2.bf16.msra.mxu0 %v1726
    %2185 = vmatprep.subr.bf16.mxu0 %v1719
    %2186 = vmatpush2.bf16.msra.mxu0 %v1718
    %2187 = vmatprep.subr.bf16.mxu0 %v1711
    %2188 = vmatpush2.bf16.msra.mxu0 %v1710
    %2189 = vmatprep.mubr.bf16.mxu0 %v449
    %2190 = vmatmul.mubr.bf16.gmra.mxu0 %v448
    %v2191 = vpop.f32.mrf.mxu0
    %v2192 = vadd.f32 %v2149, %v2191
    %v2193 = vpop.f32.mrf.mxu0
    %v2194 = vadd.f32 %v2151, %v2193
    %v2195 = vpop.f32.mrf.mxu0
    %v2196 = vadd.f32 %v2153, %v2195
    %v2197 = vpop.f32.mrf.mxu0
    %v2198 = vadd.f32 %v2155, %v2197
    %2199 = vdwg.mxu0
    %2200 = vmatprep.subr.bf16.mxu0 %v1577
    %2201 = vmatpush1.bf16.msra.mxu0 %v1576
    %2202 = vmatprep.subr.bf16.mxu0 %v1569
    %2203 = vmatpush1.bf16.msra.mxu0 %v1568
    %2204 = vmatprep.subr.bf16.mxu0 %v1561
    %2205 = vmatpush1.bf16.msra.mxu0 %v1560
    %2206 = vmatprep.subr.bf16.mxu0 %v1553
    %2207 = vmatpush1.bf16.msra.mxu0 %v1552
    %2208 = vmatprep.subr.bf16.mxu0 %v1545
    %2209 = vmatpush1.bf16.msra.mxu0 %v1544
    %2210 = vmatprep.subr.bf16.mxu0 %v1537
    %2211 = vmatpush1.bf16.msra.mxu0 %v1536
    %2212 = vmatprep.subr.bf16.mxu0 %v1529
    %2213 = vmatpush1.bf16.msra.mxu0 %v1528
    %2214 = vmatprep.subr.bf16.mxu0 %v1521
    %2215 = vmatpush1.bf16.msra.mxu0 %v1520
    %2216 = vmatprep.subr.bf16.mxu0 %v1641
    %2217 = vmatpush2.bf16.msra.mxu0 %v1640
    %2218 = vmatprep.subr.bf16.mxu0 %v1633
    %2219 = vmatpush2.bf16.msra.mxu0 %v1632
    %2220 = vmatprep.subr.bf16.mxu0 %v1625
    %2221 = vmatpush2.bf16.msra.mxu0 %v1624
    %2222 = vmatprep.subr.bf16.mxu0 %v1617
    %2223 = vmatpush2.bf16.msra.mxu0 %v1616
    %2224 = vmatprep.subr.bf16.mxu0 %v1609
    %2225 = vmatpush2.bf16.msra.mxu0 %v1608
    %2226 = vmatprep.subr.bf16.mxu0 %v1601
    %2227 = vmatpush2.bf16.msra.mxu0 %v1600
    %2228 = vmatprep.subr.bf16.mxu0 %v1593
    %2229 = vmatpush2.bf16.msra.mxu0 %v1592
    %2230 = vmatprep.subr.bf16.mxu0 %v1585
    %2231 = vmatpush2.bf16.msra.mxu0 %v1584
    %2232 = vmatprep.mubr.bf16.mxu0 %v447
    %2233 = vmatmul.mubr.bf16.gmra.mxu0 %v446
    %v2234 = vpop.f32.mrf.mxu0
    %v2235 = vadd.f32 %v727, %v2234
    %v2236 = vpop.f32.mrf.mxu0
    %v2237 = vadd.f32 %v731, %v2236
    %v2238 = vpop.f32.mrf.mxu0
    %v2239 = vadd.f32 %v727, %v2238
    %v2240 = vpop.f32.mrf.mxu0
    %v2241 = vadd.f32 %v731, %v2240
    %2242 = vdwg.mxu0
    %2243 = vmatprep.subr.bf16.mxu0 %v1705
    %2244 = vmatpush1.bf16.msra.mxu0 %v1704
    %2245 = vmatprep.subr.bf16.mxu0 %v1697
    %2246 = vmatpush1.bf16.msra.mxu0 %v1696
    %2247 = vmatprep.subr.bf16.mxu0 %v1689
    %2248 = vmatpush1.bf16.msra.mxu0 %v1688
    %2249 = vmatprep.subr.bf16.mxu0 %v1681
    %2250 = vmatpush1.bf16.msra.mxu0 %v1680
    %2251 = vmatprep.subr.bf16.mxu0 %v1673
    %2252 = vmatpush1.bf16.msra.mxu0 %v1672
    %2253 = vmatprep.subr.bf16.mxu0 %v1665
    %2254 = vmatpush1.bf16.msra.mxu0 %v1664
    %2255 = vmatprep.subr.bf16.mxu0 %v1657
    %2256 = vmatpush1.bf16.msra.mxu0 %v1656
    %2257 = vmatprep.subr.bf16.mxu0 %v1649
    %2258 = vmatpush1.bf16.msra.mxu0 %v1648
    %2259 = vmatprep.subr.bf16.mxu0 %v1769
    %2260 = vmatpush2.bf16.msra.mxu0 %v1768
    %2261 = vmatprep.subr.bf16.mxu0 %v1761
    %2262 = vmatpush2.bf16.msra.mxu0 %v1760
    %2263 = vmatprep.subr.bf16.mxu0 %v1753
    %2264 = vmatpush2.bf16.msra.mxu0 %v1752
    %2265 = vmatprep.subr.bf16.mxu0 %v1745
    %2266 = vmatpush2.bf16.msra.mxu0 %v1744
    %2267 = vmatprep.subr.bf16.mxu0 %v1737
    %2268 = vmatpush2.bf16.msra.mxu0 %v1736
    %2269 = vmatprep.subr.bf16.mxu0 %v1729
    %2270 = vmatpush2.bf16.msra.mxu0 %v1728
    %2271 = vmatprep.subr.bf16.mxu0 %v1721
    %2272 = vmatpush2.bf16.msra.mxu0 %v1720
    %2273 = vmatprep.subr.bf16.mxu0 %v1713
    %2274 = vmatpush2.bf16.msra.mxu0 %v1712
    %2275 = vmatprep.mubr.bf16.mxu0 %v449
    %2276 = vmatmul.mubr.bf16.gmra.mxu0 %v448
    %v2277 = vpop.f32.mrf.mxu0
    %v2278 = vadd.f32 %v2235, %v2277
    %v2279 = vpop.f32.mrf.mxu0
    %v2280 = vadd.f32 %v2237, %v2279
    %v2281 = vpop.f32.mrf.mxu0
    %v2282 = vadd.f32 %v2239, %v2281
    %v2283 = vpop.f32.mrf.mxu0
    %v2284 = vadd.f32 %v2241, %v2283
    %2285 = vdwg.mxu0
    %2286 = vmatprep.subr.bf16.mxu0 %v1579
    %2287 = vmatpush1.bf16.msra.mxu0 %v1578
    %2288 = vmatprep.subr.bf16.mxu0 %v1571
    %2289 = vmatpush1.bf16.msra.mxu0 %v1570
    %2290 = vmatprep.subr.bf16.mxu0 %v1563
    %2291 = vmatpush1.bf16.msra.mxu0 %v1562
    %2292 = vmatprep.subr.bf16.mxu0 %v1555
    %2293 = vmatpush1.bf16.msra.mxu0 %v1554
    %2294 = vmatprep.subr.bf16.mxu0 %v1547
    %2295 = vmatpush1.bf16.msra.mxu0 %v1546
    %2296 = vmatprep.subr.bf16.mxu0 %v1539
    %2297 = vmatpush1.bf16.msra.mxu0 %v1538
    %2298 = vmatprep.subr.bf16.mxu0 %v1531
    %2299 = vmatpush1.bf16.msra.mxu0 %v1530
    %2300 = vmatprep.subr.bf16.mxu0 %v1523
    %2301 = vmatpush1.bf16.msra.mxu0 %v1522
    %2302 = vmatprep.subr.bf16.mxu0 %v1643
    %2303 = vmatpush2.bf16.msra.mxu0 %v1642
    %2304 = vmatprep.subr.bf16.mxu0 %v1635
    %2305 = vmatpush2.bf16.msra.mxu0 %v1634
    %2306 = vmatprep.subr.bf16.mxu0 %v1627
    %2307 = vmatpush2.bf16.msra.mxu0 %v1626
    %2308 = vmatprep.subr.bf16.mxu0 %v1619
    %2309 = vmatpush2.bf16.msra.mxu0 %v1618
    %2310 = vmatprep.subr.bf16.mxu0 %v1611
    %2311 = vmatpush2.bf16.msra.mxu0 %v1610
    %2312 = vmatprep.subr.bf16.mxu0 %v1603
    %2313 = vmatpush2.bf16.msra.mxu0 %v1602
    %2314 = vmatprep.subr.bf16.mxu0 %v1595
    %2315 = vmatpush2.bf16.msra.mxu0 %v1594
    %2316 = vmatprep.subr.bf16.mxu0 %v1587
    %2317 = vmatpush2.bf16.msra.mxu0 %v1586
    %2318 = vmatprep.mubr.bf16.mxu0 %v447
    %2319 = vmatmul.mubr.bf16.gmra.mxu0 %v446
    %v2320 = vpop.f32.mrf.mxu0
    %v2321 = vadd.f32 %v735, %v2320
    %v2322 = vpop.f32.mrf.mxu0
    %v2323 = vadd.f32 %v739, %v2322
    %v2324 = vpop.f32.mrf.mxu0
    %v2325 = vadd.f32 %v735, %v2324
    %v2326 = vpop.f32.mrf.mxu0
    %v2327 = vadd.f32 %v739, %v2326
    %2328 = vdwg.mxu0
    %2329 = vmatprep.subr.bf16.mxu0 %v1707
    %2330 = vmatpush1.bf16.msra.mxu0 %v1706
    %2331 = vmatprep.subr.bf16.mxu0 %v1699
    %2332 = vmatpush1.bf16.msra.mxu0 %v1698
    %2333 = vmatprep.subr.bf16.mxu0 %v1691
    %2334 = vmatpush1.bf16.msra.mxu0 %v1690
    %2335 = vmatprep.subr.bf16.mxu0 %v1683
    %2336 = vmatpush1.bf16.msra.mxu0 %v1682
    %2337 = vmatprep.subr.bf16.mxu0 %v1675
    %2338 = vmatpush1.bf16.msra.mxu0 %v1674
    %2339 = vmatprep.subr.bf16.mxu0 %v1667
    %2340 = vmatpush1.bf16.msra.mxu0 %v1666
    %2341 = vmatprep.subr.bf16.mxu0 %v1659
    %2342 = vmatpush1.bf16.msra.mxu0 %v1658
    %2343 = vmatprep.subr.bf16.mxu0 %v1651
    %2344 = vmatpush1.bf16.msra.mxu0 %v1650
    %2345 = vmatprep.subr.bf16.mxu0 %v1771
    %2346 = vmatpush2.bf16.msra.mxu0 %v1770
    %2347 = vmatprep.subr.bf16.mxu0 %v1763
    %2348 = vmatpush2.bf16.msra.mxu0 %v1762
    %2349 = vmatprep.subr.bf16.mxu0 %v1755
    %2350 = vmatpush2.bf16.msra.mxu0 %v1754
    %2351 = vmatprep.subr.bf16.mxu0 %v1747
    %2352 = vmatpush2.bf16.msra.mxu0 %v1746
    %2353 = vmatprep.subr.bf16.mxu0 %v1739
    %2354 = vmatpush2.bf16.msra.mxu0 %v1738
    %2355 = vmatprep.subr.bf16.mxu0 %v1731
    %2356 = vmatpush2.bf16.msra.mxu0 %v1730
    %2357 = vmatprep.subr.bf16.mxu0 %v1723
    %2358 = vmatpush2.bf16.msra.mxu0 %v1722
    %2359 = vmatprep.subr.bf16.mxu0 %v1715
    %2360 = vmatpush2.bf16.msra.mxu0 %v1714
    %2361 = vmatprep.mubr.bf16.mxu0 %v449
    %2362 = vmatmul.mubr.bf16.gmra.mxu0 %v448
    %v2363 = vpop.f32.mrf.mxu0
    %v2364 = vadd.f32 %v2321, %v2363
    %v2365 = vpop.f32.mrf.mxu0
    %v2366 = vadd.f32 %v2323, %v2365
    %v2367 = vpop.f32.mrf.mxu0
    %v2368 = vadd.f32 %v2325, %v2367
    %v2369 = vpop.f32.mrf.mxu0
    %v2370 = vadd.f32 %v2327, %v2369
    %2371 = vdwg.mxu0
    %v2372 = vmax.f32 %v2106, 0.0
    %v2373 = vmax.f32 %v2108, 0.0
    %v2374 = vmax.f32 %v2192, 0.0
    %v2375 = vmax.f32 %v2194, 0.0
    %v2376 = vmax.f32 %v2278, 0.0
    %v2377 = vmax.f32 %v2280, 0.0
    %v2378 = vmax.f32 %v2364, 0.0
    %v2379 = vmax.f32 %v2366, 0.0
    %v2380 = vmax.f32 %v2110, 0.0
    %v2381 = vmax.f32 %v2112, 0.0
    %v2382 = vmax.f32 %v2196, 0.0
    %v2383 = vmax.f32 %v2198, 0.0
    %v2384 = vmax.f32 %v2282, 0.0
    %v2385 = vmax.f32 %v2284, 0.0
    %v2386 = vmax.f32 %v2368, 0.0
    %v2387 = vmax.f32 %v2370, 0.0
    %v2388 = vpack.c.bf16 %v2380, %v2372
    %v2389 = vpack.c.bf16 %v2381, %v2373
    %v2390 = vpack.c.bf16 %v2382, %v2374
    %v2391 = vpack.c.bf16 %v2383, %v2375
    %v2392 = vpack.c.bf16 %v2384, %v2376
    %v2393 = vpack.c.bf16 %v2385, %v2377
    %v2394 = vpack.c.bf16 %v2386, %v2378
    %v2395 = vpack.c.bf16 %v2387, %v2379
    %v2396 = vld [vmem:[#allocation7] sm:$0xf]
    %v2397 = vld [vmem:[#allocation7 + $0x4] sm:$0xf]
    %v2398 = vld [vmem:[#allocation7 + $0x8] sm:$0xf]
    %v2399 = vld [vmem:[#allocation7 + $0xc] sm:$0xf]
    %v2400 = vld [vmem:[#allocation7 + $0x10] sm:$0xf]
    %v2401 = vld [vmem:[#allocation7 + $0x14] sm:$0xf]
    %v2402 = vld [vmem:[#allocation7 + $0x18] sm:$0xf]
    %v2403 = vld [vmem:[#allocation7 + $0x1c] sm:$0xf]
    %v2404 = vld [vmem:[#allocation7 + $0x20] sm:$0xf]
    %v2405 = vld [vmem:[#allocation7 + $0x24] sm:$0xf]
    %v2406 = vld [vmem:[#allocation7 + $0x28] sm:$0xf]
    %v2407 = vld [vmem:[#allocation7 + $0x2c] sm:$0xf]
    %v2408 = vld [vmem:[#allocation7 + $0x30] sm:$0xf]
    %v2409 = vld [vmem:[#allocation7 + $0x34] sm:$0xf]
    %v2410 = vld [vmem:[#allocation7 + $0x38] sm:$0xf]
    %v2411 = vld [vmem:[#allocation7 + $0x3c] sm:$0xf]
    %v2412 = vld [vmem:[#allocation7 + $0x40] sm:$0xf]
    %v2413 = vld [vmem:[#allocation7 + $0x44] sm:$0xf]
    %v2414 = vld [vmem:[#allocation7 + $0x48] sm:$0xf]
    %v2415 = vld [vmem:[#allocation7 + $0x4c] sm:$0xf]
    %v2416 = vld [vmem:[#allocation7 + $0x50] sm:$0xf]
    %v2417 = vld [vmem:[#allocation7 + $0x54] sm:$0xf]
    %v2418 = vld [vmem:[#allocation7 + $0x58] sm:$0xf]
    %v2419 = vld [vmem:[#allocation7 + $0x5c] sm:$0xf]
    %v2420 = vld [vmem:[#allocation7 + $0x60] sm:$0xf]
    %v2421 = vld [vmem:[#allocation7 + $0x64] sm:$0xf]
    %v2422 = vld [vmem:[#allocation7 + $0x68] sm:$0xf]
    %v2423 = vld [vmem:[#allocation7 + $0x6c] sm:$0xf]
    %v2424 = vld [vmem:[#allocation7 + $0x70] sm:$0xf]
    %v2425 = vld [vmem:[#allocation7 + $0x74] sm:$0xf]
    %v2426 = vld [vmem:[#allocation7 + $0x78] sm:$0xf]
    %v2427 = vld [vmem:[#allocation7 + $0x7c] sm:$0xf]
    %v2428 = vld [vmem:[#allocation7 + $0x80] sm:$0xf]
    %v2429 = vld [vmem:[#allocation7 + $0x84] sm:$0xf]
    %v2430 = vld [vmem:[#allocation7 + $0x88] sm:$0xf]
    %v2431 = vld [vmem:[#allocation7 + $0x8c] sm:$0xf]
    %v2432 = vld [vmem:[#allocation7 + $0x90] sm:$0xf]
    %v2433 = vld [vmem:[#allocation7 + $0x94] sm:$0xf]
    %v2434 = vld [vmem:[#allocation7 + $0x98] sm:$0xf]
    %v2435 = vld [vmem:[#allocation7 + $0x9c] sm:$0xf]
    %v2436 = vld [vmem:[#allocation7 + $0xa0] sm:$0xf]
    %v2437 = vld [vmem:[#allocation7 + $0xa4] sm:$0xf]
    %v2438 = vld [vmem:[#allocation7 + $0xa8] sm:$0xf]
    %v2439 = vld [vmem:[#allocation7 + $0xac] sm:$0xf]
    %v2440 = vld [vmem:[#allocation7 + $0xb0] sm:$0xf]
    %v2441 = vld [vmem:[#allocation7 + $0xb4] sm:$0xf]
    %v2442 = vld [vmem:[#allocation7 + $0xb8] sm:$0xf]
    %v2443 = vld [vmem:[#allocation7 + $0xbc] sm:$0xf]
    %v2444 = vld [vmem:[#allocation7 + $0xc0] sm:$0xf]
    %v2445 = vld [vmem:[#allocation7 + $0xc4] sm:$0xf]
    %v2446 = vld [vmem:[#allocation7 + $0xc8] sm:$0xf]
    %v2447 = vld [vmem:[#allocation7 + $0xcc] sm:$0xf]
    %v2448 = vld [vmem:[#allocation7 + $0xd0] sm:$0xf]
    %v2449 = vld [vmem:[#allocation7 + $0xd4] sm:$0xf]
    %v2450 = vld [vmem:[#allocation7 + $0xd8] sm:$0xf]
    %v2451 = vld [vmem:[#allocation7 + $0xdc] sm:$0xf]
    %v2452 = vld [vmem:[#allocation7 + $0xe0] sm:$0xf]
    %v2453 = vld [vmem:[#allocation7 + $0xe4] sm:$0xf]
    %v2454 = vld [vmem:[#allocation7 + $0xe8] sm:$0xf]
    %v2455 = vld [vmem:[#allocation7 + $0xec] sm:$0xf]
    %v2456 = vld [vmem:[#allocation7 + $0xf0] sm:$0xf]
    %v2457 = vld [vmem:[#allocation7 + $0xf4] sm:$0xf]
    %v2458 = vld [vmem:[#allocation7 + $0xf8] sm:$0xf]
    %v2459 = vld [vmem:[#allocation7 + $0xfc] sm:$0xf]
    %v2460 = vld [vmem:[#allocation7 + $0x100] sm:$0xf]
    %v2461 = vld [vmem:[#allocation7 + $0x104] sm:$0xf]
    %v2462 = vld [vmem:[#allocation7 + $0x108] sm:$0xf]
    %v2463 = vld [vmem:[#allocation7 + $0x10c] sm:$0xf]
    %v2464 = vld [vmem:[#allocation7 + $0x110] sm:$0xf]
    %v2465 = vld [vmem:[#allocation7 + $0x114] sm:$0xf]
    %v2466 = vld [vmem:[#allocation7 + $0x118] sm:$0xf]
    %v2467 = vld [vmem:[#allocation7 + $0x11c] sm:$0xf]
    %v2468 = vld [vmem:[#allocation7 + $0x120] sm:$0xf]
    %v2469 = vld [vmem:[#allocation7 + $0x124] sm:$0xf]
    %v2470 = vld [vmem:[#allocation7 + $0x128] sm:$0xf]
    %v2471 = vld [vmem:[#allocation7 + $0x12c] sm:$0xf]
    %v2472 = vld [vmem:[#allocation7 + $0x130] sm:$0xf]
    %v2473 = vld [vmem:[#allocation7 + $0x134] sm:$0xf]
    %v2474 = vld [vmem:[#allocation7 + $0x138] sm:$0xf]
    %v2475 = vld [vmem:[#allocation7 + $0x13c] sm:$0xf]
    %v2476 = vld [vmem:[#allocation7 + $0x140] sm:$0xf]
    %v2477 = vld [vmem:[#allocation7 + $0x144] sm:$0xf]
    %v2478 = vld [vmem:[#allocation7 + $0x148] sm:$0xf]
    %v2479 = vld [vmem:[#allocation7 + $0x14c] sm:$0xf]
    %v2480 = vld [vmem:[#allocation7 + $0x150] sm:$0xf]
    %v2481 = vld [vmem:[#allocation7 + $0x154] sm:$0xf]
    %v2482 = vld [vmem:[#allocation7 + $0x158] sm:$0xf]
    %v2483 = vld [vmem:[#allocation7 + $0x15c] sm:$0xf]
    %v2484 = vld [vmem:[#allocation7 + $0x160] sm:$0xf]
    %v2485 = vld [vmem:[#allocation7 + $0x164] sm:$0xf]
    %v2486 = vld [vmem:[#allocation7 + $0x168] sm:$0xf]
    %v2487 = vld [vmem:[#allocation7 + $0x16c] sm:$0xf]
    %v2488 = vld [vmem:[#allocation7 + $0x170] sm:$0xf]
    %v2489 = vld [vmem:[#allocation7 + $0x174] sm:$0xf]
    %v2490 = vld [vmem:[#allocation7 + $0x178] sm:$0xf]
    %v2491 = vld [vmem:[#allocation7 + $0x17c] sm:$0xf]
    %v2492 = vld [vmem:[#allocation7 + $0x180] sm:$0xf]
    %v2493 = vld [vmem:[#allocation7 + $0x184] sm:$0xf]
    %v2494 = vld [vmem:[#allocation7 + $0x188] sm:$0xf]
    %v2495 = vld [vmem:[#allocation7 + $0x18c] sm:$0xf]
    %v2496 = vld [vmem:[#allocation7 + $0x190] sm:$0xf]
    %v2497 = vld [vmem:[#allocation7 + $0x194] sm:$0xf]
    %v2498 = vld [vmem:[#allocation7 + $0x198] sm:$0xf]
    %v2499 = vld [vmem:[#allocation7 + $0x19c] sm:$0xf]
    %v2500 = vld [vmem:[#allocation7 + $0x1a0] sm:$0xf]
    %v2501 = vld [vmem:[#allocation7 + $0x1a4] sm:$0xf]
    %v2502 = vld [vmem:[#allocation7 + $0x1a8] sm:$0xf]
    %v2503 = vld [vmem:[#allocation7 + $0x1ac] sm:$0xf]
    %v2504 = vld [vmem:[#allocation7 + $0x1b0] sm:$0xf]
    %v2505 = vld [vmem:[#allocation7 + $0x1b4] sm:$0xf]
    %v2506 = vld [vmem:[#allocation7 + $0x1b8] sm:$0xf]
    %v2507 = vld [vmem:[#allocation7 + $0x1bc] sm:$0xf]
    %v2508 = vld [vmem:[#allocation7 + $0x1c0] sm:$0xf]
    %v2509 = vld [vmem:[#allocation7 + $0x1c4] sm:$0xf]
    %v2510 = vld [vmem:[#allocation7 + $0x1c8] sm:$0xf]
    %v2511 = vld [vmem:[#allocation7 + $0x1cc] sm:$0xf]
    %v2512 = vld [vmem:[#allocation7 + $0x1d0] sm:$0xf]
    %v2513 = vld [vmem:[#allocation7 + $0x1d4] sm:$0xf]
    %v2514 = vld [vmem:[#allocation7 + $0x1d8] sm:$0xf]
    %v2515 = vld [vmem:[#allocation7 + $0x1dc] sm:$0xf]
    %v2516 = vld [vmem:[#allocation7 + $0x1e0] sm:$0xf]
    %v2517 = vld [vmem:[#allocation7 + $0x1e4] sm:$0xf]
    %v2518 = vld [vmem:[#allocation7 + $0x1e8] sm:$0xf]
    %v2519 = vld [vmem:[#allocation7 + $0x1ec] sm:$0xf]
    %v2520 = vld [vmem:[#allocation7 + $0x1f0] sm:$0xf]
    %v2521 = vld [vmem:[#allocation7 + $0x1f4] sm:$0xf]
    %v2522 = vld [vmem:[#allocation7 + $0x1f8] sm:$0xf]
    %v2523 = vld [vmem:[#allocation7 + $0x1fc] sm:$0xf]
    %v2524 = vld [vmem:[%s8] sm:$0x1]
    %v2526 = vlaneseq
    %v2527 = vshrl.u32 %v2526, 7
    %v2528 = vsub.s32 0, %v2527
    %v2529 = vrot.slane %v2524, %v2528
    %v2659 = vunpack.c.l.b16 %v2396
    %v2660 = vunpack.c.l.b16 %v2397
    %v2661 = vunpack.c.l.b16 %v2398
    %v2662 = vunpack.c.l.b16 %v2399
    %v2663 = vunpack.c.l.b16 %v2400
    %v2664 = vunpack.c.l.b16 %v2401
    %v2665 = vunpack.c.l.b16 %v2402
    %v2666 = vunpack.c.l.b16 %v2403
    %v2667 = vunpack.c.l.b16 %v2404
    %v2668 = vunpack.c.l.b16 %v2405
    %v2669 = vunpack.c.l.b16 %v2406
    %v2670 = vunpack.c.l.b16 %v2407
    %v2671 = vunpack.c.l.b16 %v2408
    %v2672 = vunpack.c.l.b16 %v2409
    %v2673 = vunpack.c.l.b16 %v2410
    %v2674 = vunpack.c.l.b16 %v2411
    %v2675 = vunpack.c.l.b16 %v2412
    %v2676 = vunpack.c.l.b16 %v2413
    %v2677 = vunpack.c.l.b16 %v2414
    %v2678 = vunpack.c.l.b16 %v2415
    %v2679 = vunpack.c.l.b16 %v2416
    %v2680 = vunpack.c.l.b16 %v2417
    %v2681 = vunpack.c.l.b16 %v2418
    %v2682 = vunpack.c.l.b16 %v2419
    %v2683 = vunpack.c.l.b16 %v2420
    %v2684 = vunpack.c.l.b16 %v2421
    %v2685 = vunpack.c.l.b16 %v2422
    %v2686 = vunpack.c.l.b16 %v2423
    %v2687 = vunpack.c.l.b16 %v2424
    %v2688 = vunpack.c.l.b16 %v2425
    %v2689 = vunpack.c.l.b16 %v2426
    %v2690 = vunpack.c.l.b16 %v2427
    %v2691 = vunpack.c.l.b16 %v2428
    %v2692 = vunpack.c.l.b16 %v2429
    %v2693 = vunpack.c.l.b16 %v2430
    %v2694 = vunpack.c.l.b16 %v2431
    %v2695 = vunpack.c.l.b16 %v2432
    %v2696 = vunpack.c.l.b16 %v2433
    %v2697 = vunpack.c.l.b16 %v2434
    %v2698 = vunpack.c.l.b16 %v2435
    %v2699 = vunpack.c.l.b16 %v2436
    %v2700 = vunpack.c.l.b16 %v2437
    %v2701 = vunpack.c.l.b16 %v2438
    %v2702 = vunpack.c.l.b16 %v2439
    %v2703 = vunpack.c.l.b16 %v2440
    %v2704 = vunpack.c.l.b16 %v2441
    %v2705 = vunpack.c.l.b16 %v2442
    %v2706 = vunpack.c.l.b16 %v2443
    %v2707 = vunpack.c.l.b16 %v2444
    %v2708 = vunpack.c.l.b16 %v2445
    %v2709 = vunpack.c.l.b16 %v2446
    %v2710 = vunpack.c.l.b16 %v2447
    %v2711 = vunpack.c.l.b16 %v2448
    %v2712 = vunpack.c.l.b16 %v2449
    %v2713 = vunpack.c.l.b16 %v2450
    %v2714 = vunpack.c.l.b16 %v2451
    %v2715 = vunpack.c.l.b16 %v2452
    %v2716 = vunpack.c.l.b16 %v2453
    %v2717 = vunpack.c.l.b16 %v2454
    %v2718 = vunpack.c.l.b16 %v2455
    %v2719 = vunpack.c.l.b16 %v2456
    %v2720 = vunpack.c.l.b16 %v2457
    %v2721 = vunpack.c.l.b16 %v2458
    %v2722 = vunpack.c.l.b16 %v2459
    %v2723 = vunpack.c.l.b16 %v2460
    %v2724 = vunpack.c.l.b16 %v2461
    %v2725 = vunpack.c.l.b16 %v2462
    %v2726 = vunpack.c.l.b16 %v2463
    %v2727 = vunpack.c.l.b16 %v2464
    %v2728 = vunpack.c.l.b16 %v2465
    %v2729 = vunpack.c.l.b16 %v2466
    %v2730 = vunpack.c.l.b16 %v2467
    %v2731 = vunpack.c.l.b16 %v2468
    %v2732 = vunpack.c.l.b16 %v2469
    %v2733 = vunpack.c.l.b16 %v2470
    %v2734 = vunpack.c.l.b16 %v2471
    %v2735 = vunpack.c.l.b16 %v2472
    %v2736 = vunpack.c.l.b16 %v2473
    %v2737 = vunpack.c.l.b16 %v2474
    %v2738 = vunpack.c.l.b16 %v2475
    %v2739 = vunpack.c.l.b16 %v2476
    %v2740 = vunpack.c.l.b16 %v2477
    %v2741 = vunpack.c.l.b16 %v2478
    %v2742 = vunpack.c.l.b16 %v2479
    %v2743 = vunpack.c.l.b16 %v2480
    %v2744 = vunpack.c.l.b16 %v2481
    %v2745 = vunpack.c.l.b16 %v2482
    %v2746 = vunpack.c.l.b16 %v2483
    %v2747 = vunpack.c.l.b16 %v2484
    %v2748 = vunpack.c.l.b16 %v2485
    %v2749 = vunpack.c.l.b16 %v2486
    %v2750 = vunpack.c.l.b16 %v2487
    %v2751 = vunpack.c.l.b16 %v2488
    %v2752 = vunpack.c.l.b16 %v2489
    %v2753 = vunpack.c.l.b16 %v2490
    %v2754 = vunpack.c.l.b16 %v2491
    %v2755 = vunpack.c.l.b16 %v2492
    %v2756 = vunpack.c.l.b16 %v2493
    %v2757 = vunpack.c.l.b16 %v2494
    %v2758 = vunpack.c.l.b16 %v2495
    %v2759 = vunpack.c.l.b16 %v2496
    %v2760 = vunpack.c.l.b16 %v2497
    %v2761 = vunpack.c.l.b16 %v2498
    %v2762 = vunpack.c.l.b16 %v2499
    %v2763 = vunpack.c.l.b16 %v2500
    %v2764 = vunpack.c.l.b16 %v2501
    %v2765 = vunpack.c.l.b16 %v2502
    %v2766 = vunpack.c.l.b16 %v2503
    %v2767 = vunpack.c.l.b16 %v2504
    %v2768 = vunpack.c.l.b16 %v2505
    %v2769 = vunpack.c.l.b16 %v2506
    %v2770 = vunpack.c.l.b16 %v2507
    %v2771 = vunpack.c.l.b16 %v2508
    %v2772 = vunpack.c.l.b16 %v2509
    %v2773 = vunpack.c.l.b16 %v2510
    %v2774 = vunpack.c.l.b16 %v2511
    %v2775 = vunpack.c.l.b16 %v2512
    %v2776 = vunpack.c.l.b16 %v2513
    %v2777 = vunpack.c.l.b16 %v2514
    %v2778 = vunpack.c.l.b16 %v2515
    %v2779 = vunpack.c.l.b16 %v2516
    %v2780 = vunpack.c.l.b16 %v2517
    %v2781 = vunpack.c.l.b16 %v2518
    %v2782 = vunpack.c.l.b16 %v2519
    %v2783 = vunpack.c.l.b16 %v2520
    %v2784 = vunpack.c.l.b16 %v2521
    %v2785 = vunpack.c.l.b16 %v2522
    %v2786 = vunpack.c.l.b16 %v2523
    %v2787 = vpack.c.b16 %v2660, %v2659
    %v2788 = vpack.c.b16 %v2662, %v2661
    %v2789 = vpack.c.b16 %v2664, %v2663
    %v2790 = vpack.c.b16 %v2666, %v2665
    %v2791 = vpack.c.b16 %v2668, %v2667
    %v2792 = vpack.c.b16 %v2670, %v2669
    %v2793 = vpack.c.b16 %v2672, %v2671
    %v2794 = vpack.c.b16 %v2674, %v2673
    %v2795 = vpack.c.b16 %v2676, %v2675
    %v2796 = vpack.c.b16 %v2678, %v2677
    %v2797 = vpack.c.b16 %v2680, %v2679
    %v2798 = vpack.c.b16 %v2682, %v2681
    %v2799 = vpack.c.b16 %v2684, %v2683
    %v2800 = vpack.c.b16 %v2686, %v2685
    %v2801 = vpack.c.b16 %v2688, %v2687
    %v2802 = vpack.c.b16 %v2690, %v2689
    %v2803 = vpack.c.b16 %v2692, %v2691
    %v2804 = vpack.c.b16 %v2694, %v2693
    %v2805 = vpack.c.b16 %v2696, %v2695
    %v2806 = vpack.c.b16 %v2698, %v2697
    %v2807 = vpack.c.b16 %v2700, %v2699
    %v2808 = vpack.c.b16 %v2702, %v2701
    %v2809 = vpack.c.b16 %v2704, %v2703
    %v2810 = vpack.c.b16 %v2706, %v2705
    %v2811 = vpack.c.b16 %v2708, %v2707
    %v2812 = vpack.c.b16 %v2710, %v2709
    %v2813 = vpack.c.b16 %v2712, %v2711
    %v2814 = vpack.c.b16 %v2714, %v2713
    %v2815 = vpack.c.b16 %v2716, %v2715
    %v2816 = vpack.c.b16 %v2718, %v2717
    %v2817 = vpack.c.b16 %v2720, %v2719
    %v2818 = vpack.c.b16 %v2722, %v2721
    %v2819 = vpack.c.b16 %v2724, %v2723
    %v2820 = vpack.c.b16 %v2726, %v2725
    %v2821 = vpack.c.b16 %v2728, %v2727
    %v2822 = vpack.c.b16 %v2730, %v2729
    %v2823 = vpack.c.b16 %v2732, %v2731
    %v2824 = vpack.c.b16 %v2734, %v2733
    %v2825 = vpack.c.b16 %v2736, %v2735
    %v2826 = vpack.c.b16 %v2738, %v2737
    %v2827 = vpack.c.b16 %v2740, %v2739
    %v2828 = vpack.c.b16 %v2742, %v2741
    %v2829 = vpack.c.b16 %v2744, %v2743
    %v2830 = vpack.c.b16 %v2746, %v2745
    %v2831 = vpack.c.b16 %v2748, %v2747
    %v2832 = vpack.c.b16 %v2750, %v2749
    %v2833 = vpack.c.b16 %v2752, %v2751
    %v2834 = vpack.c.b16 %v2754, %v2753
    %v2835 = vpack.c.b16 %v2756, %v2755
    %v2836 = vpack.c.b16 %v2758, %v2757
    %v2837 = vpack.c.b16 %v2760, %v2759
    %v2838 = vpack.c.b16 %v2762, %v2761
    %v2839 = vpack.c.b16 %v2764, %v2763
    %v2840 = vpack.c.b16 %v2766, %v2765
    %v2841 = vpack.c.b16 %v2768, %v2767
    %v2842 = vpack.c.b16 %v2770, %v2769
    %v2843 = vpack.c.b16 %v2772, %v2771
    %v2844 = vpack.c.b16 %v2774, %v2773
    %v2845 = vpack.c.b16 %v2776, %v2775
    %v2846 = vpack.c.b16 %v2778, %v2777
    %v2847 = vpack.c.b16 %v2780, %v2779
    %v2848 = vpack.c.b16 %v2782, %v2781
    %v2849 = vpack.c.b16 %v2784, %v2783
    %v2850 = vpack.c.b16 %v2786, %v2785
    %2915 = vmatprep.subr.bf16.mxu0 0
    %2916 = vmatpush1.bf16.msra.mxu0 %v2794
    %2917 = vmatprep.subr.bf16.mxu0 0
    %2918 = vmatpush1.bf16.msra.mxu0 %v2793
    %2919 = vmatprep.subr.bf16.mxu0 0
    %2920 = vmatpush1.bf16.msra.mxu0 %v2792
    %2921 = vmatprep.subr.bf16.mxu0 0
    %2922 = vmatpush1.bf16.msra.mxu0 %v2791
    %2923 = vmatprep.subr.bf16.mxu0 0
    %2924 = vmatpush1.bf16.msra.mxu0 %v2790
    %2925 = vmatprep.subr.bf16.mxu0 0
    %2926 = vmatpush1.bf16.msra.mxu0 %v2789
    %2927 = vmatprep.subr.bf16.mxu0 0
    %2928 = vmatpush1.bf16.msra.mxu0 %v2788
    %2929 = vmatprep.subr.bf16.mxu0 0
    %2930 = vmatpush1.bf16.msra.mxu0 %v2787
    %2931 = vmatprep.subr.bf16.mxu0 0
    %2932 = vmatpush2.bf16.msra.mxu0 %v2802
    %2933 = vmatprep.subr.bf16.mxu0 0
    %2934 = vmatpush2.bf16.msra.mxu0 %v2801
    %2935 = vmatprep.subr.bf16.mxu0 0
    %2936 = vmatpush2.bf16.msra.mxu0 %v2800
    %2937 = vmatprep.subr.bf16.mxu0 0
    %2938 = vmatpush2.bf16.msra.mxu0 %v2799
    %2939 = vmatprep.subr.bf16.mxu0 0
    %2940 = vmatpush2.bf16.msra.mxu0 %v2798
    %2941 = vmatprep.subr.bf16.mxu0 0
    %2942 = vmatpush2.bf16.msra.mxu0 %v2797
    %2943 = vmatprep.subr.bf16.mxu0 0
    %2944 = vmatpush2.bf16.msra.mxu0 %v2796
    %2945 = vmatprep.subr.bf16.mxu0 0
    %2946 = vmatpush2.bf16.msra.mxu0 %v2795
    %2947 = vmatprep.mubr.bf16.mxu0 %v2389
    %2948 = vmatmul.mubr.bf16.gmra.mxu0 %v2388
    %v2949 = vpop.f32.mrf.mxu0
    %v2950 = vadd.f32 %v2529, %v2949
    %v2951 = vpop.f32.mrf.mxu0
    %v2952 = vpop.f32.mrf.mxu0
    %v2953 = vadd.f32 %v2529, %v2952
    %v2954 = vpop.f32.mrf.mxu0
    %2955 = vdwg.mxu0
    %2956 = vmatprep.subr.bf16.mxu0 0
    %2957 = vmatpush1.bf16.msra.mxu0 %v2810
    %2958 = vmatprep.subr.bf16.mxu0 0
    %2959 = vmatpush1.bf16.msra.mxu0 %v2809
    %2960 = vmatprep.subr.bf16.mxu0 0
    %2961 = vmatpush1.bf16.msra.mxu0 %v2808
    %2962 = vmatprep.subr.bf16.mxu0 0
    %2963 = vmatpush1.bf16.msra.mxu0 %v2807
    %2964 = vmatprep.subr.bf16.mxu0 0
    %2965 = vmatpush1.bf16.msra.mxu0 %v2806
    %2966 = vmatprep.subr.bf16.mxu0 0
    %2967 = vmatpush1.bf16.msra.mxu0 %v2805
    %2968 = vmatprep.subr.bf16.mxu0 0
    %2969 = vmatpush1.bf16.msra.mxu0 %v2804
    %2970 = vmatprep.subr.bf16.mxu0 0
    %2971 = vmatpush1.bf16.msra.mxu0 %v2803
    %2972 = vmatprep.subr.bf16.mxu0 0
    %2973 = vmatpush2.bf16.msra.mxu0 %v2818
    %2974 = vmatprep.subr.bf16.mxu0 0
    %2975 = vmatpush2.bf16.msra.mxu0 %v2817
    %2976 = vmatprep.subr.bf16.mxu0 0
    %2977 = vmatpush2.bf16.msra.mxu0 %v2816
    %2978 = vmatprep.subr.bf16.mxu0 0
    %2979 = vmatpush2.bf16.msra.mxu0 %v2815
    %2980 = vmatprep.subr.bf16.mxu0 0
    %2981 = vmatpush2.bf16.msra.mxu0 %v2814
    %2982 = vmatprep.subr.bf16.mxu0 0
    %2983 = vmatpush2.bf16.msra.mxu0 %v2813
    %2984 = vmatprep.subr.bf16.mxu0 0
    %2985 = vmatpush2.bf16.msra.mxu0 %v2812
    %2986 = vmatprep.subr.bf16.mxu0 0
    %2987 = vmatpush2.bf16.msra.mxu0 %v2811
    %2988 = vmatprep.mubr.bf16.mxu0 %v2391
    %2989 = vmatmul.mubr.bf16.gmra.mxu0 %v2390
    %v2990 = vpop.f32.mrf.mxu0
    %v2991 = vadd.f32 %v2950, %v2990
    %v2992 = vpop.f32.mrf.mxu0
    %v2993 = vpop.f32.mrf.mxu0
    %v2994 = vadd.f32 %v2953, %v2993
    %v2995 = vpop.f32.mrf.mxu0
    %2996 = vdwg.mxu0
    %2997 = vmatprep.subr.bf16.mxu0 0
    %2998 = vmatpush1.bf16.msra.mxu0 %v2826
    %2999 = vmatprep.subr.bf16.mxu0 0
    %3000 = vmatpush1.bf16.msra.mxu0 %v2825
    %3001 = vmatprep.subr.bf16.mxu0 0
    %3002 = vmatpush1.bf16.msra.mxu0 %v2824
    %3003 = vmatprep.subr.bf16.mxu0 0
    %3004 = vmatpush1.bf16.msra.mxu0 %v2823
    %3005 = vmatprep.subr.bf16.mxu0 0
    %3006 = vmatpush1.bf16.msra.mxu0 %v2822
    %3007 = vmatprep.subr.bf16.mxu0 0
    %3008 = vmatpush1.bf16.msra.mxu0 %v2821
    %3009 = vmatprep.subr.bf16.mxu0 0
    %3010 = vmatpush1.bf16.msra.mxu0 %v2820
    %3011 = vmatprep.subr.bf16.mxu0 0
    %3012 = vmatpush1.bf16.msra.mxu0 %v2819
    %3013 = vmatprep.subr.bf16.mxu0 0
    %3014 = vmatpush2.bf16.msra.mxu0 %v2834
    %3015 = vmatprep.subr.bf16.mxu0 0
    %3016 = vmatpush2.bf16.msra.mxu0 %v2833
    %3017 = vmatprep.subr.bf16.mxu0 0
    %3018 = vmatpush2.bf16.msra.mxu0 %v2832
    %3019 = vmatprep.subr.bf16.mxu0 0
    %3020 = vmatpush2.bf16.msra.mxu0 %v2831
    %3021 = vmatprep.subr.bf16.mxu0 0
    %3022 = vmatpush2.bf16.msra.mxu0 %v2830
    %3023 = vmatprep.subr.bf16.mxu0 0
    %3024 = vmatpush2.bf16.msra.mxu0 %v2829
    %3025 = vmatprep.subr.bf16.mxu0 0
    %3026 = vmatpush2.bf16.msra.mxu0 %v2828
    %3027 = vmatprep.subr.bf16.mxu0 0
    %3028 = vmatpush2.bf16.msra.mxu0 %v2827
    %3029 = vmatprep.mubr.bf16.mxu0 %v2393
    %3030 = vmatmul.mubr.bf16.gmra.mxu0 %v2392
    %v3031 = vpop.f32.mrf.mxu0
    %v3032 = vadd.f32 %v2991, %v3031
    %v3033 = vpop.f32.mrf.mxu0
    %v3034 = vpop.f32.mrf.mxu0
    %v3035 = vadd.f32 %v2994, %v3034
    %v3036 = vpop.f32.mrf.mxu0
    %3037 = vdwg.mxu0
    %3038 = vmatprep.subr.bf16.mxu0 0
    %3039 = vmatpush1.bf16.msra.mxu0 %v2842
    %3040 = vmatprep.subr.bf16.mxu0 0
    %3041 = vmatpush1.bf16.msra.mxu0 %v2841
    %3042 = vmatprep.subr.bf16.mxu0 0
    %3043 = vmatpush1.bf16.msra.mxu0 %v2840
    %3044 = vmatprep.subr.bf16.mxu0 0
    %3045 = vmatpush1.bf16.msra.mxu0 %v2839
    %3046 = vmatprep.subr.bf16.mxu0 0
    %3047 = vmatpush1.bf16.msra.mxu0 %v2838
    %3048 = vmatprep.subr.bf16.mxu0 0
    %3049 = vmatpush1.bf16.msra.mxu0 %v2837
    %3050 = vmatprep.subr.bf16.mxu0 0
    %3051 = vmatpush1.bf16.msra.mxu0 %v2836
    %3052 = vmatprep.subr.bf16.mxu0 0
    %3053 = vmatpush1.bf16.msra.mxu0 %v2835
    %3054 = vmatprep.subr.bf16.mxu0 0
    %3055 = vmatpush2.bf16.msra.mxu0 %v2850
    %3056 = vmatprep.subr.bf16.mxu0 0
    %3057 = vmatpush2.bf16.msra.mxu0 %v2849
    %3058 = vmatprep.subr.bf16.mxu0 0
    %3059 = vmatpush2.bf16.msra.mxu0 %v2848
    %3060 = vmatprep.subr.bf16.mxu0 0
    %3061 = vmatpush2.bf16.msra.mxu0 %v2847
    %3062 = vmatprep.subr.bf16.mxu0 0
    %3063 = vmatpush2.bf16.msra.mxu0 %v2846
    %3064 = vmatprep.subr.bf16.mxu0 0
    %3065 = vmatpush2.bf16.msra.mxu0 %v2845
    %3066 = vmatprep.subr.bf16.mxu0 0
    %3067 = vmatpush2.bf16.msra.mxu0 %v2844
    %3068 = vmatprep.subr.bf16.mxu0 0
    %3069 = vmatpush2.bf16.msra.mxu0 %v2843
    %3070 = vmatprep.mubr.bf16.mxu0 %v2395
    %3071 = vmatmul.mubr.bf16.gmra.mxu0 %v2394
    %v3072 = vpop.f32.mrf.mxu0
    %v3073 = vadd.f32 %v3032, %v3072
    %v3074 = vpop.f32.mrf.mxu0
    %v3075 = vpop.f32.mrf.mxu0
    %v3076 = vadd.f32 %v3035, %v3075
    %v3077 = vpop.f32.mrf.mxu0
    %3078 = vdwg.mxu0
    %3079 = vst [vmem:[#allocation8] sm:$0xff] %v3073
    %3080 = vst [vmem:[#allocation8 + $0x8] sm:$0xff] %v3076
    // Predicated region
    $region50: #{tpu_custom_call.1} parent=1 // pred_check
      _
    $region51: #{tpu_custom_call.1} parent=1 // pred_check_branch
      %3082 = sbr.rel (0) target = $region53
    $region52: #{tpu_custom_call.1} parent=1 // pred_region
      %s3084 = ssub.s32 256, 256
      %3085 = vsyncadd [#allocation4], %s3084
      %s3086 = sshll.u32 [#allocation8], 4
      %s3087 = int_to_ptr.vmem [resolvable:$true] %s3086
      %3092 = dma.vmem_to_hbm [thread:$0]  %s3087, 256, %s9, [#allocation4], 128, 128, 8
    $region53: #{tpu_custom_call.1} parent=1 // pred_fallthru
      _
    // Predicated region
    $region54: #{tpu_custom_call.1} parent=1 // pred_check
      _
    $region55: #{tpu_custom_call.1} parent=1 // pred_check_branch
      %3094 = sbr.rel (0) target = $region57
    $region56: #{tpu_custom_call.1} parent=1 // pred_region
      %3095 = dma.done [#allocation4], 256
    $region57: #{tpu_custom_call.1} parent=1 // pred_fallthru
      _
    %3096 = vsyncpa [#allocation3], 1
    %3097 = vsyncpa [#allocation6], 1
    %3098 = vsyncpa [#allocation4], 1

// kernel: tpu_custom_call.1
$region0: #{tpu_custom_call.1}
  #allocation0 [shape = 'u32[]', space=smem, size = 0x4, offset = 0x4, fixed_abs, tag = 'smem constant byte address 0x4 - core index']
  #allocation1 [shape = 'u32[144,128]{1,0:T(1,128)}', space=vmem, size = 0x12000, scoped, tag = 'internal scratch']
  %s0 = inlined_call_operand.vmem [shape: f32[16,8], index: 0, kind: input, shape index: {}]
  %s1 = inlined_call_operand.vmem [shape: bf16[8,128], index: 1, kind: input, shape index: {}]
  %s2 = inlined_call_operand.vmem [shape: f32[1,128], index: 2, kind: input, shape index: {}]
  %s3 = inlined_call_operand.hbm [shape: bf16[128,512], index: 3, kind: input, shape index: {}]
  %s4 = inlined_call_operand.vmem [shape: f32[1,512], index: 4, kind: input, shape index: {}]
  %s5 = inlined_call_operand.hbm [shape: bf16[512,1024], index: 5, kind: input, shape index: {}]
  %s6 = inlined_call_operand.vmem [shape: f32[1,1024], index: 6, kind: input, shape index: {}]
  %s7 = inlined_call_operand.hbm [shape: bf16[1024,128], index: 7, kind: input, shape index: {}]
  %s8 = inlined_call_operand.vmem [shape: f32[1,128], index: 8, kind: input, shape index: {}]
  %s9 = inlined_call_operand.hbm [shape: f32[16,128], index: 9, kind: output, shape index: {}]
  %s10 = sld [smem:[#allocation0]]
  $region58: #{tpu_custom_call.1} parent=0
    _
  %s12 = ssub.s32 1, %s10
  %s13 = scalar_select 0, %s12, %s10
  $region1: #{tpu_custom_call.1} parent=0
    #allocation2 [shape = 'u8[131072]{0}', space=vmem, size = 0x20000, scoped, tag = 'input window, operand 3, single buffered']
    #allocation3 [shape = 's32[1]{0}', space=sflag, size = 0x4, scoped, tag = 'scoped memory for tpu_custom_call.1']
    #allocation4 [shape = 's32[1]{0}', space=sflag, size = 0x4, scoped, tag = 'scoped memory for tpu_custom_call.1']
    #allocation5 [shape = 'u8[1048576]{0}', space=vmem, size = 0x100000, scoped, tag = 'input window, operand 5, single buffered']
    #allocation6 [shape = 's32[1]{0}', space=sflag, size = 0x4, scoped, tag = 'scoped memory for tpu_custom_call.1']
    #allocation7 [shape = 'u8[262144]{0}', space=vmem, size = 0x40000, scoped, tag = 'input window, operand 7, single buffered']
    #allocation8 [shape = 'u8[8192]{0}', space=vmem, size = 0x2000, scoped, tag = 'output window, operand 0, single buffered']
    %14 = vsyncpa [#allocation3], 0
    %15 = vsyncpa [#allocation6], 0
    %16 = vsyncpa [#allocation4], 0
    // Predicated region
    $region2: #{tpu_custom_call.1} parent=1 // pred_check
      _
    $region3: #{tpu_custom_call.1} parent=1 // pred_check_branch
      %18 = sbr.rel (0) target = $region5
    $region4: #{tpu_custom_call.1} parent=1 // pred_region
      _
    $region5: #{tpu_custom_call.1} parent=1 // pred_fallthru
      _
    // Predicated region
    $region6: #{tpu_custom_call.1} parent=1 // pred_check
      _
    $region7: #{tpu_custom_call.1} parent=1 // pred_check_branch
      %20 = sbr.rel (0) target = $region9
    $region8: #{tpu_custom_call.1} parent=1 // pred_region
      _
    $region9: #{tpu_custom_call.1} parent=1 // pred_fallthru
      _
    // Predicated region
    $region10: #{tpu_custom_call.1} parent=1 // pred_check
      _
    $region11: #{tpu_custom_call.1} parent=1 // pred_check_branch
      %22 = sbr.rel (0) target = $region13
    $region12: #{tpu_custom_call.1} parent=1 // pred_region
      _
    $region13: #{tpu_custom_call.1} parent=1 // pred_fallthru
      _
    // Predicated region
    $region14: #{tpu_custom_call.1} parent=1 // pred_check
      _
    $region15: #{tpu_custom_call.1} parent=1 // pred_check_branch
      %24 = sbr.rel (0) target = $region17
    $region16: #{tpu_custom_call.1} parent=1 // pred_region
      %s26 = ssub.s32 4096, 4096
      %27 = vsyncadd [#allocation3], %s26
      %s28 = sshll.u32 [#allocation2], 4
      %s29 = int_to_ptr.vmem [resolvable:$true] %s28
      %34 = dma.hbm_to_vmem [thread:$0]  %s3, 4096, %s29, [#allocation3], 256, 256, 16
    $region17: #{tpu_custom_call.1} parent=1 // pred_fallthru
      _
    // Predicated region
    $region18: #{tpu_custom_call.1} parent=1 // pred_check
      _
    $region19: #{tpu_custom_call.1} parent=1 // pred_check_branch
      %36 = sbr.rel (0) target = $region21
    $region20: #{tpu_custom_call.1} parent=1 // pred_region
      _
    $region21: #{tpu_custom_call.1} parent=1 // pred_fallthru
      _
    // Predicated region
    $region22: #{tpu_custom_call.1} parent=1 // pred_check
      _
    $region23: #{tpu_custom_call.1} parent=1 // pred_check_branch
      %38 = sbr.rel (0) target = $region25
    $region24: #{tpu_custom_call.1} parent=1 // pred_region
      %s40 = ssub.s32 32768, 32768
      %41 = vsyncadd [#allocation6], %s40
      %s42 = sshll.u32 [#allocation5], 4
      %s43 = int_to_ptr.vmem [resolvable:$true] %s42
      %48 = dma.hbm_to_vmem [thread:$0]  %s5, 32768, %s43, [#allocation6], 512, 512, 32
    $region25: #{tpu_custom_call.1} parent=1 // pred_fallthru
      _
    // Predicated region
    $region26: #{tpu_custom_call.1} parent=1 // pred_check
      _
    $region27: #{tpu_custom_call.1} parent=1 // pred_check_branch
      %50 = sbr.rel (0) target = $region29
    $region28: #{tpu_custom_call.1} parent=1 // pred_region
      _
    $region29: #{tpu_custom_call.1} parent=1 // pred_fallthru
      _
    // Predicated region
    $region30: #{tpu_custom_call.1} parent=1 // pred_check
      _
    $region31: #{tpu_custom_call.1} parent=1 // pred_check_branch
      %52 = sbr.rel (0) target = $region33
    $region32: #{tpu_custom_call.1} parent=1 // pred_region
      %s54 = ssub.s32 8192, 8192
      %55 = vsyncadd [#allocation6], %s54
      %s56 = sshll.u32 [#allocation7], 4
      %s57 = int_to_ptr.vmem [resolvable:$true] %s56
      %62 = dma.hbm_to_vmem [thread:$0]  %s7, 8192, %s57, [#allocation6], 64, 64, 4
    $region33: #{tpu_custom_call.1} parent=1 // pred_fallthru
      _
    // Predicated region
    $region34: #{tpu_custom_call.1} parent=1 // pred_check
      _
    $region35: #{tpu_custom_call.1} parent=1 // pred_check_branch
      %64 = sbr.rel (0) target = $region37
    $region36: #{tpu_custom_call.1} parent=1 // pred_region
      _
    $region37: #{tpu_custom_call.1} parent=1 // pred_fallthru
      _
    // Predicated region
    $region38: #{tpu_custom_call.1} parent=1 // pred_check
      _
    $region39: #{tpu_custom_call.1} parent=1 // pred_check_branch
      %66 = sbr.rel (0) target = $region41
    $region40: #{tpu_custom_call.1} parent=1 // pred_region
      %67 = dma.done [#allocation3], 4096
    $region41: #{tpu_custom_call.1} parent=1 // pred_fallthru
      _
    // Predicated region
    $region42: #{tpu_custom_call.1} parent=1 // pred_check
      _
    $region43: #{tpu_custom_call.1} parent=1 // pred_check_branch
      %69 = sbr.rel (0) target = $region45
    $region44: #{tpu_custom_call.1} parent=1 // pred_region
      %70 = dma.done [#allocation6], 32768
    $region45: #{tpu_custom_call.1} parent=1 // pred_fallthru
      _
    // Predicated region
    $region46: #{tpu_custom_call.1} parent=1 // pred_check
      _
    $region47: #{tpu_custom_call.1} parent=1 // pred_check_branch
      %72 = sbr.rel (0) target = $region49
    $region48: #{tpu_custom_call.1} parent=1 // pred_region
      %73 = dma.done [#allocation6], 8192
    $region49: #{tpu_custom_call.1} parent=1 // pred_fallthru
      _
    %v75 = vld [vmem:[%s0] sm:$0xff]
    %v76 = vld [vmem:[%s0 + $0x8] sm:$0xff]
    %v77 = vpack.c.bf16 %v76, %v75
    %v78 = vld [vmem:[%s1] sm:$0xf]
    %v79 = vld [vmem:[%s2] sm:$0x1]
    %v81 = vlaneseq
    %v82 = vshrl.u32 %v81, 7
    %v83 = vsub.s32 0, %v82
    %v84 = vrot.slane %v79, %v83
    %vm86 = vcmask 64512
    %v88 = vsel %vm86, %v77, 0
    %vm90 = vcmask 1043456
    %v92 = vsel %vm90, %v78, 0
    %94 = vmatprep.subr.bf16.mxu0 0
    %95 = vmatpush1.bf16.msra.mxu0 0
    %96 = vmatprep.subr.bf16.mxu0 0
    %97 = vmatpush1.bf16.msra.mxu0 0
    %98 = vmatprep.subr.bf16.mxu0 0
    %99 = vmatpush1.bf16.msra.mxu0 0
    %100 = vmatprep.subr.bf16.mxu0 0
    %101 = vmatpush1.bf16.msra.mxu0 0
    %102 = vmatprep.subr.bf16.mxu0 0
    %103 = vmatpush1.bf16.msra.mxu0 0
    %104 = vmatprep.subr.bf16.mxu0 0
    %105 = vmatpush1.bf16.msra.mxu0 0
    %106 = vmatprep.subr.bf16.mxu0 0
    %107 = vmatpush1.bf16.msra.mxu0 0
    %108 = vmatprep.subr.bf16.mxu0 0
    %109 = vmatpush1.bf16.msra.mxu0 %v92
    %110 = vmatprep.subr.bf16.mxu0 0
    %111 = vmatpush2.bf16.msra.mxu0 0
    %112 = vmatprep.subr.bf16.mxu0 0
    %113 = vmatpush2.bf16.msra.mxu0 0
    %114 = vmatprep.subr.bf16.mxu0 0
    %115 = vmatpush2.bf16.msra.mxu0 0
    %116 = vmatprep.subr.bf16.mxu0 0
    %117 = vmatpush2.bf16.msra.mxu0 0
    %118 = vmatprep.subr.bf16.mxu0 0
    %119 = vmatpush2.bf16.msra.mxu0 0
    %120 = vmatprep.subr.bf16.mxu0 0
    %121 = vmatpush2.bf16.msra.mxu0 0
    %122 = vmatprep.subr.bf16.mxu0 0
    %123 = vmatpush2.bf16.msra.mxu0 0
    %124 = vmatprep.subr.bf16.mxu0 0
    %125 = vmatpush2.bf16.msra.mxu0 0
    %126 = vmatprep.mubr.bf16.mxu0 0
    %127 = vmatmul.mubr.bf16.gmra.mxu0 %v88
    %v128 = vpop.f32.mrf.mxu0
    %v129 = vadd.f32 %v84, %v128
    %v130 = vpop.f32.mrf.mxu0
    %v131 = vpop.f32.mrf.mxu0
    %v132 = vadd.f32 %v84, %v131
    %v133 = vpop.f32.mrf.mxu0
    %134 = vdwg.mxu0
    %v135 = vmax.f32 %v129, 0.0
    %v136 = vmax.f32 %v132, 0.0
    %v137 = vpack.c.bf16 %v136, %v135
    %v138 = vld [vmem:[#allocation2] sm:$0xff]
    %v139 = vld [vmem:[#allocation2 + $0x8] sm:$0xff]
    %v140 = vld [vmem:[#allocation2 + $0x10] sm:$0xff]
    %v141 = vld [vmem:[#allocation2 + $0x18] sm:$0xff]
    %v142 = vld [vmem:[#allocation2 + $0x20] sm:$0xff]
    %v143 = vld [vmem:[#allocation2 + $0x28] sm:$0xff]
    %v144 = vld [vmem:[#allocation2 + $0x30] sm:$0xff]
    %v145 = vld [vmem:[#allocation2 + $0x38] sm:$0xff]
    %v146 = vld [vmem:[#allocation2 + $0x40] sm:$0xff]
    %v147 = vld [vmem:[#allocation2 + $0x48] sm:$0xff]
    %v148 = vld [vmem:[#allocation2 + $0x50] sm:$0xff]
    %v149 = vld [vmem:[#allocation2 + $0x58] sm:$0xff]
    %v150 = vld [vmem:[#allocation2 + $0x60] sm:$0xff]
    %v151 = vld [vmem:[#allocation2 + $0x68] sm:$0xff]
    %v152 = vld [vmem:[#allocation2 + $0x70] sm:$0xff]
    %v153 = vld [vmem:[#allocation2 + $0x78] sm:$0xff]
    %v154 = vld [vmem:[#allocation2 + $0x80] sm:$0xff]
    %v155 = vld [vmem:[#allocation2 + $0x88] sm:$0xff]
    %v156 = vld [vmem:[#allocation2 + $0x90] sm:$0xff]
    %v157 = vld [vmem:[#allocation2 + $0x98] sm:$0xff]
    %v158 = vld [vmem:[#allocation2 + $0xa0] sm:$0xff]
    %v159 = vld [vmem:[#allocation2 + $0xa8] sm:$0xff]
    %v160 = vld [vmem:[#allocation2 + $0xb0] sm:$0xff]
    %v161 = vld [vmem:[#allocation2 + $0xb8] sm:$0xff]
    %v162 = vld [vmem:[#allocation2 + $0xc0] sm:$0xff]
    %v163 = vld [vmem:[#allocation2 + $0xc8] sm:$0xff]
    %v164 = vld [vmem:[#allocation2 + $0xd0] sm:$0xff]
    %v165 = vld [vmem:[#allocation2 + $0xd8] sm:$0xff]
    %v166 = vld [vmem:[#allocation2 + $0xe0] sm:$0xff]
    %v167 = vld [vmem:[#allocation2 + $0xe8] sm:$0xff]
    %v168 = vld [vmem:[#allocation2 + $0xf0] sm:$0xff]
    %v169 = vld [vmem:[#allocation2 + $0xf8] sm:$0xff]
    %v170 = vld [vmem:[%s4] sm:$0xf]
    %v172 = vlaneseq
    %v173 = vshrl.u32 %v172, 7
    %v174 = vsub.s32 0, %v173
    %v175 = vrot.slane %v170, %v174
    %v176 = vlaneseq
    %v177 = vshrl.u32 %v176, 7
    %v178 = vsub.s32 1, %v177
    %v179 = vrot.slane %v170, %v178
    %v180 = vlaneseq
    %v181 = vshrl.u32 %v180, 7
    %v182 = vsub.s32 2, %v181
    %v183 = vrot.slane %v170, %v182
    %v184 = vlaneseq
    %v185 = vshrl.u32 %v184, 7
    %v186 = vsub.s32 3, %v185
    %v187 = vrot.slane %v170, %v186
    %v224 = vunpack.c.l.b16 %v138
    %v225 = vunpack.c.h.b16 %v138
    %v226 = vunpack.c.l.b16 %v139
    %v227 = vunpack.c.h.b16 %v139
    %v228 = vunpack.c.l.b16 %v140
    %v229 = vunpack.c.h.b16 %v140
    %v230 = vunpack.c.l.b16 %v141
    %v231 = vunpack.c.h.b16 %v141
    %v232 = vunpack.c.l.b16 %v142
    %v233 = vunpack.c.h.b16 %v142
    %v234 = vunpack.c.l.b16 %v143
    %v235 = vunpack.c.h.b16 %v143
    %v236 = vunpack.c.l.b16 %v144
    %v237 = vunpack.c.h.b16 %v144
    %v238 = vunpack.c.l.b16 %v145
    %v239 = vunpack.c.h.b16 %v145
    %v240 = vunpack.c.l.b16 %v146
    %v241 = vunpack.c.h.b16 %v146
    %v242 = vunpack.c.l.b16 %v147
    %v243 = vunpack.c.h.b16 %v147
    %v244 = vunpack.c.l.b16 %v148
    %v245 = vunpack.c.h.b16 %v148
    %v246 = vunpack.c.l.b16 %v149
    %v247 = vunpack.c.h.b16 %v149
    %v248 = vunpack.c.l.b16 %v150
    %v249 = vunpack.c.h.b16 %v150
    %v250 = vunpack.c.l.b16 %v151
    %v251 = vunpack.c.h.b16 %v151
    %v252 = vunpack.c.l.b16 %v152
    %v253 = vunpack.c.h.b16 %v152
    %v254 = vunpack.c.l.b16 %v153
    %v255 = vunpack.c.h.b16 %v153
    %v256 = vunpack.c.l.b16 %v154
    %v257 = vunpack.c.h.b16 %v154
    %v258 = vunpack.c.l.b16 %v155
    %v259 = vunpack.c.h.b16 %v155
    %v260 = vunpack.c.l.b16 %v156
    %v261 = vunpack.c.h.b16 %v156
    %v262 = vunpack.c.l.b16 %v157
    %v263 = vunpack.c.h.b16 %v157
    %v264 = vunpack.c.l.b16 %v158
    %v265 = vunpack.c.h.b16 %v158
    %v266 = vunpack.c.l.b16 %v159
    %v267 = vunpack.c.h.b16 %v159
    %v268 = vunpack.c.l.b16 %v160
    %v269 = vunpack.c.h.b16 %v160
    %v270 = vunpack.c.l.b16 %v161
    %v271 = vunpack.c.h.b16 %v161
    %v272 = vunpack.c.l.b16 %v162
    %v273 = vunpack.c.h.b16 %v162
    %v274 = vunpack.c.l.b16 %v163
    %v275 = vunpack.c.h.b16 %v163
    %v276 = vunpack.c.l.b16 %v164
    %v277 = vunpack.c.h.b16 %v164
    %v278 = vunpack.c.l.b16 %v165
    %v279 = vunpack.c.h.b16 %v165
    %v280 = vunpack.c.l.b16 %v166
    %v281 = vunpack.c.h.b16 %v166
    %v282 = vunpack.c.l.b16 %v167
    %v283 = vunpack.c.h.b16 %v167
    %v284 = vunpack.c.l.b16 %v168
    %v285 = vunpack.c.h.b16 %v168
    %v286 = vunpack.c.l.b16 %v169
    %v287 = vunpack.c.h.b16 %v169
    %v288 = vpack.c.b16 %v228, %v224
    %v289 = vpack.c.b16 %v229, %v225
    %v290 = vpack.c.b16 %v230, %v226
    %v291 = vpack.c.b16 %v231, %v227
    %v292 = vpack.c.b16 %v236, %v232
    %v293 = vpack.c.b16 %v237, %v233
    %v294 = vpack.c.b16 %v238, %v234
    %v295 = vpack.c.b16 %v239, %v235
    %v296 = vpack.c.b16 %v244, %v240
    %v297 = vpack.c.b16 %v245, %v241
    %v298 = vpack.c.b16 %v246, %v242
    %v299 = vpack.c.b16 %v247, %v243
    %v300 = vpack.c.b16 %v252, %v248
    %v301 = vpack.c.b16 %v253, %v249
    %v302 = vpack.c.b16 %v254, %v250
    %v303 = vpack.c.b16 %v255, %v251
    %v304 = vpack.c.b16 %v260, %v256
    %v305 = vpack.c.b16 %v261, %v257
    %v306 = vpack.c.b16 %v262, %v258
    %v307 = vpack.c.b16 %v263, %v259
    %v308 = vpack.c.b16 %v268, %v264
    %v309 = vpack.c.b16 %v269, %v265
    %v310 = vpack.c.b16 %v270, %v266
    %v311 = vpack.c.b16 %v271, %v267
    %v312 = vpack.c.b16 %v276, %v272
    %v313 = vpack.c.b16 %v277, %v273
    %v314 = vpack.c.b16 %v278, %v274
    %v315 = vpack.c.b16 %v279, %v275
    %v316 = vpack.c.b16 %v284, %v280
    %v317 = vpack.c.b16 %v285, %v281
    %v318 = vpack.c.b16 %v286, %v282
    %v319 = vpack.c.b16 %v287, %v283
    %352 = vmatprep.subr.bf16.mxu0 %v317
    %353 = vmatpush1.bf16.msra.mxu0 %v316
    %354 = vmatprep.subr.bf16.mxu0 %v313
    %355 = vmatpush1.bf16.msra.mxu0 %v312
    %356 = vmatprep.subr.bf16.mxu0 %v309
    %357 = vmatpush1.bf16.msra.mxu0 %v308
    %358 = vmatprep.subr.bf16.mxu0 %v305
    %359 = vmatpush1.bf16.msra.mxu0 %v304
    %360 = vmatprep.subr.bf16.mxu0 %v301
    %361 = vmatpush1.bf16.msra.mxu0 %v300
    %362 = vmatprep.subr.bf16.mxu0 %v297
    %363 = vmatpush1.bf16.msra.mxu0 %v296
    %364 = vmatprep.subr.bf16.mxu0 %v293
    %365 = vmatpush1.bf16.msra.mxu0 %v292
    %366 = vmatprep.subr.bf16.mxu0 %v289
    %367 = vmatpush1.bf16.msra.mxu0 %v288
    %368 = vmatprep.subr.bf16.mxu0 0
    %369 = vmatpush2.bf16.msra.mxu0 0
    %370 = vmatprep.subr.bf16.mxu0 0
    %371 = vmatpush2.bf16.msra.mxu0 0
    %372 = vmatprep.subr.bf16.mxu0 0
    %373 = vmatpush2.bf16.msra.mxu0 0
    %374 = vmatprep.subr.bf16.mxu0 0
    %375 = vmatpush2.bf16.msra.mxu0 0
    %376 = vmatprep.subr.bf16.mxu0 0
    %377 = vmatpush2.bf16.msra.mxu0 0
    %378 = vmatprep.subr.bf16.mxu0 0
    %379 = vmatpush2.bf16.msra.mxu0 0
    %380 = vmatprep.subr.bf16.mxu0 0
    %381 = vmatpush2.bf16.msra.mxu0 0
    %382 = vmatprep.subr.bf16.mxu0 0
    %383 = vmatpush2.bf16.msra.mxu0 0
    %384 = vmatprep.mubr.bf16.mxu0 0
    %385 = vmatmul.mubr.bf16.gmra.mxu0 %v137
    %v386 = vpop.f32.mrf.mxu0
    %v387 = vadd.f32 %v175, %v386
    %v388 = vpop.f32.mrf.mxu0
    %v389 = vadd.f32 %v179, %v388
    %v390 = vpop.f32.mrf.mxu0
    %v391 = vadd.f32 %v175, %v390
    %v392 = vpop.f32.mrf.mxu0
    %v393 = vadd.f32 %v179, %v392
    %394 = vdwg.mxu0
    %395 = vmatprep.subr.bf16.mxu0 %v319
    %396 = vmatpush1.bf16.msra.mxu0 %v318
    %397 = vmatprep.subr.bf16.mxu0 %v315
    %398 = vmatpush1.bf16.msra.mxu0 %v314
    %399 = vmatprep.subr.bf16.mxu0 %v311
    %400 = vmatpush1.bf16.msra.mxu0 %v310
    %401 = vmatprep.subr.bf16.mxu0 %v307
    %402 = vmatpush1.bf16.msra.mxu0 %v306
    %403 = vmatprep.subr.bf16.mxu0 %v303
    %404 = vmatpush1.bf16.msra.mxu0 %v302
    %405 = vmatprep.subr.bf16.mxu0 %v299
    %406 = vmatpush1.bf16.msra.mxu0 %v298
    %407 = vmatprep.subr.bf16.mxu0 %v295
    %408 = vmatpush1.bf16.msra.mxu0 %v294
    %409 = vmatprep.subr.bf16.mxu0 %v291
    %410 = vmatpush1.bf16.msra.mxu0 %v290
    %411 = vmatprep.subr.bf16.mxu0 0
    %412 = vmatpush2.bf16.msra.mxu0 0
    %413 = vmatprep.subr.bf16.mxu0 0
    %414 = vmatpush2.bf16.msra.mxu0 0
    %415 = vmatprep.subr.bf16.mxu0 0
    %416 = vmatpush2.bf16.msra.mxu0 0
    %417 = vmatprep.subr.bf16.mxu0 0
    %418 = vmatpush2.bf16.msra.mxu0 0
    %419 = vmatprep.subr.bf16.mxu0 0
    %420 = vmatpush2.bf16.msra.mxu0 0
    %421 = vmatprep.subr.bf16.mxu0 0
    %422 = vmatpush2.bf16.msra.mxu0 0
    %423 = vmatprep.subr.bf16.mxu0 0
    %424 = vmatpush2.bf16.msra.mxu0 0
    %425 = vmatprep.subr.bf16.mxu0 0
    %426 = vmatpush2.bf16.msra.mxu0 0
    %427 = vmatprep.mubr.bf16.mxu0 0
    %428 = vmatmul.mubr.bf16.gmra.mxu0 %v137
    %v429 = vpop.f32.mrf.mxu0
    %v430 = vadd.f32 %v183, %v429
    %v431 = vpop.f32.mrf.mxu0
    %v432 = vadd.f32 %v187, %v431
    %v433 = vpop.f32.mrf.mxu0
    %v434 = vadd.f32 %v183, %v433
    %v435 = vpop.f32.mrf.mxu0
    %v436 = vadd.f32 %v187, %v435
    %437 = vdwg.mxu0
    %v438 = vmax.f32 %v387, 0.0
    %v439 = vmax.f32 %v389, 0.0
    %v440 = vmax.f32 %v430, 0.0
    %v441 = vmax.f32 %v432, 0.0
    %v442 = vmax.f32 %v391, 0.0
    %v443 = vmax.f32 %v393, 0.0
    %v444 = vmax.f32 %v434, 0.0
    %v445 = vmax.f32 %v436, 0.0
    %v446 = vpack.c.bf16 %v442, %v438
    %v447 = vpack.c.bf16 %v443, %v439
    %v448 = vpack.c.bf16 %v444, %v440
    %v449 = vpack.c.bf16 %v445, %v441
    %v450 = vld [vmem:[#allocation5] sm:$0xff]
    %v451 = vld [vmem:[#allocation5 + $0x8] sm:$0xff]
    %v452 = vld [vmem:[#allocation5 + $0x10] sm:$0xff]
    %v453 = vld [vmem:[#allocation5 + $0x18] sm:$0xff]
    %v454 = vld [vmem:[#allocation5 + $0x20] sm:$0xff]
    %v455 = vld [vmem:[#allocation5 + $0x28] sm:$0xff]
    %v456 = vld [vmem:[#allocation5 + $0x30] sm:$0xff]
    %v457 = vld [vmem:[#allocation5 + $0x38] sm:$0xff]
    %v458 = vld [vmem:[#allocation5 + $0x40] sm:$0xff]
    %v459 = vld [vmem:[#allocation5 + $0x48] sm:$0xff]
    %v460 = vld [vmem:[#allocation5 + $0x50] sm:$0xff]
    %v461 = vld [vmem:[#allocation5 + $0x58] sm:$0xff]
    %v462 = vld [vmem:[#allocation5 + $0x60] sm:$0xff]
    %v463 = vld [vmem:[#allocation5 + $0x68] sm:$0xff]
    %v464 = vld [vmem:[#allocation5 + $0x70] sm:$0xff]
    %v465 = vld [vmem:[#allocation5 + $0x78] sm:$0xff]
    %v466 = vld [vmem:[#allocation5 + $0x80] sm:$0xff]
    %v467 = vld [vmem:[#allocation5 + $0x88] sm:$0xff]
    %v468 = vld [vmem:[#allocation5 + $0x90] sm:$0xff]
    %v469 = vld [vmem:[#allocation5 + $0x98] sm:$0xff]
    %v470 = vld [vmem:[#allocation5 + $0xa0] sm:$0xff]
    %v471 = vld [vmem:[#allocation5 + $0xa8] sm:$0xff]
    %v472 = vld [vmem:[#allocation5 + $0xb0] sm:$0xff]
    %v473 = vld [vmem:[#allocation5 + $0xb8] sm:$0xff]
    %v474 = vld [vmem:[#allocation5 + $0xc0] sm:$0xff]
    %v475 = vld [vmem:[#allocation5 + $0xc8] sm:$0xff]
    %v476 = vld [vmem:[#allocation5 + $0xd0] sm:$0xff]
    %v477 = vld [vmem:[#allocation5 + $0xd8] sm:$0xff]
    %v478 = vld [vmem:[#allocation5 + $0xe0] sm:$0xff]
    %v479 = vld [vmem:[#allocation5 + $0xe8] sm:$0xff]
    %v480 = vld [vmem:[#allocation5 + $0xf0] sm:$0xff]
    %v481 = vld [vmem:[#allocation5 + $0xf8] sm:$0xff]
    %v482 = vld [vmem:[#allocation5 + $0x100] sm:$0xff]
    %v483 = vld [vmem:[#allocation5 + $0x108] sm:$0xff]
    %v484 = vld [vmem:[#allocation5 + $0x110] sm:$0xff]
    %v485 = vld [vmem:[#allocation5 + $0x118] sm:$0xff]
    %v486 = vld [vmem:[#allocation5 + $0x120] sm:$0xff]
    %v487 = vld [vmem:[#allocation5 + $0x128] sm:$0xff]
    %v488 = vld [vmem:[#allocation5 + $0x130] sm:$0xff]
    %v489 = vld [vmem:[#allocation5 + $0x138] sm:$0xff]
    %v490 = vld [vmem:[#allocation5 + $0x140] sm:$0xff]
    %v491 = vld [vmem:[#allocation5 + $0x148] sm:$0xff]
    %v492 = vld [vmem:[#allocation5 + $0x150] sm:$0xff]
    %v493 = vld [vmem:[#allocation5 + $0x158] sm:$0xff]
    %v494 = vld [vmem:[#allocation5 + $0x160] sm:$0xff]
    %v495 = vld [vmem:[#allocation5 + $0x168] sm:$0xff]
    %v496 = vld [vmem:[#allocation5 + $0x170] sm:$0xff]
    %v497 = vld [vmem:[#allocation5 + $0x178] sm:$0xff]
    %v498 = vld [vmem:[#allocation5 + $0x180] sm:$0xff]
    %v499 = vld [vmem:[#allocation5 + $0x188] sm:$0xff]
    %v500 = vld [vmem:[#allocation5 + $0x190] sm:$0xff]
    %v501 = vld [vmem:[#allocation5 + $0x198] sm:$0xff]
    %v502 = vld [vmem:[#allocation5 + $0x1a0] sm:$0xff]
    %v503 = vld [vmem:[#allocation5 + $0x1a8] sm:$0xff]
    %v504 = vld [vmem:[#allocation5 + $0x1b0] sm:$0xff]
    %v505 = vld [vmem:[#allocation5 + $0x1b8] sm:$0xff]
    %v506 = vld [vmem:[#allocation5 + $0x1c0] sm:$0xff]
    %v507 = vld [vmem:[#allocation5 + $0x1c8] sm:$0xff]
    %v508 = vld [vmem:[#allocation5 + $0x1d0] sm:$0xff]
    %v509 = vld [vmem:[#allocation5 + $0x1d8] sm:$0xff]
    %v510 = vld [vmem:[#allocation5 + $0x1e0] sm:$0xff]
    %v511 = vld [vmem:[#allocation5 + $0x1e8] sm:$0xff]
    %v512 = vld [vmem:[#allocation5 + $0x1f0] sm:$0xff]
    %v513 = vld [vmem:[#allocation5 + $0x1f8] sm:$0xff]
    %v514 = vld [vmem:[#allocation5 + $0x200] sm:$0xff]
    %v515 = vld [vmem:[#allocation5 + $0x208] sm:$0xff]
    %v516 = vld [vmem:[#allocation5 + $0x210] sm:$0xff]
    %v517 = vld [vmem:[#allocation5 + $0x218] sm:$0xff]
    %v518 = vld [vmem:[#allocation5 + $0x220] sm:$0xff]
    %v519 = vld [vmem:[#allocation5 + $0x228] sm:$0xff]
    %v520 = vld [vmem:[#allocation5 + $0x230] sm:$0xff]
    %v521 = vld [vmem:[#allocation5 + $0x238] sm:$0xff]
    %v522 = vld [vmem:[#allocation5 + $0x240] sm:$0xff]
    %v523 = vld [vmem:[#allocation5 + $0x248] sm:$0xff]
    %v524 = vld [vmem:[#allocation5 + $0x250] sm:$0xff]
    %v525 = vld [vmem:[#allocation5 + $0x258] sm:$0xff]
    %v526 = vld [vmem:[#allocation5 + $0x260] sm:$0xff]
    %v527 = vld [vmem:[#allocation5 + $0x268] sm:$0xff]
    %v528 = vld [vmem:[#allocation5 + $0x270] sm:$0xff]
    %v529 = vld [vmem:[#allocation5 + $0x278] sm:$0xff]
    %v530 = vld [vmem:[#allocation5 + $0x280] sm:$0xff]
    %v531 = vld [vmem:[#allocation5 + $0x288] sm:$0xff]
    %v532 = vld [vmem:[#allocation5 + $0x290] sm:$0xff]
    %v533 = vld [vmem:[#allocation5 + $0x298] sm:$0xff]
    %v534 = vld [vmem:[#allocation5 + $0x2a0] sm:$0xff]
    %v535 = vld [vmem:[#allocation5 + $0x2a8] sm:$0xff]
    %v536 = vld [vmem:[#allocation5 + $0x2b0] sm:$0xff]
    %v537 = vld [vmem:[#allocation5 + $0x2b8] sm:$0xff]
    %v538 = vld [vmem:[#allocation5 + $0x2c0] sm:$0xff]
    %v539 = vld [vmem:[#allocation5 + $0x2c8] sm:$0xff]
    %v540 = vld [vmem:[#allocation5 + $0x2d0] sm:$0xff]
    %v541 = vld [vmem:[#allocation5 + $0x2d8] sm:$0xff]
    %v542 = vld [vmem:[#allocation5 + $0x2e0] sm:$0xff]
    %v543 = vld [vmem:[#allocation5 + $0x2e8] sm:$0xff]
    %v544 = vld [vmem:[#allocation5 + $0x2f0] sm:$0xff]
    %v545 = vld [vmem:[#allocation5 + $0x2f8] sm:$0xff]
    %v546 = vld [vmem:[#allocation5 + $0x300] sm:$0xff]
    %v547 = vld [vmem:[#allocation5 + $0x308] sm:$0xff]
    %v548 = vld [vmem:[#allocation5 + $0x310] sm:$0xff]
    %v549 = vld [vmem:[#allocation5 + $0x318] sm:$0xff]
    %v550 = vld [vmem:[#allocation5 + $0x320] sm:$0xff]
    %v551 = vld [vmem:[#allocation5 + $0x328] sm:$0xff]
    %v552 = vld [vmem:[#allocation5 + $0x330] sm:$0xff]
    %v553 = vld [vmem:[#allocation5 + $0x338] sm:$0xff]
    %v554 = vld [vmem:[#allocation5 + $0x340] sm:$0xff]
    %v555 = vld [vmem:[#allocation5 + $0x348] sm:$0xff]
    %v556 = vld [vmem:[#allocation5 + $0x350] sm:$0xff]
    %v557 = vld [vmem:[#allocation5 + $0x358] sm:$0xff]
    %v558 = vld [vmem:[#allocation5 + $0x360] sm:$0xff]
    %v559 = vld [vmem:[#allocation5 + $0x368] sm:$0xff]
    %v560 = vld [vmem:[#allocation5 + $0x370] sm:$0xff]
    %v561 = vld [vmem:[#allocation5 + $0x378] sm:$0xff]
    %v562 = vld [vmem:[#allocation5 + $0x380] sm:$0xff]
    %v563 = vld [vmem:[#allocation5 + $0x388] sm:$0xff]
    %v564 = vld [vmem:[#allocation5 + $0x390] sm:$0xff]
    %v565 = vld [vmem:[#allocation5 + $0x398] sm:$0xff]
    %v566 = vld [vmem:[#allocation5 + $0x3a0] sm:$0xff]
    %v567 = vld [vmem:[#allocation5 + $0x3a8] sm:$0xff]
    %v568 = vld [vmem:[#allocation5 + $0x3b0] sm:$0xff]
    %v569 = vld [vmem:[#allocation5 + $0x3b8] sm:$0xff]
    %v570 = vld [vmem:[#allocation5 + $0x3c0] sm:$0xff]
    %v571 = vld [vmem:[#allocation5 + $0x3c8] sm:$0xff]
    %v572 = vld [vmem:[#allocation5 + $0x3d0] sm:$0xff]
    %v573 = vld [vmem:[#allocation5 + $0x3d8] sm:$0xff]
    %v574 = vld [vmem:[#allocation5 + $0x3e0] sm:$0xff]
    %v575 = vld [vmem:[#allocation5 + $0x3e8] sm:$0xff]
    %v576 = vld [vmem:[#allocation5 + $0x3f0] sm:$0xff]
    %v577 = vld [vmem:[#allocation5 + $0x3f8] sm:$0xff]
    %v578 = vld [vmem:[#allocation5 + $0x400] sm:$0xff]
    %v579 = vld [vmem:[#allocation5 + $0x408] sm:$0xff]
    %v580 = vld [vmem:[#allocation5 + $0x410] sm:$0xff]
    %v581 = vld [vmem:[#allocation5 + $0x418] sm:$0xff]
    %v582 = vld [vmem:[#allocation5 + $0x420] sm:$0xff]
    %v583 = vld [vmem:[#allocation5 + $0x428] sm:$0xff]
    %v584 = vld [vmem:[#allocation5 + $0x430] sm:$0xff]
    %v585 = vld [vmem:[#allocation5 + $0x438] sm:$0xff]
    %v586 = vld [vmem:[#allocation5 + $0x440] sm:$0xff]
    %v587 = vld [vmem:[#allocation5 + $0x448] sm:$0xff]
    %v588 = vld [vmem:[#allocation5 + $0x450] sm:$0xff]
    %v589 = vld [vmem:[#allocation5 + $0x458] sm:$0xff]
    %v590 = vld [vmem:[#allocation5 + $0x460] sm:$0xff]
    %v591 = vld [vmem:[#allocation5 + $0x468] sm:$0xff]
    %v592 = vld [vmem:[#allocation5 + $0x470] sm:$0xff]
    %v593 = vld [vmem:[#allocation5 + $0x478] sm:$0xff]
    %v594 = vld [vmem:[#allocation5 + $0x480] sm:$0xff]
    %v595 = vld [vmem:[#allocation5 + $0x488] sm:$0xff]
    %v596 = vld [vmem:[#allocation5 + $0x490] sm:$0xff]
    %v597 = vld [vmem:[#allocation5 + $0x498] sm:$0xff]
    %v598 = vld [vmem:[#allocation5 + $0x4a0] sm:$0xff]
    %v599 = vld [vmem:[#allocation5 + $0x4a8] sm:$0xff]
    %v600 = vld [vmem:[#allocation5 + $0x4b0] sm:$0xff]
    %v601 = vld [vmem:[#allocation5 + $0x4b8] sm:$0xff]
    %v602 = vld [vmem:[#allocation5 + $0x4c0] sm:$0xff]
    %v603 = vld [vmem:[#allocation5 + $0x4c8] sm:$0xff]
    %v604 = vld [vmem:[#allocation5 + $0x4d0] sm:$0xff]
    %v605 = vld [vmem:[#allocation5 + $0x4d8] sm:$0xff]
    %v606 = vld [vmem:[#allocation5 + $0x4e0] sm:$0xff]
    %v607 = vld [vmem:[#allocation5 + $0x4e8] sm:$0xff]
    %v608 = vld [vmem:[#allocation5 + $0x4f0] sm:$0xff]
    %v609 = vld [vmem:[#allocation5 + $0x4f8] sm:$0xff]
    %v610 = vld [vmem:[#allocation5 + $0x500] sm:$0xff]
    %v611 = vld [vmem:[#allocation5 + $0x508] sm:$0xff]
    %v612 = vld [vmem:[#allocation5 + $0x510] sm:$0xff]
    %v613 = vld [vmem:[#allocation5 + $0x518] sm:$0xff]
    %v614 = vld [vmem:[#allocation5 + $0x520] sm:$0xff]
    %v615 = vld [vmem:[#allocation5 + $0x528] sm:$0xff]
    %v616 = vld [vmem:[#allocation5 + $0x530] sm:$0xff]
    %v617 = vld [vmem:[#allocation5 + $0x538] sm:$0xff]
    %v618 = vld [vmem:[#allocation5 + $0x540] sm:$0xff]
    %v619 = vld [vmem:[#allocation5 + $0x548] sm:$0xff]
    %v620 = vld [vmem:[#allocation5 + $0x550] sm:$0xff]
    %v621 = vld [vmem:[#allocation5 + $0x558] sm:$0xff]
    %v622 = vld [vmem:[#allocation5 + $0x560] sm:$0xff]
    %v623 = vld [vmem:[#allocation5 + $0x568] sm:$0xff]
    %v624 = vld [vmem:[#allocation5 + $0x570] sm:$0xff]
    %v625 = vld [vmem:[#allocation5 + $0x578] sm:$0xff]
    %v626 = vld [vmem:[#allocation5 + $0x580] sm:$0xff]
    %v627 = vld [vmem:[#allocation5 + $0x588] sm:$0xff]
    %v628 = vld [vmem:[#allocation5 + $0x590] sm:$0xff]
    %v629 = vld [vmem:[#allocation5 + $0x598] sm:$0xff]
    %v630 = vld [vmem:[#allocation5 + $0x5a0] sm:$0xff]
    %v631 = vld [vmem:[#allocation5 + $0x5a8] sm:$0xff]
    %v632 = vld [vmem:[#allocation5 + $0x5b0] sm:$0xff]
    %v633 = vld [vmem:[#allocation5 + $0x5b8] sm:$0xff]
    %v634 = vld [vmem:[#allocation5 + $0x5c0] sm:$0xff]
    %v635 = vld [vmem:[#allocation5 + $0x5c8] sm:$0xff]
    %v636 = vld [vmem:[#allocation5 + $0x5d0] sm:$0xff]
    %v637 = vld [vmem:[#allocation5 + $0x5d8] sm:$0xff]
    %v638 = vld [vmem:[#allocation5 + $0x5e0] sm:$0xff]
    %v639 = vld [vmem:[#allocation5 + $0x5e8] sm:$0xff]
    %v640 = vld [vmem:[#allocation5 + $0x5f0] sm:$0xff]
    %v641 = vld [vmem:[#allocation5 + $0x5f8] sm:$0xff]
    %v642 = vld [vmem:[#allocation5 + $0x600] sm:$0xff]
    %v643 = vld [vmem:[#allocation5 + $0x608] sm:$0xff]
    %v644 = vld [vmem:[#allocation5 + $0x610] sm:$0xff]
    %v645 = vld [vmem:[#allocation5 + $0x618] sm:$0xff]
    %v646 = vld [vmem:[#allocation5 + $0x620] sm:$0xff]
    %v647 = vld [vmem:[#allocation5 + $0x628] sm:$0xff]
    %v648 = vld [vmem:[#allocation5 + $0x630] sm:$0xff]
    %v649 = vld [vmem:[#allocation5 + $0x638] sm:$0xff]
    %v650 = vld [vmem:[#allocation5 + $0x640] sm:$0xff]
    %v651 = vld [vmem:[#allocation5 + $0x648] sm:$0xff]
    %v652 = vld [vmem:[#allocation5 + $0x650] sm:$0xff]
    %v653 = vld [vmem:[#allocation5 + $0x658] sm:$0xff]
    %v654 = vld [vmem:[#allocation5 + $0x660] sm:$0xff]
    %v655 = vld [vmem:[#allocation5 + $0x668] sm:$0xff]
    %v656 = vld [vmem:[#allocation5 + $0x670] sm:$0xff]
    %v657 = vld [vmem:[#allocation5 + $0x678] sm:$0xff]
    %v658 = vld [vmem:[#allocation5 + $0x680] sm:$0xff]
    %v659 = vld [vmem:[#allocation5 + $0x688] sm:$0xff]
    %v660 = vld [vmem:[#allocation5 + $0x690] sm:$0xff]
    %v661 = vld [vmem:[#allocation5 + $0x698] sm:$0xff]
    %v662 = vld [vmem:[#allocation5 + $0x6a0] sm:$0xff]
    %v663 = vld [vmem:[#allocation5 + $0x6a8] sm:$0xff]
    %v664 = vld [vmem:[#allocation5 + $0x6b0] sm:$0xff]
    %v665 = vld [vmem:[#allocation5 + $0x6b8] sm:$0xff]
    %v666 = vld [vmem:[#allocation5 + $0x6c0] sm:$0xff]
    %v667 = vld [vmem:[#allocation5 + $0x6c8] sm:$0xff]
    %v668 = vld [vmem:[#allocation5 + $0x6d0] sm:$0xff]
    %v669 = vld [vmem:[#allocation5 + $0x6d8] sm:$0xff]
    %v670 = vld [vmem:[#allocation5 + $0x6e0] sm:$0xff]
    %v671 = vld [vmem:[#allocation5 + $0x6e8] sm:$0xff]
    %v672 = vld [vmem:[#allocation5 + $0x6f0] sm:$0xff]
    %v673 = vld [vmem:[#allocation5 + $0x6f8] sm:$0xff]
    %v674 = vld [vmem:[#allocation5 + $0x700] sm:$0xff]
    %v675 = vld [vmem:[#allocation5 + $0x708] sm:$0xff]
    %v676 = vld [vmem:[#allocation5 + $0x710] sm:$0xff]
    %v677 = vld [vmem:[#allocation5 + $0x718] sm:$0xff]
    %v678 = vld [vmem:[#allocation5 + $0x720] sm:$0xff]
    %v679 = vld [vmem:[#allocation5 + $0x728] sm:$0xff]
    %v680 = vld [vmem:[#allocation5 + $0x730] sm:$0xff]
    %v681 = vld [vmem:[#allocation5 + $0x738] sm:$0xff]
    %v682 = vld [vmem:[#allocation5 + $0x740] sm:$0xff]
    %v683 = vld [vmem:[#allocation5 + $0x748] sm:$0xff]
    %v684 = vld [vmem:[#allocation5 + $0x750] sm:$0xff]
    %v685 = vld [vmem:[#allocation5 + $0x758] sm:$0xff]
    %v686 = vld [vmem:[#allocation5 + $0x760] sm:$0xff]
    %v687 = vld [vmem:[#allocation5 + $0x768] sm:$0xff]
    %v688 = vld [vmem:[#allocation5 + $0x770] sm:$0xff]
    %v689 = vld [vmem:[#allocation5 + $0x778] sm:$0xff]
    %v690 = vld [vmem:[#allocation5 + $0x780] sm:$0xff]
    %v691 = vld [vmem:[#allocation5 + $0x788] sm:$0xff]
    %v692 = vld [vmem:[#allocation5 + $0x790] sm:$0xff]
    %v693 = vld [vmem:[#allocation5 + $0x798] sm:$0xff]
    %v694 = vld [vmem:[#allocation5 + $0x7a0] sm:$0xff]
    %v695 = vld [vmem:[#allocation5 + $0x7a8] sm:$0xff]
    %v696 = vld [vmem:[#allocation5 + $0x7b0] sm:$0xff]
    %v697 = vld [vmem:[#allocation5 + $0x7b8] sm:$0xff]
    %v698 = vld [vmem:[#allocation5 + $0x7c0] sm:$0xff]
    %v699 = vld [vmem:[#allocation5 + $0x7c8] sm:$0xff]
    %v700 = vld [vmem:[#allocation5 + $0x7d0] sm:$0xff]
    %v701 = vld [vmem:[#allocation5 + $0x7d8] sm:$0xff]
    %v702 = vld [vmem:[#allocation5 + $0x7e0] sm:$0xff]
    %v703 = vld [vmem:[#allocation5 + $0x7e8] sm:$0xff]
    %v704 = vld [vmem:[#allocation5 + $0x7f0] sm:$0xff]
    %v705 = vld [vmem:[#allocation5 + $0x7f8] sm:$0xff]
    %v706 = vld [vmem:[%s6] sm:$0xff]
    %v708 = vlaneseq
    %v709 = vshrl.u32 %v708, 7
    %v710 = vsub.s32 0, %v709
    %v711 = vrot.slane %v706, %v710
    %v712 = vlaneseq
    %v713 = vshrl.u32 %v712, 7
    %v714 = vsub.s32 1, %v713
    %v715 = vrot.slane %v706, %v714
    %v716 = vlaneseq
    %v717 = vshrl.u32 %v716, 7
    %v718 = vsub.s32 2, %v717
    %v719 = vrot.slane %v706, %v718
    %v720 = vlaneseq
    %v721 = vshrl.u32 %v720, 7
    %v722 = vsub.s32 3, %v721
    %v723 = vrot.slane %v706, %v722
    %v724 = vlaneseq
    %v725 = vshrl.u32 %v724, 7
    %v726 = vsub.s32 4, %v725
    %v727 = vrot.slane %v706, %v726
    %v728 = vlaneseq
    %v729 = vshrl.u32 %v728, 7
    %v730 = vsub.s32 5, %v729
    %v731 = vrot.slane %v706, %v730
    %v732 = vlaneseq
    %v733 = vshrl.u32 %v732, 7
    %v734 = vsub.s32 6, %v733
    %v735 = vrot.slane %v706, %v734
    %v736 = vlaneseq
    %v737 = vshrl.u32 %v736, 7
    %v738 = vsub.s32 7, %v737
    %v739 = vrot.slane %v706, %v738
    %v1004 = vunpack.c.l.b16 %v450
    %v1005 = vunpack.c.h.b16 %v450
    %v1006 = vunpack.c.l.b16 %v451
    %v1007 = vunpack.c.h.b16 %v451
    %v1008 = vunpack.c.l.b16 %v452
    %v1009 = vunpack.c.h.b16 %v452
    %v1010 = vunpack.c.l.b16 %v453
    %v1011 = vunpack.c.h.b16 %v453
    %v1012 = vunpack.c.l.b16 %v454
    %v1013 = vunpack.c.h.b16 %v454
    %v1014 = vunpack.c.l.b16 %v455
    %v1015 = vunpack.c.h.b16 %v455
    %v1016 = vunpack.c.l.b16 %v456
    %v1017 = vunpack.c.h.b16 %v456
    %v1018 = vunpack.c.l.b16 %v457
    %v1019 = vunpack.c.h.b16 %v457
    %v1020 = vunpack.c.l.b16 %v458
    %v1021 = vunpack.c.h.b16 %v458
    %v1022 = vunpack.c.l.b16 %v459
    %v1023 = vunpack.c.h.b16 %v459
    %v1024 = vunpack.c.l.b16 %v460
    %v1025 = vunpack.c.h.b16 %v460
    %v1026 = vunpack.c.l.b16 %v461
    %v1027 = vunpack.c.h.b16 %v461
    %v1028 = vunpack.c.l.b16 %v462
    %v1029 = vunpack.c.h.b16 %v462
    %v1030 = vunpack.c.l.b16 %v463
    %v1031 = vunpack.c.h.b16 %v463
    %v1032 = vunpack.c.l.b16 %v464
    %v1033 = vunpack.c.h.b16 %v464
    %v1034 = vunpack.c.l.b16 %v465
    %v1035 = vunpack.c.h.b16 %v465
    %v1036 = vunpack.c.l.b16 %v466
    %v1037 = vunpack.c.h.b16 %v466
    %v1038 = vunpack.c.l.b16 %v467
    %v1039 = vunpack.c.h.b16 %v467
    %v1040 = vunpack.c.l.b16 %v468
    %v1041 = vunpack.c.h.b16 %v468
    %v1042 = vunpack.c.l.b16 %v469
    %v1043 = vunpack.c.h.b16 %v469
    %v1044 = vunpack.c.l.b16 %v470
    %v1045 = vunpack.c.h.b16 %v470
    %v1046 = vunpack.c.l.b16 %v471
    %v1047 = vunpack.c.h.b16 %v471
    %v1048 = vunpack.c.l.b16 %v472
    %v1049 = vunpack.c.h.b16 %v472
    %v1050 = vunpack.c.l.b16 %v473
    %v1051 = vunpack.c.h.b16 %v473
    %v1052 = vunpack.c.l.b16 %v474
    %v1053 = vunpack.c.h.b16 %v474
    %v1054 = vunpack.c.l.b16 %v475
    %v1055 = vunpack.c.h.b16 %v475
    %v1056 = vunpack.c.l.b16 %v476
    %v1057 = vunpack.c.h.b16 %v476
    %v1058 = vunpack.c.l.b16 %v477
    %v1059 = vunpack.c.h.b16 %v477
    %v1060 = vunpack.c.l.b16 %v478
    %v1061 = vunpack.c.h.b16 %v478
    %v1062 = vunpack.c.l.b16 %v479
    %v1063 = vunpack.c.h.b16 %v479
    %v1064 = vunpack.c.l.b16 %v480
    %v1065 = vunpack.c.h.b16 %v480
    %v1066 = vunpack.c.l.b16 %v481
    %v1067 = vunpack.c.h.b16 %v481
    %v1068 = vunpack.c.l.b16 %v482
    %v1069 = vunpack.c.h.b16 %v482
    %v1070 = vunpack.c.l.b16 %v483
    %v1071 = vunpack.c.h.b16 %v483
    %v1072 = vunpack.c.l.b16 %v484
    %v1073 = vunpack.c.h.b16 %v484
    %v1074 = vunpack.c.l.b16 %v485
    %v1075 = vunpack.c.h.b16 %v485
    %v1076 = vunpack.c.l.b16 %v486
    %v1077 = vunpack.c.h.b16 %v486
    %v1078 = vunpack.c.l.b16 %v487
    %v1079 = vunpack.c.h.b16 %v487
    %v1080 = vunpack.c.l.b16 %v488
    %v1081 = vunpack.c.h.b16 %v488
    %v1082 = vunpack.c.l.b16 %v489
    %v1083 = vunpack.c.h.b16 %v489
    %v1084 = vunpack.c.l.b16 %v490
    %v1085 = vunpack.c.h.b16 %v490
    %v1086 = vunpack.c.l.b16 %v491
    %v1087 = vunpack.c.h.b16 %v491
    %v1088 = vunpack.c.l.b16 %v492
    %v1089 = vunpack.c.h.b16 %v492
    %v1090 = vunpack.c.l.b16 %v493
    %v1091 = vunpack.c.h.b16 %v493
    %v1092 = vunpack.c.l.b16 %v494
    %v1093 = vunpack.c.h.b16 %v494
    %v1094 = vunpack.c.l.b16 %v495
    %v1095 = vunpack.c.h.b16 %v495
    %v1096 = vunpack.c.l.b16 %v496
    %v1097 = vunpack.c.h.b16 %v496
    %v1098 = vunpack.c.l.b16 %v497
    %v1099 = vunpack.c.h.b16 %v497
    %v1100 = vunpack.c.l.b16 %v498
    %v1101 = vunpack.c.h.b16 %v498
    %v1102 = vunpack.c.l.b16 %v499
    %v1103 = vunpack.c.h.b16 %v499
    %v1104 = vunpack.c.l.b16 %v500
    %v1105 = vunpack.c.h.b16 %v500
    %v1106 = vunpack.c.l.b16 %v501
    %v1107 = vunpack.c.h.b16 %v501
    %v1108 = vunpack.c.l.b16 %v502
    %v1109 = vunpack.c.h.b16 %v502
    %v1110 = vunpack.c.l.b16 %v503
    %v1111 = vunpack.c.h.b16 %v503
    %v1112 = vunpack.c.l.b16 %v504
    %v1113 = vunpack.c.h.b16 %v504
    %v1114 = vunpack.c.l.b16 %v505
    %v1115 = vunpack.c.h.b16 %v505
    %v1116 = vunpack.c.l.b16 %v506
    %v1117 = vunpack.c.h.b16 %v506
    %v1118 = vunpack.c.l.b16 %v507
    %v1119 = vunpack.c.h.b16 %v507
    %v1120 = vunpack.c.l.b16 %v508
    %v1121 = vunpack.c.h.b16 %v508
    %v1122 = vunpack.c.l.b16 %v509
    %v1123 = vunpack.c.h.b16 %v509
    %v1124 = vunpack.c.l.b16 %v510
    %v1125 = vunpack.c.h.b16 %v510
    %v1126 = vunpack.c.l.b16 %v511
    %v1127 = vunpack.c.h.b16 %v511
    %v1128 = vunpack.c.l.b16 %v512
    %v1129 = vunpack.c.h.b16 %v512
    %v1130 = vunpack.c.l.b16 %v513
    %v1131 = vunpack.c.h.b16 %v513
    %v1132 = vunpack.c.l.b16 %v514
    %v1133 = vunpack.c.h.b16 %v514
    %v1134 = vunpack.c.l.b16 %v515
    %v1135 = vunpack.c.h.b16 %v515
    %v1136 = vunpack.c.l.b16 %v516
    %v1137 = vunpack.c.h.b16 %v516
    %v1138 = vunpack.c.l.b16 %v517
    %v1139 = vunpack.c.h.b16 %v517
    %v1140 = vunpack.c.l.b16 %v518
    %v1141 = vunpack.c.h.b16 %v518
    %v1142 = vunpack.c.l.b16 %v519
    %v1143 = vunpack.c.h.b16 %v519
    %v1144 = vunpack.c.l.b16 %v520
    %v1145 = vunpack.c.h.b16 %v520
    %v1146 = vunpack.c.l.b16 %v521
    %v1147 = vunpack.c.h.b16 %v521
    %v1148 = vunpack.c.l.b16 %v522
    %v1149 = vunpack.c.h.b16 %v522
    %v1150 = vunpack.c.l.b16 %v523
    %v1151 = vunpack.c.h.b16 %v523
    %v1152 = vunpack.c.l.b16 %v524
    %v1153 = vunpack.c.h.b16 %v524
    %v1154 = vunpack.c.l.b16 %v525
    %v1155 = vunpack.c.h.b16 %v525
    %v1156 = vunpack.c.l.b16 %v526
    %v1157 = vunpack.c.h.b16 %v526
    %v1158 = vunpack.c.l.b16 %v527
    %v1159 = vunpack.c.h.b16 %v527
    %v1160 = vunpack.c.l.b16 %v528
    %v1161 = vunpack.c.h.b16 %v528
    %v1162 = vunpack.c.l.b16 %v529
    %v1163 = vunpack.c.h.b16 %v529
    %v1164 = vunpack.c.l.b16 %v530
    %v1165 = vunpack.c.h.b16 %v530
    %v1166 = vunpack.c.l.b16 %v531
    %v1167 = vunpack.c.h.b16 %v531
    %v1168 = vunpack.c.l.b16 %v532
    %v1169 = vunpack.c.h.b16 %v532
    %v1170 = vunpack.c.l.b16 %v533
    %v1171 = vunpack.c.h.b16 %v533
    %v1172 = vunpack.c.l.b16 %v534
    %v1173 = vunpack.c.h.b16 %v534
    %v1174 = vunpack.c.l.b16 %v535
    %v1175 = vunpack.c.h.b16 %v535
    %v1176 = vunpack.c.l.b16 %v536
    %v1177 = vunpack.c.h.b16 %v536
    %v1178 = vunpack.c.l.b16 %v537
    %v1179 = vunpack.c.h.b16 %v537
    %v1180 = vunpack.c.l.b16 %v538
    %v1181 = vunpack.c.h.b16 %v538
    %v1182 = vunpack.c.l.b16 %v539
    %v1183 = vunpack.c.h.b16 %v539
    %v1184 = vunpack.c.l.b16 %v540
    %v1185 = vunpack.c.h.b16 %v540
    %v1186 = vunpack.c.l.b16 %v541
    %v1187 = vunpack.c.h.b16 %v541
    %v1188 = vunpack.c.l.b16 %v542
    %v1189 = vunpack.c.h.b16 %v542
    %v1190 = vunpack.c.l.b16 %v543
    %v1191 = vunpack.c.h.b16 %v543
    %v1192 = vunpack.c.l.b16 %v544
    %v1193 = vunpack.c.h.b16 %v544
    %v1194 = vunpack.c.l.b16 %v545
    %v1195 = vunpack.c.h.b16 %v545
    %v1196 = vunpack.c.l.b16 %v546
    %v1197 = vunpack.c.h.b16 %v546
    %v1198 = vunpack.c.l.b16 %v547
    %v1199 = vunpack.c.h.b16 %v547
    %v1200 = vunpack.c.l.b16 %v548
    %v1201 = vunpack.c.h.b16 %v548
    %v1202 = vunpack.c.l.b16 %v549
    %v1203 = vunpack.c.h.b16 %v549
    %v1204 = vunpack.c.l.b16 %v550
    %v1205 = vunpack.c.h.b16 %v550
    %v1206 = vunpack.c.l.b16 %v551
    %v1207 = vunpack.c.h.b16 %v551
    %v1208 = vunpack.c.l.b16 %v552
    %v1209 = vunpack.c.h.b16 %v552
    %v1210 = vunpack.c.l.b16 %v553
    %v1211 = vunpack.c.h.b16 %v553
    %v1212 = vunpack.c.l.b16 %v554
    %v1213 = vunpack.c.h.b16 %v554
    %v1214 = vunpack.c.l.b16 %v555
    %v1215 = vunpack.c.h.b16 %v555
    %v1216 = vunpack.c.l.b16 %v556
    %v1217 = vunpack.c.h.b16 %v556
    %v1218 = vunpack.c.l.b16 %v557
    %v1219 = vunpack.c.h.b16 %v557
    %v1220 = vunpack.c.l.b16 %v558
    %v1221 = vunpack.c.h.b16 %v558
    %v1222 = vunpack.c.l.b16 %v559
    %v1223 = vunpack.c.h.b16 %v559
    %v1224 = vunpack.c.l.b16 %v560
    %v1225 = vunpack.c.h.b16 %v560
    %v1226 = vunpack.c.l.b16 %v561
    %v1227 = vunpack.c.h.b16 %v561
    %v1228 = vunpack.c.l.b16 %v562
    %v1229 = vunpack.c.h.b16 %v562
    %v1230 = vunpack.c.l.b16 %v563
    %v1231 = vunpack.c.h.b16 %v563
    %v1232 = vunpack.c.l.b16 %v564
    %v1233 = vunpack.c.h.b16 %v564
    %v1234 = vunpack.c.l.b16 %v565
    %v1235 = vunpack.c.h.b16 %v565
    %v1236 = vunpack.c.l.b16 %v566
    %v1237 = vunpack.c.h.b16 %v566
    %v1238 = vunpack.c.l.b16 %v567
    %v1239 = vunpack.c.h.b16 %v567
    %v1240 = vunpack.c.l.b16 %v568
    %v1241 = vunpack.c.h.b16 %v568
    %v1242 = vunpack.c.l.b16 %v569
    %v1243 = vunpack.c.h.b16 %v569
    %v1244 = vunpack.c.l.b16 %v570
    %v1245 = vunpack.c.h.b16 %v570
    %v1246 = vunpack.c.l.b16 %v571
    %v1247 = vunpack.c.h.b16 %v571
    %v1248 = vunpack.c.l.b16 %v572
    %v1249 = vunpack.c.h.b16 %v572
    %v1250 = vunpack.c.l.b16 %v573
    %v1251 = vunpack.c.h.b16 %v573
    %v1252 = vunpack.c.l.b16 %v574
    %v1253 = vunpack.c.h.b16 %v574
    %v1254 = vunpack.c.l.b16 %v575
    %v1255 = vunpack.c.h.b16 %v575
    %v1256 = vunpack.c.l.b16 %v576
    %v1257 = vunpack.c.h.b16 %v576
    %v1258 = vunpack.c.l.b16 %v577
    %v1259 = vunpack.c.h.b16 %v577
    %v1260 = vunpack.c.l.b16 %v578
    %v1261 = vunpack.c.h.b16 %v578
    %v1262 = vunpack.c.l.b16 %v579
    %v1263 = vunpack.c.h.b16 %v579
    %v1264 = vunpack.c.l.b16 %v580
    %v1265 = vunpack.c.h.b16 %v580
    %v1266 = vunpack.c.l.b16 %v581
    %v1267 = vunpack.c.h.b16 %v581
    %v1268 = vunpack.c.l.b16 %v582
    %v1269 = vunpack.c.h.b16 %v582
    %v1270 = vunpack.c.l.b16 %v583
    %v1271 = vunpack.c.h.b16 %v583
    %v1272 = vunpack.c.l.b16 %v584
    %v1273 = vunpack.c.h.b16 %v584
    %v1274 = vunpack.c.l.b16 %v585
    %v1275 = vunpack.c.h.b16 %v585
    %v1276 = vunpack.c.l.b16 %v586
    %v1277 = vunpack.c.h.b16 %v586
    %v1278 = vunpack.c.l.b16 %v587
    %v1279 = vunpack.c.h.b16 %v587
    %v1280 = vunpack.c.l.b16 %v588
    %v1281 = vunpack.c.h.b16 %v588
    %v1282 = vunpack.c.l.b16 %v589
    %v1283 = vunpack.c.h.b16 %v589
    %v1284 = vunpack.c.l.b16 %v590
    %v1285 = vunpack.c.h.b16 %v590
    %v1286 = vunpack.c.l.b16 %v591
    %v1287 = vunpack.c.h.b16 %v591
    %v1288 = vunpack.c.l.b16 %v592
    %v1289 = vunpack.c.h.b16 %v592
    %v1290 = vunpack.c.l.b16 %v593
    %v1291 = vunpack.c.h.b16 %v593
    %v1292 = vunpack.c.l.b16 %v594
    %v1293 = vunpack.c.h.b16 %v594
    %v1294 = vunpack.c.l.b16 %v595
    %v1295 = vunpack.c.h.b16 %v595
    %v1296 = vunpack.c.l.b16 %v596
    %v1297 = vunpack.c.h.b16 %v596
    %v1298 = vunpack.c.l.b16 %v597
    %v1299 = vunpack.c.h.b16 %v597
    %v1300 = vunpack.c.l.b16 %v598
    %v1301 = vunpack.c.h.b16 %v598
    %v1302 = vunpack.c.l.b16 %v599
    %v1303 = vunpack.c.h.b16 %v599
    %v1304 = vunpack.c.l.b16 %v600
    %v1305 = vunpack.c.h.b16 %v600
    %v1306 = vunpack.c.l.b16 %v601
    %v1307 = vunpack.c.h.b16 %v601
    %v1308 = vunpack.c.l.b16 %v602
    %v1309 = vunpack.c.h.b16 %v602
    %v1310 = vunpack.c.l.b16 %v603
    %v1311 = vunpack.c.h.b16 %v603
    %v1312 = vunpack.c.l.b16 %v604
    %v1313 = vunpack.c.h.b16 %v604
    %v1314 = vunpack.c.l.b16 %v605
    %v1315 = vunpack.c.h.b16 %v605
    %v1316 = vunpack.c.l.b16 %v606
    %v1317 = vunpack.c.h.b16 %v606
    %v1318 = vunpack.c.l.b16 %v607
    %v1319 = vunpack.c.h.b16 %v607
    %v1320 = vunpack.c.l.b16 %v608
    %v1321 = vunpack.c.h.b16 %v608
    %v1322 = vunpack.c.l.b16 %v609
    %v1323 = vunpack.c.h.b16 %v609
    %v1324 = vunpack.c.l.b16 %v610
    %v1325 = vunpack.c.h.b16 %v610
    %v1326 = vunpack.c.l.b16 %v611
    %v1327 = vunpack.c.h.b16 %v611
    %v1328 = vunpack.c.l.b16 %v612
    %v1329 = vunpack.c.h.b16 %v612
    %v1330 = vunpack.c.l.b16 %v613
    %v1331 = vunpack.c.h.b16 %v613
    %v1332 = vunpack.c.l.b16 %v614
    %v1333 = vunpack.c.h.b16 %v614
    %v1334 = vunpack.c.l.b16 %v615
    %v1335 = vunpack.c.h.b16 %v615
    %v1336 = vunpack.c.l.b16 %v616
    %v1337 = vunpack.c.h.b16 %v616
    %v1338 = vunpack.c.l.b16 %v617
    %v1339 = vunpack.c.h.b16 %v617
    %v1340 = vunpack.c.l.b16 %v618
    %v1341 = vunpack.c.h.b16 %v618
    %v1342 = vunpack.c.l.b16 %v619
    %v1343 = vunpack.c.h.b16 %v619
    %v1344 = vunpack.c.l.b16 %v620
    %v1345 = vunpack.c.h.b16 %v620
    %v1346 = vunpack.c.l.b16 %v621
    %v1347 = vunpack.c.h.b16 %v621
    %v1348 = vunpack.c.l.b16 %v622
    %v1349 = vunpack.c.h.b16 %v622
    %v1350 = vunpack.c.l.b16 %v623
    %v1351 = vunpack.c.h.b16 %v623
    %v1352 = vunpack.c.l.b16 %v624
    %v1353 = vunpack.c.h.b16 %v624
    %v1354 = vunpack.c.l.b16 %v625
    %v1355 = vunpack.c.h.b16 %v625
    %v1356 = vunpack.c.l.b16 %v626
    %v1357 = vunpack.c.h.b16 %v626
    %v1358 = vunpack.c.l.b16 %v627
    %v1359 = vunpack.c.h.b16 %v627
    %v1360 = vunpack.c.l.b16 %v628
    %v1361 = vunpack.c.h.b16 %v628
    %v1362 = vunpack.c.l.b16 %v629
    %v1363 = vunpack.c.h.b16 %v629
    %v1364 = vunpack.c.l.b16 %v630
    %v1365 = vunpack.c.h.b16 %v630
    %v1366 = vunpack.c.l.b16 %v631
    %v1367 = vunpack.c.h.b16 %v631
    %v1368 = vunpack.c.l.b16 %v632
    %v1369 = vunpack.c.h.b16 %v632
    %v1370 = vunpack.c.l.b16 %v633
    %v1371 = vunpack.c.h.b16 %v633
    %v1372 = vunpack.c.l.b16 %v634
    %v1373 = vunpack.c.h.b16 %v634
    %v1374 = vunpack.c.l.b16 %v635
    %v1375 = vunpack.c.h.b16 %v635
    %v1376 = vunpack.c.l.b16 %v636
    %v1377 = vunpack.c.h.b16 %v636
    %v1378 = vunpack.c.l.b16 %v637
    %v1379 = vunpack.c.h.b16 %v637
    %v1380 = vunpack.c.l.b16 %v638
    %v1381 = vunpack.c.h.b16 %v638
    %v1382 = vunpack.c.l.b16 %v639
    %v1383 = vunpack.c.h.b16 %v639
    %v1384 = vunpack.c.l.b16 %v640
    %v1385 = vunpack.c.h.b16 %v640
    %v1386 = vunpack.c.l.b16 %v641
    %v1387 = vunpack.c.h.b16 %v641
    %v1388 = vunpack.c.l.b16 %v642
    %v1389 = vunpack.c.h.b16 %v642
    %v1390 = vunpack.c.l.b16 %v643
    %v1391 = vunpack.c.h.b16 %v643
    %v1392 = vunpack.c.l.b16 %v644
    %v1393 = vunpack.c.h.b16 %v644
    %v1394 = vunpack.c.l.b16 %v645
    %v1395 = vunpack.c.h.b16 %v645
    %v1396 = vunpack.c.l.b16 %v646
    %v1397 = vunpack.c.h.b16 %v646
    %v1398 = vunpack.c.l.b16 %v647
    %v1399 = vunpack.c.h.b16 %v647
    %v1400 = vunpack.c.l.b16 %v648
    %v1401 = vunpack.c.h.b16 %v648
    %v1402 = vunpack.c.l.b16 %v649
    %v1403 = vunpack.c.h.b16 %v649
    %v1404 = vunpack.c.l.b16 %v650
    %v1405 = vunpack.c.h.b16 %v650
    %v1406 = vunpack.c.l.b16 %v651
    %v1407 = vunpack.c.h.b16 %v651
    %v1408 = vunpack.c.l.b16 %v652
    %v1409 = vunpack.c.h.b16 %v652
    %v1410 = vunpack.c.l.b16 %v653
    %v1411 = vunpack.c.h.b16 %v653
    %v1412 = vunpack.c.l.b16 %v654
    %v1413 = vunpack.c.h.b16 %v654
    %v1414 = vunpack.c.l.b16 %v655
    %v1415 = vunpack.c.h.b16 %v655
    %v1416 = vunpack.c.l.b16 %v656
    %v1417 = vunpack.c.h.b16 %v656
    %v1418 = vunpack.c.l.b16 %v657
    %v1419 = vunpack.c.h.b16 %v657
    %v1420 = vunpack.c.l.b16 %v658
    %v1421 = vunpack.c.h.b16 %v658
    %v1422 = vunpack.c.l.b16 %v659
    %v1423 = vunpack.c.h.b16 %v659
    %v1424 = vunpack.c.l.b16 %v660
    %v1425 = vunpack.c.h.b16 %v660
    %v1426 = vunpack.c.l.b16 %v661
    %v1427 = vunpack.c.h.b16 %v661
    %v1428 = vunpack.c.l.b16 %v662
    %v1429 = vunpack.c.h.b16 %v662
    %v1430 = vunpack.c.l.b16 %v663
    %v1431 = vunpack.c.h.b16 %v663
    %v1432 = vunpack.c.l.b16 %v664
    %v1433 = vunpack.c.h.b16 %v664
    %v1434 = vunpack.c.l.b16 %v665
    %v1435 = vunpack.c.h.b16 %v665
    %v1436 = vunpack.c.l.b16 %v666
    %v1437 = vunpack.c.h.b16 %v666
    %v1438 = vunpack.c.l.b16 %v667
    %v1439 = vunpack.c.h.b16 %v667
    %v1440 = vunpack.c.l.b16 %v668
    %v1441 = vunpack.c.h.b16 %v668
    %v1442 = vunpack.c.l.b16 %v669
    %v1443 = vunpack.c.h.b16 %v669
    %v1444 = vunpack.c.l.b16 %v670
    %v1445 = vunpack.c.h.b16 %v670
    %v1446 = vunpack.c.l.b16 %v671
    %v1447 = vunpack.c.h.b16 %v671
    %v1448 = vunpack.c.l.b16 %v672
    %v1449 = vunpack.c.h.b16 %v672
    %v1450 = vunpack.c.l.b16 %v673
    %v1451 = vunpack.c.h.b16 %v673
    %v1452 = vunpack.c.l.b16 %v674
    %v1453 = vunpack.c.h.b16 %v674
    %v1454 = vunpack.c.l.b16 %v675
    %v1455 = vunpack.c.h.b16 %v675
    %v1456 = vunpack.c.l.b16 %v676
    %v1457 = vunpack.c.h.b16 %v676
    %v1458 = vunpack.c.l.b16 %v677
    %v1459 = vunpack.c.h.b16 %v677
    %v1460 = vunpack.c.l.b16 %v678
    %v1461 = vunpack.c.h.b16 %v678
    %v1462 = vunpack.c.l.b16 %v679
    %v1463 = vunpack.c.h.b16 %v679
    %v1464 = vunpack.c.l.b16 %v680
    %v1465 = vunpack.c.h.b16 %v680
    %v1466 = vunpack.c.l.b16 %v681
    %v1467 = vunpack.c.h.b16 %v681
    %v1468 = vunpack.c.l.b16 %v682
    %v1469 = vunpack.c.h.b16 %v682
    %v1470 = vunpack.c.l.b16 %v683
    %v1471 = vunpack.c.h.b16 %v683
    %v1472 = vunpack.c.l.b16 %v684
    %v1473 = vunpack.c.h.b16 %v684
    %v1474 = vunpack.c.l.b16 %v685
    %v1475 = vunpack.c.h.b16 %v685
    %v1476 = vunpack.c.l.b16 %v686
    %v1477 = vunpack.c.h.b16 %v686
    %v1478 = vunpack.c.l.b16 %v687
    %v1479 = vunpack.c.h.b16 %v687
    %v1480 = vunpack.c.l.b16 %v688
    %v1481 = vunpack.c.h.b16 %v688
    %v1482 = vunpack.c.l.b16 %v689
    %v1483 = vunpack.c.h.b16 %v689
    %v1484 = vunpack.c.l.b16 %v690
    %v1485 = vunpack.c.h.b16 %v690
    %v1486 = vunpack.c.l.b16 %v691
    %v1487 = vunpack.c.h.b16 %v691
    %v1488 = vunpack.c.l.b16 %v692
    %v1489 = vunpack.c.h.b16 %v692
    %v1490 = vunpack.c.l.b16 %v693
    %v1491 = vunpack.c.h.b16 %v693
    %v1492 = vunpack.c.l.b16 %v694
    %v1493 = vunpack.c.h.b16 %v694
    %v1494 = vunpack.c.l.b16 %v695
    %v1495 = vunpack.c.h.b16 %v695
    %v1496 = vunpack.c.l.b16 %v696
    %v1497 = vunpack.c.h.b16 %v696
    %v1498 = vunpack.c.l.b16 %v697
    %v1499 = vunpack.c.h.b16 %v697
    %v1500 = vunpack.c.l.b16 %v698
    %v1501 = vunpack.c.h.b16 %v698
    %v1502 = vunpack.c.l.b16 %v699
    %v1503 = vunpack.c.h.b16 %v699
    %v1504 = vunpack.c.l.b16 %v700
    %v1505 = vunpack.c.h.b16 %v700
    %v1506 = vunpack.c.l.b16 %v701
    %v1507 = vunpack.c.h.b16 %v701
    %v1508 = vunpack.c.l.b16 %v702
    %v1509 = vunpack.c.h.b16 %v702
    %v1510 = vunpack.c.l.b16 %v703
    %v1511 = vunpack.c.h.b16 %v703
    %v1512 = vunpack.c.l.b16 %v704
    %v1513 = vunpack.c.h.b16 %v704
    %v1514 = vunpack.c.l.b16 %v705
    %v1515 = vunpack.c.h.b16 %v705
    %v1516 = vpack.c.b16 %v1012, %v1004
    %v1517 = vpack.c.b16 %v1013, %v1005
    %v1518 = vpack.c.b16 %v1014, %v1006
    %v1519 = vpack.c.b16 %v1015, %v1007
    %v1520 = vpack.c.b16 %v1016, %v1008
    %v1521 = vpack.c.b16 %v1017, %v1009
    %v1522 = vpack.c.b16 %v1018, %v1010
    %v1523 = vpack.c.b16 %v1019, %v1011
    %v1524 = vpack.c.b16 %v1028, %v1020
    %v1525 = vpack.c.b16 %v1029, %v1021
    %v1526 = vpack.c.b16 %v1030, %v1022
    %v1527 = vpack.c.b16 %v1031, %v1023
    %v1528 = vpack.c.b16 %v1032, %v1024
    %v1529 = vpack.c.b16 %v1033, %v1025
    %v1530 = vpack.c.b16 %v1034, %v1026
    %v1531 = vpack.c.b16 %v1035, %v1027
    %v1532 = vpack.c.b16 %v1044, %v1036
    %v1533 = vpack.c.b16 %v1045, %v1037
    %v1534 = vpack.c.b16 %v1046, %v1038
    %v1535 = vpack.c.b16 %v1047, %v1039
    %v1536 = vpack.c.b16 %v1048, %v1040
    %v1537 = vpack.c.b16 %v1049, %v1041
    %v1538 = vpack.c.b16 %v1050, %v1042
    %v1539 = vpack.c.b16 %v1051, %v1043
    %v1540 = vpack.c.b16 %v1060, %v1052
    %v1541 = vpack.c.b16 %v1061, %v1053
    %v1542 = vpack.c.b16 %v1062, %v1054
    %v1543 = vpack.c.b16 %v1063, %v1055
    %v1544 = vpack.c.b16 %v1064, %v1056
    %v1545 = vpack.c.b16 %v1065, %v1057
    %v1546 = vpack.c.b16 %v1066, %v1058
    %v1547 = vpack.c.b16 %v1067, %v1059
    %v1548 = vpack.c.b16 %v1076, %v1068
    %v1549 = vpack.c.b16 %v1077, %v1069
    %v1550 = vpack.c.b16 %v1078, %v1070
    %v1551 = vpack.c.b16 %v1079, %v1071
    %v1552 = vpack.c.b16 %v1080, %v1072
    %v1553 = vpack.c.b16 %v1081, %v1073
    %v1554 = vpack.c.b16 %v1082, %v1074
    %v1555 = vpack.c.b16 %v1083, %v1075
    %v1556 = vpack.c.b16 %v1092, %v1084
    %v1557 = vpack.c.b16 %v1093, %v1085
    %v1558 = vpack.c.b16 %v1094, %v1086
    %v1559 = vpack.c.b16 %v1095, %v1087
    %v1560 = vpack.c.b16 %v1096, %v1088
    %v1561 = vpack.c.b16 %v1097, %v1089
    %v1562 = vpack.c.b16 %v1098, %v1090
    %v1563 = vpack.c.b16 %v1099, %v1091
    %v1564 = vpack.c.b16 %v1108, %v1100
    %v1565 = vpack.c.b16 %v1109, %v1101
    %v1566 = vpack.c.b16 %v1110, %v1102
    %v1567 = vpack.c.b16 %v1111, %v1103
    %v1568 = vpack.c.b16 %v1112, %v1104
    %v1569 = vpack.c.b16 %v1113, %v1105
    %v1570 = vpack.c.b16 %v1114, %v1106
    %v1571 = vpack.c.b16 %v1115, %v1107
    %v1572 = vpack.c.b16 %v1124, %v1116
    %v1573 = vpack.c.b16 %v1125, %v1117
    %v1574 = vpack.c.b16 %v1126, %v1118
    %v1575 = vpack.c.b16 %v1127, %v1119
    %v1576 = vpack.c.b16 %v1128, %v1120
    %v1577 = vpack.c.b16 %v1129, %v1121
    %v1578 = vpack.c.b16 %v1130, %v1122
    %v1579 = vpack.c.b16 %v1131, %v1123
    %v1580 = vpack.c.b16 %v1140, %v1132
    %v1581 = vpack.c.b16 %v1141, %v1133
    %v1582 = vpack.c.b16 %v1142, %v1134
    %v1583 = vpack.c.b16 %v1143, %v1135
    %v1584 = vpack.c.b16 %v1144, %v1136
    %v1585 = vpack.c.b16 %v1145, %v1137
    %v1586 = vpack.c.b16 %v1146, %v1138
    %v1587 = vpack.c.b16 %v1147, %v1139
    %v1588 = vpack.c.b16 %v1156, %v1148
    %v1589 = vpack.c.b16 %v1157, %v1149
    %v1590 = vpack.c.b16 %v1158, %v1150
    %v1591 = vpack.c.b16 %v1159, %v1151
    %v1592 = vpack.c.b16 %v1160, %v1152
    %v1593 = vpack.c.b16 %v1161, %v1153
    %v1594 = vpack.c.b16 %v1162, %v1154
    %v1595 = vpack.c.b16 %v1163, %v1155
    %v1596 = vpack.c.b16 %v1172, %v1164
    %v1597 = vpack.c.b16 %v1173, %v1165
    %v1598 = vpack.c.b16 %v1174, %v1166
    %v1599 = vpack.c.b16 %v1175, %v1167
    %v1600 = vpack.c.b16 %v1176, %v1168
    %v1601 = vpack.c.b16 %v1177, %v1169
    %v1602 = vpack.c.b16 %v1178, %v1170
    %v1603 = vpack.c.b16 %v1179, %v1171
    %v1604 = vpack.c.b16 %v1188, %v1180
    %v1605 = vpack.c.b16 %v1189, %v1181
    %v1606 = vpack.c.b16 %v1190, %v1182
    %v1607 = vpack.c.b16 %v1191, %v1183
    %v1608 = vpack.c.b16 %v1192, %v1184
    %v1609 = vpack.c.b16 %v1193, %v1185
    %v1610 = vpack.c.b16 %v1194, %v1186
    %v1611 = vpack.c.b16 %v1195, %v1187
    %v1612 = vpack.c.b16 %v1204, %v1196
    %v1613 = vpack.c.b16 %v1205, %v1197
    %v1614 = vpack.c.b16 %v1206, %v1198
    %v1615 = vpack.c.b16 %v1207, %v1199
    %v1616 = vpack.c.b16 %v1208, %v1200
    %v1617 = vpack.c.b16 %v1209, %v1201
    %v1618 = vpack.c.b16 %v1210, %v1202
    %v1619 = vpack.c.b16 %v1211, %v1203
    %v1620 = vpack.c.b16 %v1220, %v1212
    %v1621 = vpack.c.b16 %v1221, %v1213
    %v1622 = vpack.c.b16 %v1222, %v1214
    %v1623 = vpack.c.b16 %v1223, %v1215
    %v1624 = vpack.c.b16 %v1224, %v1216
    %v1625 = vpack.c.b16 %v1225, %v1217
    %v1626 = vpack.c.b16 %v1226, %v1218
    %v1627 = vpack.c.b16 %v1227, %v1219
    %v1628 = vpack.c.b16 %v1236, %v1228
    %v1629 = vpack.c.b16 %v1237, %v1229
    %v1630 = vpack.c.b16 %v1238, %v1230
    %v1631 = vpack.c.b16 %v1239, %v1231
    %v1632 = vpack.c.b16 %v1240, %v1232
    %v1633 = vpack.c.b16 %v1241, %v1233
    %v1634 = vpack.c.b16 %v1242, %v1234
    %v1635 = vpack.c.b16 %v1243, %v1235
    %v1636 = vpack.c.b16 %v1252, %v1244
    %v1637 = vpack.c.b16 %v1253, %v1245
    %v1638 = vpack.c.b16 %v1254, %v1246
    %v1639 = vpack.c.b16 %v1255, %v1247
    %v1640 = vpack.c.b16 %v1256, %v1248
    %v1641 = vpack.c.b16 %v1257, %v1249
    %v1642 = vpack.c.b16 %v1258, %v1250
    %v1643 = vpack.c.b16 %v1259, %v1251
    %v1644 = vpack.c.b16 %v1268, %v1260
    %v1645 = vpack.c.b16 %v1269, %v1261
    %v1646 = vpack.c.b16 %v1270, %v1262
    %v1647 = vpack.c.b16 %v1271, %v1263
    %v1648 = vpack.c.b16 %v1272, %v1264
    %v1649 = vpack.c.b16 %v1273, %v1265
    %v1650 = vpack.c.b16 %v1274, %v1266
    %v1651 = vpack.c.b16 %v1275, %v1267
    %v1652 = vpack.c.b16 %v1284, %v1276
    %v1653 = vpack.c.b16 %v1285, %v1277
    %v1654 = vpack.c.b16 %v1286, %v1278
    %v1655 = vpack.c.b16 %v1287, %v1279
    %v1656 = vpack.c.b16 %v1288, %v1280
    %v1657 = vpack.c.b16 %v1289, %v1281
    %v1658 = vpack.c.b16 %v1290, %v1282
    %v1659 = vpack.c.b16 %v1291, %v1283
    %v1660 = vpack.c.b16 %v1300, %v1292
    %v1661 = vpack.c.b16 %v1301, %v1293
    %v1662 = vpack.c.b16 %v1302, %v1294
    %v1663 = vpack.c.b16 %v1303, %v1295
    %v1664 = vpack.c.b16 %v1304, %v1296
    %v1665 = vpack.c.b16 %v1305, %v1297
    %v1666 = vpack.c.b16 %v1306, %v1298
    %v1667 = vpack.c.b16 %v1307, %v1299
    %v1668 = vpack.c.b16 %v1316, %v1308
    %v1669 = vpack.c.b16 %v1317, %v1309
    %v1670 = vpack.c.b16 %v1318, %v1310
    %v1671 = vpack.c.b16 %v1319, %v1311
    %v1672 = vpack.c.b16 %v1320, %v1312
    %v1673 = vpack.c.b16 %v1321, %v1313
    %v1674 = vpack.c.b16 %v1322, %v1314
    %v1675 = vpack.c.b16 %v1323, %v1315
    %v1676 = vpack.c.b16 %v1332, %v1324
    %v1677 = vpack.c.b16 %v1333, %v1325
    %v1678 = vpack.c.b16 %v1334, %v1326
    %v1679 = vpack.c.b16 %v1335, %v1327
    %v1680 = vpack.c.b16 %v1336, %v1328
    %v1681 = vpack.c.b16 %v1337, %v1329
    %v1682 = vpack.c.b16 %v1338, %v1330
    %v1683 = vpack.c.b16 %v1339, %v1331
    %v1684 = vpack.c.b16 %v1348, %v1340
    %v1685 = vpack.c.b16 %v1349, %v1341
    %v1686 = vpack.c.b16 %v1350, %v1342
    %v1687 = vpack.c.b16 %v1351, %v1343
    %v1688 = vpack.c.b16 %v1352, %v1344
    %v1689 = vpack.c.b16 %v1353, %v1345
    %v1690 = vpack.c.b16 %v1354, %v1346
    %v1691 = vpack.c.b16 %v1355, %v1347
    %v1692 = vpack.c.b16 %v1364, %v1356
    %v1693 = vpack.c.b16 %v1365, %v1357
    %v1694 = vpack.c.b16 %v1366, %v1358
    %v1695 = vpack.c.b16 %v1367, %v1359
    %v1696 = vpack.c.b16 %v1368, %v1360
    %v1697 = vpack.c.b16 %v1369, %v1361
    %v1698 = vpack.c.b16 %v1370, %v1362
    %v1699 = vpack.c.b16 %v1371, %v1363
    %v1700 = vpack.c.b16 %v1380, %v1372
    %v1701 = vpack.c.b16 %v1381, %v1373
    %v1702 = vpack.c.b16 %v1382, %v1374
    %v1703 = vpack.c.b16 %v1383, %v1375
    %v1704 = vpack.c.b16 %v1384, %v1376
    %v1705 = vpack.c.b16 %v1385, %v1377
    %v1706 = vpack.c.b16 %v1386, %v1378
    %v1707 = vpack.c.b16 %v1387, %v1379
    %v1708 = vpack.c.b16 %v1396, %v1388
    %v1709 = vpack.c.b16 %v1397, %v1389
    %v1710 = vpack.c.b16 %v1398, %v1390
    %v1711 = vpack.c.b16 %v1399, %v1391
    %v1712 = vpack.c.b16 %v1400, %v1392
    %v1713 = vpack.c.b16 %v1401, %v1393
    %v1714 = vpack.c.b16 %v1402, %v1394
    %v1715 = vpack.c.b16 %v1403, %v1395
    %v1716 = vpack.c.b16 %v1412, %v1404
    %v1717 = vpack.c.b16 %v1413, %v1405
    %v1718 = vpack.c.b16 %v1414, %v1406
    %v1719 = vpack.c.b16 %v1415, %v1407
    %v1720 = vpack.c.b16 %v1416, %v1408
    %v1721 = vpack.c.b16 %v1417, %v1409
    %v1722 = vpack.c.b16 %v1418, %v1410
    %v1723 = vpack.c.b16 %v1419, %v1411
    %v1724 = vpack.c.b16 %v1428, %v1420
    %v1725 = vpack.c.b16 %v1429, %v1421
    %v1726 = vpack.c.b16 %v1430, %v1422
    %v1727 = vpack.c.b16 %v1431, %v1423
    %v1728 = vpack.c.b16 %v1432, %v1424
    %v1729 = vpack.c.b16 %v1433, %v1425
    %v1730 = vpack.c.b16 %v1434, %v1426
    %v1731 = vpack.c.b16 %v1435, %v1427
    %v1732 = vpack.c.b16 %v1444, %v1436
    %v1733 = vpack.c.b16 %v1445, %v1437
    %v1734 = vpack.c.b16 %v1446, %v1438
    %v1735 = vpack.c.b16 %v1447, %v1439
    %v1736 = vpack.c.b16 %v1448, %v1440
    %v1737 = vpack.c.b16 %v1449, %v1441
    %v1738 = vpack.c.b16 %v1450, %v1442
    %v1739 = vpack.c.b16 %v1451, %v1443
    %v1740 = vpack.c.b16 %v1460, %v1452
    %v1741 = vpack.c.b16 %v1461, %v1453
    %v1742 = vpack.c.b16 %v1462, %v1454
    %v1743 = vpack.c.b16 %v1463, %v1455
    %v1744 = vpack.c.b16 %v1464, %v1456
    %v1745 = vpack.c.b16 %v1465, %v1457
    %v1746 = vpack.c.b16 %v1466, %v1458
    %v1747 = vpack.c.b16 %v1467, %v1459
    %v1748 = vpack.c.b16 %v1476, %v1468
    %v1749 = vpack.c.b16 %v1477, %v1469
    %v1750 = vpack.c.b16 %v1478, %v1470
    %v1751 = vpack.c.b16 %v1479, %v1471
    %v1752 = vpack.c.b16 %v1480, %v1472
    %v1753 = vpack.c.b16 %v1481, %v1473
    %v1754 = vpack.c.b16 %v1482, %v1474
    %v1755 = vpack.c.b16 %v1483, %v1475
    %v1756 = vpack.c.b16 %v1492, %v1484
    %v1757 = vpack.c.b16 %v1493, %v1485
    %v1758 = vpack.c.b16 %v1494, %v1486
    %v1759 = vpack.c.b16 %v1495, %v1487
    %v1760 = vpack.c.b16 %v1496, %v1488
    %v1761 = vpack.c.b16 %v1497, %v1489
    %v1762 = vpack.c.b16 %v1498, %v1490
    %v1763 = vpack.c.b16 %v1499, %v1491
    %v1764 = vpack.c.b16 %v1508, %v1500
    %v1765 = vpack.c.b16 %v1509, %v1501
    %v1766 = vpack.c.b16 %v1510, %v1502
    %v1767 = vpack.c.b16 %v1511, %v1503
    %v1768 = vpack.c.b16 %v1512, %v1504
    %v1769 = vpack.c.b16 %v1513, %v1505
    %v1770 = vpack.c.b16 %v1514, %v1506
    %v1771 = vpack.c.b16 %v1515, %v1507
    %2028 = vmatprep.subr.bf16.mxu0 %v1573
    %2029 = vmatpush1.bf16.msra.mxu0 %v1572
    %2030 = vmatprep.subr.bf16.mxu0 %v1565
    %2031 = vmatpush1.bf16.msra.mxu0 %v1564
    %2032 = vmatprep.subr.bf16.mxu0 %v1557
    %2033 = vmatpush1.bf16.msra.mxu0 %v1556
    %2034 = vmatprep.subr.bf16.mxu0 %v1549
    %2035 = vmatpush1.bf16.msra.mxu0 %v1548
    %2036 = vmatprep.subr.bf16.mxu0 %v1541
    %2037 = vmatpush1.bf16.msra.mxu0 %v1540
    %2038 = vmatprep.subr.bf16.mxu0 %v1533
    %2039 = vmatpush1.bf16.msra.mxu0 %v1532
    %2040 = vmatprep.subr.bf16.mxu0 %v1525
    %2041 = vmatpush1.bf16.msra.mxu0 %v1524
    %2042 = vmatprep.subr.bf16.mxu0 %v1517
    %2043 = vmatpush1.bf16.msra.mxu0 %v1516
    %2044 = vmatprep.subr.bf16.mxu0 %v1637
    %2045 = vmatpush2.bf16.msra.mxu0 %v1636
    %2046 = vmatprep.subr.bf16.mxu0 %v1629
    %2047 = vmatpush2.bf16.msra.mxu0 %v1628
    %2048 = vmatprep.subr.bf16.mxu0 %v1621
    %2049 = vmatpush2.bf16.msra.mxu0 %v1620
    %2050 = vmatprep.subr.bf16.mxu0 %v1613
    %2051 = vmatpush2.bf16.msra.mxu0 %v1612
    %2052 = vmatprep.subr.bf16.mxu0 %v1605
    %2053 = vmatpush2.bf16.msra.mxu0 %v1604
    %2054 = vmatprep.subr.bf16.mxu0 %v1597
    %2055 = vmatpush2.bf16.msra.mxu0 %v1596
    %2056 = vmatprep.subr.bf16.mxu0 %v1589
    %2057 = vmatpush2.bf16.msra.mxu0 %v1588
    %2058 = vmatprep.subr.bf16.mxu0 %v1581
    %2059 = vmatpush2.bf16.msra.mxu0 %v1580
    %2060 = vmatprep.mubr.bf16.mxu0 %v447
    %2061 = vmatmul.mubr.bf16.gmra.mxu0 %v446
    %v2062 = vpop.f32.mrf.mxu0
    %v2063 = vadd.f32 %v711, %v2062
    %v2064 = vpop.f32.mrf.mxu0
    %v2065 = vadd.f32 %v715, %v2064
    %v2066 = vpop.f32.mrf.mxu0
    %v2067 = vadd.f32 %v711, %v2066
    %v2068 = vpop.f32.mrf.mxu0
    %v2069 = vadd.f32 %v715, %v2068
    %2070 = vdwg.mxu0
    %2071 = vmatprep.subr.bf16.mxu0 %v1701
    %2072 = vmatpush1.bf16.msra.mxu0 %v1700
    %2073 = vmatprep.subr.bf16.mxu0 %v1693
    %2074 = vmatpush1.bf16.msra.mxu0 %v1692
    %2075 = vmatprep.subr.bf16.mxu0 %v1685
    %2076 = vmatpush1.bf16.msra.mxu0 %v1684
    %2077 = vmatprep.subr.bf16.mxu0 %v1677
    %2078 = vmatpush1.bf16.msra.mxu0 %v1676
    %2079 = vmatprep.subr.bf16.mxu0 %v1669
    %2080 = vmatpush1.bf16.msra.mxu0 %v1668
    %2081 = vmatprep.subr.bf16.mxu0 %v1661
    %2082 = vmatpush1.bf16.msra.mxu0 %v1660
    %2083 = vmatprep.subr.bf16.mxu0 %v1653
    %2084 = vmatpush1.bf16.msra.mxu0 %v1652
    %2085 = vmatprep.subr.bf16.mxu0 %v1645
    %2086 = vmatpush1.bf16.msra.mxu0 %v1644
    %2087 = vmatprep.subr.bf16.mxu0 %v1765
    %2088 = vmatpush2.bf16.msra.mxu0 %v1764
    %2089 = vmatprep.subr.bf16.mxu0 %v1757
    %2090 = vmatpush2.bf16.msra.mxu0 %v1756
    %2091 = vmatprep.subr.bf16.mxu0 %v1749
    %2092 = vmatpush2.bf16.msra.mxu0 %v1748
    %2093 = vmatprep.subr.bf16.mxu0 %v1741
    %2094 = vmatpush2.bf16.msra.mxu0 %v1740
    %2095 = vmatprep.subr.bf16.mxu0 %v1733
    %2096 = vmatpush2.bf16.msra.mxu0 %v1732
    %2097 = vmatprep.subr.bf16.mxu0 %v1725
    %2098 = vmatpush2.bf16.msra.mxu0 %v1724
    %2099 = vmatprep.subr.bf16.mxu0 %v1717
    %2100 = vmatpush2.bf16.msra.mxu0 %v1716
    %2101 = vmatprep.subr.bf16.mxu0 %v1709
    %2102 = vmatpush2.bf16.msra.mxu0 %v1708
    %2103 = vmatprep.mubr.bf16.mxu0 %v449
    %2104 = vmatmul.mubr.bf16.gmra.mxu0 %v448
    %v2105 = vpop.f32.mrf.mxu0
    %v2106 = vadd.f32 %v2063, %v2105
    %v2107 = vpop.f32.mrf.mxu0
    %v2108 = vadd.f32 %v2065, %v2107
    %v2109 = vpop.f32.mrf.mxu0
    %v2110 = vadd.f32 %v2067, %v2109
    %v2111 = vpop.f32.mrf.mxu0
    %v2112 = vadd.f32 %v2069, %v2111
    %2113 = vdwg.mxu0
    %2114 = vmatprep.subr.bf16.mxu0 %v1575
    %2115 = vmatpush1.bf16.msra.mxu0 %v1574
    %2116 = vmatprep.subr.bf16.mxu0 %v1567
    %2117 = vmatpush1.bf16.msra.mxu0 %v1566
    %2118 = vmatprep.subr.bf16.mxu0 %v1559
    %2119 = vmatpush1.bf16.msra.mxu0 %v1558
    %2120 = vmatprep.subr.bf16.mxu0 %v1551
    %2121 = vmatpush1.bf16.msra.mxu0 %v1550
    %2122 = vmatprep.subr.bf16.mxu0 %v1543
    %2123 = vmatpush1.bf16.msra.mxu0 %v1542
    %2124 = vmatprep.subr.bf16.mxu0 %v1535
    %2125 = vmatpush1.bf16.msra.mxu0 %v1534
    %2126 = vmatprep.subr.bf16.mxu0 %v1527
    %2127 = vmatpush1.bf16.msra.mxu0 %v1526
    %2128 = vmatprep.subr.bf16.mxu0 %v1519
    %2129 = vmatpush1.bf16.msra.mxu0 %v1518
    %2130 = vmatprep.subr.bf16.mxu0 %v1639
    %2131 = vmatpush2.bf16.msra.mxu0 %v1638
    %2132 = vmatprep.subr.bf16.mxu0 %v1631
    %2133 = vmatpush2.bf16.msra.mxu0 %v1630
    %2134 = vmatprep.subr.bf16.mxu0 %v1623
    %2135 = vmatpush2.bf16.msra.mxu0 %v1622
    %2136 = vmatprep.subr.bf16.mxu0 %v1615
    %2137 = vmatpush2.bf16.msra.mxu0 %v1614
    %2138 = vmatprep.subr.bf16.mxu0 %v1607
    %2139 = vmatpush2.bf16.msra.mxu0 %v1606
    %2140 = vmatprep.subr.bf16.mxu0 %v1599
    %2141 = vmatpush2.bf16.msra.mxu0 %v1598
    %2142 = vmatprep.subr.bf16.mxu0 %v1591
    %2143 = vmatpush2.bf16.msra.mxu0 %v1590
    %2144 = vmatprep.subr.bf16.mxu0 %v1583
    %2145 = vmatpush2.bf16.msra.mxu0 %v1582
    %2146 = vmatprep.mubr.bf16.mxu0 %v447
    %2147 = vmatmul.mubr.bf16.gmra.mxu0 %v446
    %v2148 = vpop.f32.mrf.mxu0
    %v2149 = vadd.f32 %v719, %v2148
    %v2150 = vpop.f32.mrf.mxu0
    %v2151 = vadd.f32 %v723, %v2150
    %v2152 = vpop.f32.mrf.mxu0
    %v2153 = vadd.f32 %v719, %v2152
    %v2154 = vpop.f32.mrf.mxu0
    %v2155 = vadd.f32 %v723, %v2154
    %2156 = vdwg.mxu0
    %2157 = vmatprep.subr.bf16.mxu0 %v1703
    %2158 = vmatpush1.bf16.msra.mxu0 %v1702
    %2159 = vmatprep.subr.bf16.mxu0 %v1695
    %2160 = vmatpush1.bf16.msra.mxu0 %v1694
    %2161 = vmatprep.subr.bf16.mxu0 %v1687
    %2162 = vmatpush1.bf16.msra.mxu0 %v1686
    %2163 = vmatprep.subr.bf16.mxu0 %v1679
    %2164 = vmatpush1.bf16.msra.mxu0 %v1678
    %2165 = vmatprep.subr.bf16.mxu0 %v1671
    %2166 = vmatpush1.bf16.msra.mxu0 %v1670
    %2167 = vmatprep.subr.bf16.mxu0 %v1663
    %2168 = vmatpush1.bf16.msra.mxu0 %v1662
    %2169 = vmatprep.subr.bf16.mxu0 %v1655
    %2170 = vmatpush1.bf16.msra.mxu0 %v1654
    %2171 = vmatprep.subr.bf16.mxu0 %v1647
    %2172 = vmatpush1.bf16.msra.mxu0 %v1646
    %2173 = vmatprep.subr.bf16.mxu0 %v1767
    %2174 = vmatpush2.bf16.msra.mxu0 %v1766
    %2175 = vmatprep.subr.bf16.mxu0 %v1759
    %2176 = vmatpush2.bf16.msra.mxu0 %v1758
    %2177 = vmatprep.subr.bf16.mxu0 %v1751
    %2178 = vmatpush2.bf16.msra.mxu0 %v1750
    %2179 = vmatprep.subr.bf16.mxu0 %v1743
    %2180 = vmatpush2.bf16.msra.mxu0 %v1742
    %2181 = vmatprep.subr.bf16.mxu0 %v1735
    %2182 = vmatpush2.bf16.msra.mxu0 %v1734
    %2183 = vmatprep.subr.bf16.mxu0 %v1727
    %2184 = vmatpush2.bf16.msra.mxu0 %v1726
    %2185 = vmatprep.subr.bf16.mxu0 %v1719
    %2186 = vmatpush2.bf16.msra.mxu0 %v1718
    %2187 = vmatprep.subr.bf16.mxu0 %v1711
    %2188 = vmatpush2.bf16.msra.mxu0 %v1710
    %2189 = vmatprep.mubr.bf16.mxu0 %v449
    %2190 = vmatmul.mubr.bf16.gmra.mxu0 %v448
    %v2191 = vpop.f32.mrf.mxu0
    %v2192 = vadd.f32 %v2149, %v2191
    %v2193 = vpop.f32.mrf.mxu0
    %v2194 = vadd.f32 %v2151, %v2193
    %v2195 = vpop.f32.mrf.mxu0
    %v2196 = vadd.f32 %v2153, %v2195
    %v2197 = vpop.f32.mrf.mxu0
    %v2198 = vadd.f32 %v2155, %v2197
    %2199 = vdwg.mxu0
    %2200 = vmatprep.subr.bf16.mxu0 %v1577
    %2201 = vmatpush1.bf16.msra.mxu0 %v1576
    %2202 = vmatprep.subr.bf16.mxu0 %v1569
    %2203 = vmatpush1.bf16.msra.mxu0 %v1568
    %2204 = vmatprep.subr.bf16.mxu0 %v1561
    %2205 = vmatpush1.bf16.msra.mxu0 %v1560
    %2206 = vmatprep.subr.bf16.mxu0 %v1553
    %2207 = vmatpush1.bf16.msra.mxu0 %v1552
    %2208 = vmatprep.subr.bf16.mxu0 %v1545
    %2209 = vmatpush1.bf16.msra.mxu0 %v1544
    %2210 = vmatprep.subr.bf16.mxu0 %v1537
    %2211 = vmatpush1.bf16.msra.mxu0 %v1536
    %2212 = vmatprep.subr.bf16.mxu0 %v1529
    %2213 = vmatpush1.bf16.msra.mxu0 %v1528
    %2214 = vmatprep.subr.bf16.mxu0 %v1521
    %2215 = vmatpush1.bf16.msra.mxu0 %v1520
    %2216 = vmatprep.subr.bf16.mxu0 %v1641
    %2217 = vmatpush2.bf16.msra.mxu0 %v1640
    %2218 = vmatprep.subr.bf16.mxu0 %v1633
    %2219 = vmatpush2.bf16.msra.mxu0 %v1632
    %2220 = vmatprep.subr.bf16.mxu0 %v1625
    %2221 = vmatpush2.bf16.msra.mxu0 %v1624
    %2222 = vmatprep.subr.bf16.mxu0 %v1617
    %2223 = vmatpush2.bf16.msra.mxu0 %v1616
    %2224 = vmatprep.subr.bf16.mxu0 %v1609
    %2225 = vmatpush2.bf16.msra.mxu0 %v1608
    %2226 = vmatprep.subr.bf16.mxu0 %v1601
    %2227 = vmatpush2.bf16.msra.mxu0 %v1600
    %2228 = vmatprep.subr.bf16.mxu0 %v1593
    %2229 = vmatpush2.bf16.msra.mxu0 %v1592
    %2230 = vmatprep.subr.bf16.mxu0 %v1585
    %2231 = vmatpush2.bf16.msra.mxu0 %v1584
    %2232 = vmatprep.mubr.bf16.mxu0 %v447
    %2233 = vmatmul.mubr.bf16.gmra.mxu0 %v446
    %v2234 = vpop.f32.mrf.mxu0
    %v2235 = vadd.f32 %v727, %v2234
    %v2236 = vpop.f32.mrf.mxu0
    %v2237 = vadd.f32 %v731, %v2236
    %v2238 = vpop.f32.mrf.mxu0
    %v2239 = vadd.f32 %v727, %v2238
    %v2240 = vpop.f32.mrf.mxu0
    %v2241 = vadd.f32 %v731, %v2240
    %2242 = vdwg.mxu0
    %2243 = vmatprep.subr.bf16.mxu0 %v1705
    %2244 = vmatpush1.bf16.msra.mxu0 %v1704
    %2245 = vmatprep.subr.bf16.mxu0 %v1697
    %2246 = vmatpush1.bf16.msra.mxu0 %v1696
    %2247 = vmatprep.subr.bf16.mxu0 %v1689
    %2248 = vmatpush1.bf16.msra.mxu0 %v1688
    %2249 = vmatprep.subr.bf16.mxu0 %v1681
    %2250 = vmatpush1.bf16.msra.mxu0 %v1680
    %2251 = vmatprep.subr.bf16.mxu0 %v1673
    %2252 = vmatpush1.bf16.msra.mxu0 %v1672
    %2253 = vmatprep.subr.bf16.mxu0 %v1665
    %2254 = vmatpush1.bf16.msra.mxu0 %v1664
    %2255 = vmatprep.subr.bf16.mxu0 %v1657
    %2256 = vmatpush1.bf16.msra.mxu0 %v1656
    %2257 = vmatprep.subr.bf16.mxu0 %v1649
    %2258 = vmatpush1.bf16.msra.mxu0 %v1648
    %2259 = vmatprep.subr.bf16.mxu0 %v1769
    %2260 = vmatpush2.bf16.msra.mxu0 %v1768
    %2261 = vmatprep.subr.bf16.mxu0 %v1761
    %2262 = vmatpush2.bf16.msra.mxu0 %v1760
    %2263 = vmatprep.subr.bf16.mxu0 %v1753
    %2264 = vmatpush2.bf16.msra.mxu0 %v1752
    %2265 = vmatprep.subr.bf16.mxu0 %v1745
    %2266 = vmatpush2.bf16.msra.mxu0 %v1744
    %2267 = vmatprep.subr.bf16.mxu0 %v1737
    %2268 = vmatpush2.bf16.msra.mxu0 %v1736
    %2269 = vmatprep.subr.bf16.mxu0 %v1729
    %2270 = vmatpush2.bf16.msra.mxu0 %v1728
    %2271 = vmatprep.subr.bf16.mxu0 %v1721
    %2272 = vmatpush2.bf16.msra.mxu0 %v1720
    %2273 = vmatprep.subr.bf16.mxu0 %v1713
    %2274 = vmatpush2.bf16.msra.mxu0 %v1712
    %2275 = vmatprep.mubr.bf16.mxu0 %v449
    %2276 = vmatmul.mubr.bf16.gmra.mxu0 %v448
    %v2277 = vpop.f32.mrf.mxu0
    %v2278 = vadd.f32 %v2235, %v2277
    %v2279 = vpop.f32.mrf.mxu0
    %v2280 = vadd.f32 %v2237, %v2279
    %v2281 = vpop.f32.mrf.mxu0
    %v2282 = vadd.f32 %v2239, %v2281
    %v2283 = vpop.f32.mrf.mxu0
    %v2284 = vadd.f32 %v2241, %v2283
    %2285 = vdwg.mxu0
    %2286 = vmatprep.subr.bf16.mxu0 %v1579
    %2287 = vmatpush1.bf16.msra.mxu0 %v1578
    %2288 = vmatprep.subr.bf16.mxu0 %v1571
    %2289 = vmatpush1.bf16.msra.mxu0 %v1570
    %2290 = vmatprep.subr.bf16.mxu0 %v1563
    %2291 = vmatpush1.bf16.msra.mxu0 %v1562
    %2292 = vmatprep.subr.bf16.mxu0 %v1555
    %2293 = vmatpush1.bf16.msra.mxu0 %v1554
    %2294 = vmatprep.subr.bf16.mxu0 %v1547
    %2295 = vmatpush1.bf16.msra.mxu0 %v1546
    %2296 = vmatprep.subr.bf16.mxu0 %v1539
    %2297 = vmatpush1.bf16.msra.mxu0 %v1538
    %2298 = vmatprep.subr.bf16.mxu0 %v1531
    %2299 = vmatpush1.bf16.msra.mxu0 %v1530
    %2300 = vmatprep.subr.bf16.mxu0 %v1523
    %2301 = vmatpush1.bf16.msra.mxu0 %v1522
    %2302 = vmatprep.subr.bf16.mxu0 %v1643
    %2303 = vmatpush2.bf16.msra.mxu0 %v1642
    %2304 = vmatprep.subr.bf16.mxu0 %v1635
    %2305 = vmatpush2.bf16.msra.mxu0 %v1634
    %2306 = vmatprep.subr.bf16.mxu0 %v1627
    %2307 = vmatpush2.bf16.msra.mxu0 %v1626
    %2308 = vmatprep.subr.bf16.mxu0 %v1619
    %2309 = vmatpush2.bf16.msra.mxu0 %v1618
    %2310 = vmatprep.subr.bf16.mxu0 %v1611
    %2311 = vmatpush2.bf16.msra.mxu0 %v1610
    %2312 = vmatprep.subr.bf16.mxu0 %v1603
    %2313 = vmatpush2.bf16.msra.mxu0 %v1602
    %2314 = vmatprep.subr.bf16.mxu0 %v1595
    %2315 = vmatpush2.bf16.msra.mxu0 %v1594
    %2316 = vmatprep.subr.bf16.mxu0 %v1587
    %2317 = vmatpush2.bf16.msra.mxu0 %v1586
    %2318 = vmatprep.mubr.bf16.mxu0 %v447
    %2319 = vmatmul.mubr.bf16.gmra.mxu0 %v446
    %v2320 = vpop.f32.mrf.mxu0
    %v2321 = vadd.f32 %v735, %v2320
    %v2322 = vpop.f32.mrf.mxu0
    %v2323 = vadd.f32 %v739, %v2322
    %v2324 = vpop.f32.mrf.mxu0
    %v2325 = vadd.f32 %v735, %v2324
    %v2326 = vpop.f32.mrf.mxu0
    %v2327 = vadd.f32 %v739, %v2326
    %2328 = vdwg.mxu0
    %2329 = vmatprep.subr.bf16.mxu0 %v1707
    %2330 = vmatpush1.bf16.msra.mxu0 %v1706
    %2331 = vmatprep.subr.bf16.mxu0 %v1699
    %2332 = vmatpush1.bf16.msra.mxu0 %v1698
    %2333 = vmatprep.subr.bf16.mxu0 %v1691
    %2334 = vmatpush1.bf16.msra.mxu0 %v1690
    %2335 = vmatprep.subr.bf16.mxu0 %v1683
    %2336 = vmatpush1.bf16.msra.mxu0 %v1682
    %2337 = vmatprep.subr.bf16.mxu0 %v1675
    %2338 = vmatpush1.bf16.msra.mxu0 %v1674
    %2339 = vmatprep.subr.bf16.mxu0 %v1667
    %2340 = vmatpush1.bf16.msra.mxu0 %v1666
    %2341 = vmatprep.subr.bf16.mxu0 %v1659
    %2342 = vmatpush1.bf16.msra.mxu0 %v1658
    %2343 = vmatprep.subr.bf16.mxu0 %v1651
    %2344 = vmatpush1.bf16.msra.mxu0 %v1650
    %2345 = vmatprep.subr.bf16.mxu0 %v1771
    %2346 = vmatpush2.bf16.msra.mxu0 %v1770
    %2347 = vmatprep.subr.bf16.mxu0 %v1763
    %2348 = vmatpush2.bf16.msra.mxu0 %v1762
    %2349 = vmatprep.subr.bf16.mxu0 %v1755
    %2350 = vmatpush2.bf16.msra.mxu0 %v1754
    %2351 = vmatprep.subr.bf16.mxu0 %v1747
    %2352 = vmatpush2.bf16.msra.mxu0 %v1746
    %2353 = vmatprep.subr.bf16.mxu0 %v1739
    %2354 = vmatpush2.bf16.msra.mxu0 %v1738
    %2355 = vmatprep.subr.bf16.mxu0 %v1731
    %2356 = vmatpush2.bf16.msra.mxu0 %v1730
    %2357 = vmatprep.subr.bf16.mxu0 %v1723
    %2358 = vmatpush2.bf16.msra.mxu0 %v1722
    %2359 = vmatprep.subr.bf16.mxu0 %v1715
    %2360 = vmatpush2.bf16.msra.mxu0 %v1714
    %2361 = vmatprep.mubr.bf16.mxu0 %v449
    %2362 = vmatmul.mubr.bf16.gmra.mxu0 %v448
    %v2363 = vpop.f32.mrf.mxu0
    %v2364 = vadd.f32 %v2321, %v2363
    %v2365 = vpop.f32.mrf.mxu0
    %v2366 = vadd.f32 %v2323, %v2365
    %v2367 = vpop.f32.mrf.mxu0
    %v2368 = vadd.f32 %v2325, %v2367
    %v2369 = vpop.f32.mrf.mxu0
    %v2370 = vadd.f32 %v2327, %v2369
    %2371 = vdwg.mxu0
    %v2372 = vmax.f32 %v2106, 0.0
    %v2373 = vmax.f32 %v2108, 0.0
    %v2374 = vmax.f32 %v2192, 0.0
    %v2375 = vmax.f32 %v2194, 0.0
    %v2376 = vmax.f32 %v2278, 0.0
    %v2377 = vmax.f32 %v2280, 0.0
    %v2378 = vmax.f32 %v2364, 0.0
    %v2379 = vmax.f32 %v2366, 0.0
    %v2380 = vmax.f32 %v2110, 0.0
    %v2381 = vmax.f32 %v2112, 0.0
    %v2382 = vmax.f32 %v2196, 0.0
    %v2383 = vmax.f32 %v2198, 0.0
    %v2384 = vmax.f32 %v2282, 0.0
    %v2385 = vmax.f32 %v2284, 0.0
    %v2386 = vmax.f32 %v2368, 0.0
    %v2387 = vmax.f32 %v2370, 0.0
    %v2388 = vpack.c.bf16 %v2380, %v2372
    %v2389 = vpack.c.bf16 %v2381, %v2373
    %v2390 = vpack.c.bf16 %v2382, %v2374
    %v2391 = vpack.c.bf16 %v2383, %v2375
    %v2392 = vpack.c.bf16 %v2384, %v2376
    %v2393 = vpack.c.bf16 %v2385, %v2377
    %v2394 = vpack.c.bf16 %v2386, %v2378
    %v2395 = vpack.c.bf16 %v2387, %v2379
    %v2396 = vld [vmem:[#allocation7] sm:$0xf]
    %v2397 = vld [vmem:[#allocation7 + $0x4] sm:$0xf]
    %v2398 = vld [vmem:[#allocation7 + $0x8] sm:$0xf]
    %v2399 = vld [vmem:[#allocation7 + $0xc] sm:$0xf]
    %v2400 = vld [vmem:[#allocation7 + $0x10] sm:$0xf]
    %v2401 = vld [vmem:[#allocation7 + $0x14] sm:$0xf]
    %v2402 = vld [vmem:[#allocation7 + $0x18] sm:$0xf]
    %v2403 = vld [vmem:[#allocation7 + $0x1c] sm:$0xf]
    %v2404 = vld [vmem:[#allocation7 + $0x20] sm:$0xf]
    %v2405 = vld [vmem:[#allocation7 + $0x24] sm:$0xf]
    %v2406 = vld [vmem:[#allocation7 + $0x28] sm:$0xf]
    %v2407 = vld [vmem:[#allocation7 + $0x2c] sm:$0xf]
    %v2408 = vld [vmem:[#allocation7 + $0x30] sm:$0xf]
    %v2409 = vld [vmem:[#allocation7 + $0x34] sm:$0xf]
    %v2410 = vld [vmem:[#allocation7 + $0x38] sm:$0xf]
    %v2411 = vld [vmem:[#allocation7 + $0x3c] sm:$0xf]
    %v2412 = vld [vmem:[#allocation7 + $0x40] sm:$0xf]
    %v2413 = vld [vmem:[#allocation7 + $0x44] sm:$0xf]
    %v2414 = vld [vmem:[#allocation7 + $0x48] sm:$0xf]
    %v2415 = vld [vmem:[#allocation7 + $0x4c] sm:$0xf]
    %v2416 = vld [vmem:[#allocation7 + $0x50] sm:$0xf]
    %v2417 = vld [vmem:[#allocation7 + $0x54] sm:$0xf]
    %v2418 = vld [vmem:[#allocation7 + $0x58] sm:$0xf]
    %v2419 = vld [vmem:[#allocation7 + $0x5c] sm:$0xf]
    %v2420 = vld [vmem:[#allocation7 + $0x60] sm:$0xf]
    %v2421 = vld [vmem:[#allocation7 + $0x64] sm:$0xf]
    %v2422 = vld [vmem:[#allocation7 + $0x68] sm:$0xf]
    %v2423 = vld [vmem:[#allocation7 + $0x6c] sm:$0xf]
    %v2424 = vld [vmem:[#allocation7 + $0x70] sm:$0xf]
    %v2425 = vld [vmem:[#allocation7 + $0x74] sm:$0xf]
    %v2426 = vld [vmem:[#allocation7 + $0x78] sm:$0xf]
    %v2427 = vld [vmem:[#allocation7 + $0x7c] sm:$0xf]
    %v2428 = vld [vmem:[#allocation7 + $0x80] sm:$0xf]
    %v2429 = vld [vmem:[#allocation7 + $0x84] sm:$0xf]
    %v2430 = vld [vmem:[#allocation7 + $0x88] sm:$0xf]
    %v2431 = vld [vmem:[#allocation7 + $0x8c] sm:$0xf]
    %v2432 = vld [vmem:[#allocation7 + $0x90] sm:$0xf]
    %v2433 = vld [vmem:[#allocation7 + $0x94] sm:$0xf]
    %v2434 = vld [vmem:[#allocation7 + $0x98] sm:$0xf]
    %v2435 = vld [vmem:[#allocation7 + $0x9c] sm:$0xf]
    %v2436 = vld [vmem:[#allocation7 + $0xa0] sm:$0xf]
    %v2437 = vld [vmem:[#allocation7 + $0xa4] sm:$0xf]
    %v2438 = vld [vmem:[#allocation7 + $0xa8] sm:$0xf]
    %v2439 = vld [vmem:[#allocation7 + $0xac] sm:$0xf]
    %v2440 = vld [vmem:[#allocation7 + $0xb0] sm:$0xf]
    %v2441 = vld [vmem:[#allocation7 + $0xb4] sm:$0xf]
    %v2442 = vld [vmem:[#allocation7 + $0xb8] sm:$0xf]
    %v2443 = vld [vmem:[#allocation7 + $0xbc] sm:$0xf]
    %v2444 = vld [vmem:[#allocation7 + $0xc0] sm:$0xf]
    %v2445 = vld [vmem:[#allocation7 + $0xc4] sm:$0xf]
    %v2446 = vld [vmem:[#allocation7 + $0xc8] sm:$0xf]
    %v2447 = vld [vmem:[#allocation7 + $0xcc] sm:$0xf]
    %v2448 = vld [vmem:[#allocation7 + $0xd0] sm:$0xf]
    %v2449 = vld [vmem:[#allocation7 + $0xd4] sm:$0xf]
    %v2450 = vld [vmem:[#allocation7 + $0xd8] sm:$0xf]
    %v2451 = vld [vmem:[#allocation7 + $0xdc] sm:$0xf]
    %v2452 = vld [vmem:[#allocation7 + $0xe0] sm:$0xf]
    %v2453 = vld [vmem:[#allocation7 + $0xe4] sm:$0xf]
    %v2454 = vld [vmem:[#allocation7 + $0xe8] sm:$0xf]
    %v2455 = vld [vmem:[#allocation7 + $0xec] sm:$0xf]
    %v2456 = vld [vmem:[#allocation7 + $0xf0] sm:$0xf]
    %v2457 = vld [vmem:[#allocation7 + $0xf4] sm:$0xf]
    %v2458 = vld [vmem:[#allocation7 + $0xf8] sm:$0xf]
    %v2459 = vld [vmem:[#allocation7 + $0xfc] sm:$0xf]
    %v2460 = vld [vmem:[#allocation7 + $0x100] sm:$0xf]
    %v2461 = vld [vmem:[#allocation7 + $0x104] sm:$0xf]
    %v2462 = vld [vmem:[#allocation7 + $0x108] sm:$0xf]
    %v2463 = vld [vmem:[#allocation7 + $0x10c] sm:$0xf]
    %v2464 = vld [vmem:[#allocation7 + $0x110] sm:$0xf]
    %v2465 = vld [vmem:[#allocation7 + $0x114] sm:$0xf]
    %v2466 = vld [vmem:[#allocation7 + $0x118] sm:$0xf]
    %v2467 = vld [vmem:[#allocation7 + $0x11c] sm:$0xf]
    %v2468 = vld [vmem:[#allocation7 + $0x120] sm:$0xf]
    %v2469 = vld [vmem:[#allocation7 + $0x124] sm:$0xf]
    %v2470 = vld [vmem:[#allocation7 + $0x128] sm:$0xf]
    %v2471 = vld [vmem:[#allocation7 + $0x12c] sm:$0xf]
    %v2472 = vld [vmem:[#allocation7 + $0x130] sm:$0xf]
    %v2473 = vld [vmem:[#allocation7 + $0x134] sm:$0xf]
    %v2474 = vld [vmem:[#allocation7 + $0x138] sm:$0xf]
    %v2475 = vld [vmem:[#allocation7 + $0x13c] sm:$0xf]
    %v2476 = vld [vmem:[#allocation7 + $0x140] sm:$0xf]
    %v2477 = vld [vmem:[#allocation7 + $0x144] sm:$0xf]
    %v2478 = vld [vmem:[#allocation7 + $0x148] sm:$0xf]
    %v2479 = vld [vmem:[#allocation7 + $0x14c] sm:$0xf]
    %v2480 = vld [vmem:[#allocation7 + $0x150] sm:$0xf]
    %v2481 = vld [vmem:[#allocation7 + $0x154] sm:$0xf]
    %v2482 = vld [vmem:[#allocation7 + $0x158] sm:$0xf]
    %v2483 = vld [vmem:[#allocation7 + $0x15c] sm:$0xf]
    %v2484 = vld [vmem:[#allocation7 + $0x160] sm:$0xf]
    %v2485 = vld [vmem:[#allocation7 + $0x164] sm:$0xf]
    %v2486 = vld [vmem:[#allocation7 + $0x168] sm:$0xf]
    %v2487 = vld [vmem:[#allocation7 + $0x16c] sm:$0xf]
    %v2488 = vld [vmem:[#allocation7 + $0x170] sm:$0xf]
    %v2489 = vld [vmem:[#allocation7 + $0x174] sm:$0xf]
    %v2490 = vld [vmem:[#allocation7 + $0x178] sm:$0xf]
    %v2491 = vld [vmem:[#allocation7 + $0x17c] sm:$0xf]
    %v2492 = vld [vmem:[#allocation7 + $0x180] sm:$0xf]
    %v2493 = vld [vmem:[#allocation7 + $0x184] sm:$0xf]
    %v2494 = vld [vmem:[#allocation7 + $0x188] sm:$0xf]
    %v2495 = vld [vmem:[#allocation7 + $0x18c] sm:$0xf]
    %v2496 = vld [vmem:[#allocation7 + $0x190] sm:$0xf]
    %v2497 = vld [vmem:[#allocation7 + $0x194] sm:$0xf]
    %v2498 = vld [vmem:[#allocation7 + $0x198] sm:$0xf]
    %v2499 = vld [vmem:[#allocation7 + $0x19c] sm:$0xf]
    %v2500 = vld [vmem:[#allocation7 + $0x1a0] sm:$0xf]
    %v2501 = vld [vmem:[#allocation7 + $0x1a4] sm:$0xf]
    %v2502 = vld [vmem:[#allocation7 + $0x1a8] sm:$0xf]
    %v2503 = vld [vmem:[#allocation7 + $0x1ac] sm:$0xf]
    %v2504 = vld [vmem:[#allocation7 + $0x1b0] sm:$0xf]
    %v2505 = vld [vmem:[#allocation7 + $0x1b4] sm:$0xf]
    %v2506 = vld [vmem:[#allocation7 + $0x1b8] sm:$0xf]
    %v2507 = vld [vmem:[#allocation7 + $0x1bc] sm:$0xf]
    %v2508 = vld [vmem:[#allocation7 + $0x1c0] sm:$0xf]
    %v2509 = vld [vmem:[#allocation7 + $0x1c4] sm:$0xf]
    %v2510 = vld [vmem:[#allocation7 + $0x1c8] sm:$0xf]
    %v2511 = vld [vmem:[#allocation7 + $0x1cc] sm:$0xf]
    %v2512 = vld [vmem:[#allocation7 + $0x1d0] sm:$0xf]
    %v2513 = vld [vmem:[#allocation7 + $0x1d4] sm:$0xf]
    %v2514 = vld [vmem:[#allocation7 + $0x1d8] sm:$0xf]
    %v2515 = vld [vmem:[#allocation7 + $0x1dc] sm:$0xf]
    %v2516 = vld [vmem:[#allocation7 + $0x1e0] sm:$0xf]
    %v2517 = vld [vmem:[#allocation7 + $0x1e4] sm:$0xf]
    %v2518 = vld [vmem:[#allocation7 + $0x1e8] sm:$0xf]
    %v2519 = vld [vmem:[#allocation7 + $0x1ec] sm:$0xf]
    %v2520 = vld [vmem:[#allocation7 + $0x1f0] sm:$0xf]
    %v2521 = vld [vmem:[#allocation7 + $0x1f4] sm:$0xf]
    %v2522 = vld [vmem:[#allocation7 + $0x1f8] sm:$0xf]
    %v2523 = vld [vmem:[#allocation7 + $0x1fc] sm:$0xf]
    %v2524 = vld [vmem:[%s8] sm:$0x1]
    %v2526 = vlaneseq
    %v2527 = vshrl.u32 %v2526, 7
    %v2528 = vsub.s32 0, %v2527
    %v2529 = vrot.slane %v2524, %v2528
    %v2659 = vunpack.c.l.b16 %v2396
    %v2660 = vunpack.c.l.b16 %v2397
    %v2661 = vunpack.c.l.b16 %v2398
    %v2662 = vunpack.c.l.b16 %v2399
    %v2663 = vunpack.c.l.b16 %v2400
    %v2664 = vunpack.c.l.b16 %v2401
    %v2665 = vunpack.c.l.b16 %v2402
    %v2666 = vunpack.c.l.b16 %v2403
    %v2667 = vunpack.c.l.b16 %v2404
    %v2668 = vunpack.c.l.b16 %v2405
    %v2669 = vunpack.c.l.b16 %v2406
    %v2670 = vunpack.c.l.b16 %v2407
    %v2671 = vunpack.c.l.b16 %v2408
    %v2672 = vunpack.c.l.b16 %v2409
    %v2673 = vunpack.c.l.b16 %v2410
    %v2674 = vunpack.c.l.b16 %v2411
    %v2675 = vunpack.c.l.b16 %v2412
    %v2676 = vunpack.c.l.b16 %v2413
    %v2677 = vunpack.c.l.b16 %v2414
    %v2678 = vunpack.c.l.b16 %v2415
    %v2679 = vunpack.c.l.b16 %v2416
    %v2680 = vunpack.c.l.b16 %v2417
    %v2681 = vunpack.c.l.b16 %v2418
    %v2682 = vunpack.c.l.b16 %v2419
    %v2683 = vunpack.c.l.b16 %v2420
    %v2684 = vunpack.c.l.b16 %v2421
    %v2685 = vunpack.c.l.b16 %v2422
    %v2686 = vunpack.c.l.b16 %v2423
    %v2687 = vunpack.c.l.b16 %v2424
    %v2688 = vunpack.c.l.b16 %v2425
    %v2689 = vunpack.c.l.b16 %v2426
    %v2690 = vunpack.c.l.b16 %v2427
    %v2691 = vunpack.c.l.b16 %v2428
    %v2692 = vunpack.c.l.b16 %v2429
    %v2693 = vunpack.c.l.b16 %v2430
    %v2694 = vunpack.c.l.b16 %v2431
    %v2695 = vunpack.c.l.b16 %v2432
    %v2696 = vunpack.c.l.b16 %v2433
    %v2697 = vunpack.c.l.b16 %v2434
    %v2698 = vunpack.c.l.b16 %v2435
    %v2699 = vunpack.c.l.b16 %v2436
    %v2700 = vunpack.c.l.b16 %v2437
    %v2701 = vunpack.c.l.b16 %v2438
    %v2702 = vunpack.c.l.b16 %v2439
    %v2703 = vunpack.c.l.b16 %v2440
    %v2704 = vunpack.c.l.b16 %v2441
    %v2705 = vunpack.c.l.b16 %v2442
    %v2706 = vunpack.c.l.b16 %v2443
    %v2707 = vunpack.c.l.b16 %v2444
    %v2708 = vunpack.c.l.b16 %v2445
    %v2709 = vunpack.c.l.b16 %v2446
    %v2710 = vunpack.c.l.b16 %v2447
    %v2711 = vunpack.c.l.b16 %v2448
    %v2712 = vunpack.c.l.b16 %v2449
    %v2713 = vunpack.c.l.b16 %v2450
    %v2714 = vunpack.c.l.b16 %v2451
    %v2715 = vunpack.c.l.b16 %v2452
    %v2716 = vunpack.c.l.b16 %v2453
    %v2717 = vunpack.c.l.b16 %v2454
    %v2718 = vunpack.c.l.b16 %v2455
    %v2719 = vunpack.c.l.b16 %v2456
    %v2720 = vunpack.c.l.b16 %v2457
    %v2721 = vunpack.c.l.b16 %v2458
    %v2722 = vunpack.c.l.b16 %v2459
    %v2723 = vunpack.c.l.b16 %v2460
    %v2724 = vunpack.c.l.b16 %v2461
    %v2725 = vunpack.c.l.b16 %v2462
    %v2726 = vunpack.c.l.b16 %v2463
    %v2727 = vunpack.c.l.b16 %v2464
    %v2728 = vunpack.c.l.b16 %v2465
    %v2729 = vunpack.c.l.b16 %v2466
    %v2730 = vunpack.c.l.b16 %v2467
    %v2731 = vunpack.c.l.b16 %v2468
    %v2732 = vunpack.c.l.b16 %v2469
    %v2733 = vunpack.c.l.b16 %v2470
    %v2734 = vunpack.c.l.b16 %v2471
    %v2735 = vunpack.c.l.b16 %v2472
    %v2736 = vunpack.c.l.b16 %v2473
    %v2737 = vunpack.c.l.b16 %v2474
    %v2738 = vunpack.c.l.b16 %v2475
    %v2739 = vunpack.c.l.b16 %v2476
    %v2740 = vunpack.c.l.b16 %v2477
    %v2741 = vunpack.c.l.b16 %v2478
    %v2742 = vunpack.c.l.b16 %v2479
    %v2743 = vunpack.c.l.b16 %v2480
    %v2744 = vunpack.c.l.b16 %v2481
    %v2745 = vunpack.c.l.b16 %v2482
    %v2746 = vunpack.c.l.b16 %v2483
    %v2747 = vunpack.c.l.b16 %v2484
    %v2748 = vunpack.c.l.b16 %v2485
    %v2749 = vunpack.c.l.b16 %v2486
    %v2750 = vunpack.c.l.b16 %v2487
    %v2751 = vunpack.c.l.b16 %v2488
    %v2752 = vunpack.c.l.b16 %v2489
    %v2753 = vunpack.c.l.b16 %v2490
    %v2754 = vunpack.c.l.b16 %v2491
    %v2755 = vunpack.c.l.b16 %v2492
    %v2756 = vunpack.c.l.b16 %v2493
    %v2757 = vunpack.c.l.b16 %v2494
    %v2758 = vunpack.c.l.b16 %v2495
    %v2759 = vunpack.c.l.b16 %v2496
    %v2760 = vunpack.c.l.b16 %v2497
    %v2761 = vunpack.c.l.b16 %v2498
    %v2762 = vunpack.c.l.b16 %v2499
    %v2763 = vunpack.c.l.b16 %v2500
    %v2764 = vunpack.c.l.b16 %v2501
    %v2765 = vunpack.c.l.b16 %v2502
    %v2766 = vunpack.c.l.b16 %v2503
    %v2767 = vunpack.c.l.b16 %v2504
    %v2768 = vunpack.c.l.b16 %v2505
    %v2769 = vunpack.c.l.b16 %v2506
    %v2770 = vunpack.c.l.b16 %v2507
    %v2771 = vunpack.c.l.b16 %v2508
    %v2772 = vunpack.c.l.b16 %v2509
    %v2773 = vunpack.c.l.b16 %v2510
    %v2774 = vunpack.c.l.b16 %v2511
    %v2775 = vunpack.c.l.b16 %v2512
    %v2776 = vunpack.c.l.b16 %v2513
    %v2777 = vunpack.c.l.b16 %v2514
    %v2778 = vunpack.c.l.b16 %v2515
    %v2779 = vunpack.c.l.b16 %v2516
    %v2780 = vunpack.c.l.b16 %v2517
    %v2781 = vunpack.c.l.b16 %v2518
    %v2782 = vunpack.c.l.b16 %v2519
    %v2783 = vunpack.c.l.b16 %v2520
    %v2784 = vunpack.c.l.b16 %v2521
    %v2785 = vunpack.c.l.b16 %v2522
    %v2786 = vunpack.c.l.b16 %v2523
    %v2787 = vpack.c.b16 %v2660, %v2659
    %v2788 = vpack.c.b16 %v2662, %v2661
    %v2789 = vpack.c.b16 %v2664, %v2663
    %v2790 = vpack.c.b16 %v2666, %v2665
    %v2791 = vpack.c.b16 %v2668, %v2667
    %v2792 = vpack.c.b16 %v2670, %v2669
    %v2793 = vpack.c.b16 %v2672, %v2671
    %v2794 = vpack.c.b16 %v2674, %v2673
    %v2795 = vpack.c.b16 %v2676, %v2675
    %v2796 = vpack.c.b16 %v2678, %v2677
    %v2797 = vpack.c.b16 %v2680, %v2679
    %v2798 = vpack.c.b16 %v2682, %v2681
    %v2799 = vpack.c.b16 %v2684, %v2683
    %v2800 = vpack.c.b16 %v2686, %v2685
    %v2801 = vpack.c.b16 %v2688, %v2687
    %v2802 = vpack.c.b16 %v2690, %v2689
    %v2803 = vpack.c.b16 %v2692, %v2691
    %v2804 = vpack.c.b16 %v2694, %v2693
    %v2805 = vpack.c.b16 %v2696, %v2695
    %v2806 = vpack.c.b16 %v2698, %v2697
    %v2807 = vpack.c.b16 %v2700, %v2699
    %v2808 = vpack.c.b16 %v2702, %v2701
    %v2809 = vpack.c.b16 %v2704, %v2703
    %v2810 = vpack.c.b16 %v2706, %v2705
    %v2811 = vpack.c.b16 %v2708, %v2707
    %v2812 = vpack.c.b16 %v2710, %v2709
    %v2813 = vpack.c.b16 %v2712, %v2711
    %v2814 = vpack.c.b16 %v2714, %v2713
    %v2815 = vpack.c.b16 %v2716, %v2715
    %v2816 = vpack.c.b16 %v2718, %v2717
    %v2817 = vpack.c.b16 %v2720, %v2719
    %v2818 = vpack.c.b16 %v2722, %v2721
    %v2819 = vpack.c.b16 %v2724, %v2723
    %v2820 = vpack.c.b16 %v2726, %v2725
    %v2821 = vpack.c.b16 %v2728, %v2727
    %v2822 = vpack.c.b16 %v2730, %v2729
    %v2823 = vpack.c.b16 %v2732, %v2731
    %v2824 = vpack.c.b16 %v2734, %v2733
    %v2825 = vpack.c.b16 %v2736, %v2735
    %v2826 = vpack.c.b16 %v2738, %v2737
    %v2827 = vpack.c.b16 %v2740, %v2739
    %v2828 = vpack.c.b16 %v2742, %v2741
    %v2829 = vpack.c.b16 %v2744, %v2743
    %v2830 = vpack.c.b16 %v2746, %v2745
    %v2831 = vpack.c.b16 %v2748, %v2747
    %v2832 = vpack.c.b16 %v2750, %v2749
    %v2833 = vpack.c.b16 %v2752, %v2751
    %v2834 = vpack.c.b16 %v2754, %v2753
    %v2835 = vpack.c.b16 %v2756, %v2755
    %v2836 = vpack.c.b16 %v2758, %v2757
    %v2837 = vpack.c.b16 %v2760, %v2759
    %v2838 = vpack.c.b16 %v2762, %v2761
    %v2839 = vpack.c.b16 %v2764, %v2763
    %v2840 = vpack.c.b16 %v2766, %v2765
    %v2841 = vpack.c.b16 %v2768, %v2767
    %v2842 = vpack.c.b16 %v2770, %v2769
    %v2843 = vpack.c.b16 %v2772, %v2771
    %v2844 = vpack.c.b16 %v2774, %v2773
    %v2845 = vpack.c.b16 %v2776, %v2775
    %v2846 = vpack.c.b16 %v2778, %v2777
    %v2847 = vpack.c.b16 %v2780, %v2779
    %v2848 = vpack.c.b16 %v2782, %v2781
    %v2849 = vpack.c.b16 %v2784, %v2783
    %v2850 = vpack.c.b16 %v2786, %v2785
    %2915 = vmatprep.subr.bf16.mxu0 0
    %2916 = vmatpush1.bf16.msra.mxu0 %v2794
    %2917 = vmatprep.subr.bf16.mxu0 0
    %2918 = vmatpush1.bf16.msra.mxu0 %v2793
    %2919 = vmatprep.subr.bf16.mxu0 0
    %2920 = vmatpush1.bf16.msra.mxu0 %v2792
    %2921 = vmatprep.subr.bf16.mxu0 0
    %2922 = vmatpush1.bf16.msra.mxu0 %v2791
    %2923 = vmatprep.subr.bf16.mxu0 0
    %2924 = vmatpush1.bf16.msra.mxu0 %v2790
    %2925 = vmatprep.subr.bf16.mxu0 0
    %2926 = vmatpush1.bf16.msra.mxu0 %v2789
    %2927 = vmatprep.subr.bf16.mxu0 0
    %2928 = vmatpush1.bf16.msra.mxu0 %v2788
    %2929 = vmatprep.subr.bf16.mxu0 0
    %2930 = vmatpush1.bf16.msra.mxu0 %v2787
    %2931 = vmatprep.subr.bf16.mxu0 0
    %2932 = vmatpush2.bf16.msra.mxu0 %v2802
    %2933 = vmatprep.subr.bf16.mxu0 0
    %2934 = vmatpush2.bf16.msra.mxu0 %v2801
    %2935 = vmatprep.subr.bf16.mxu0 0
    %2936 = vmatpush2.bf16.msra.mxu0 %v2800
    %2937 = vmatprep.subr.bf16.mxu0 0
    %2938 = vmatpush2.bf16.msra.mxu0 %v2799
    %2939 = vmatprep.subr.bf16.mxu0 0
    %2940 = vmatpush2.bf16.msra.mxu0 %v2798
    %2941 = vmatprep.subr.bf16.mxu0 0
    %2942 = vmatpush2.bf16.msra.mxu0 %v2797
    %2943 = vmatprep.subr.bf16.mxu0 0
    %2944 = vmatpush2.bf16.msra.mxu0 %v2796
    %2945 = vmatprep.subr.bf16.mxu0 0
    %2946 = vmatpush2.bf16.msra.mxu0 %v2795
    %2947 = vmatprep.mubr.bf16.mxu0 %v2389
    %2948 = vmatmul.mubr.bf16.gmra.mxu0 %v2388
    %v2949 = vpop.f32.mrf.mxu0
    %v2950 = vadd.f32 %v2529, %v2949
    %v2951 = vpop.f32.mrf.mxu0
    %v2952 = vpop.f32.mrf.mxu0
    %v2953 = vadd.f32 %v2529, %v2952
    %v2954 = vpop.f32.mrf.mxu0
    %2955 = vdwg.mxu0
    %2956 = vmatprep.subr.bf16.mxu0 0
    %2957 = vmatpush1.bf16.msra.mxu0 %v2810
    %2958 = vmatprep.subr.bf16.mxu0 0
    %2959 = vmatpush1.bf16.msra.mxu0 %v2809
    %2960 = vmatprep.subr.bf16.mxu0 0
    %2961 = vmatpush1.bf16.msra.mxu0 %v2808
    %2962 = vmatprep.subr.bf16.mxu0 0
    %2963 = vmatpush1.bf16.msra.mxu0 %v2807
    %2964 = vmatprep.subr.bf16.mxu0 0
    %2965 = vmatpush1.bf16.msra.mxu0 %v2806
    %2966 = vmatprep.subr.bf16.mxu0 0
    %2967 = vmatpush1.bf16.msra.mxu0 %v2805
    %2968 = vmatprep.subr.bf16.mxu0 0
    %2969 = vmatpush1.bf16.msra.mxu0 %v2804
    %2970 = vmatprep.subr.bf16.mxu0 0
    %2971 = vmatpush1.bf16.msra.mxu0 %v2803
    %2972 = vmatprep.subr.bf16.mxu0 0
    %2973 = vmatpush2.bf16.msra.mxu0 %v2818
    %2974 = vmatprep.subr.bf16.mxu0 0
    %2975 = vmatpush2.bf16.msra.mxu0 %v2817
    %2976 = vmatprep.subr.bf16.mxu0 0
    %2977 = vmatpush2.bf16.msra.mxu0 %v2816
    %2978 = vmatprep.subr.bf16.mxu0 0
    %2979 = vmatpush2.bf16.msra.mxu0 %v2815
    %2980 = vmatprep.subr.bf16.mxu0 0
    %2981 = vmatpush2.bf16.msra.mxu0 %v2814
    %2982 = vmatprep.subr.bf16.mxu0 0
    %2983 = vmatpush2.bf16.msra.mxu0 %v2813
    %2984 = vmatprep.subr.bf16.mxu0 0
    %2985 = vmatpush2.bf16.msra.mxu0 %v2812
    %2986 = vmatprep.subr.bf16.mxu0 0
    %2987 = vmatpush2.bf16.msra.mxu0 %v2811
    %2988 = vmatprep.mubr.bf16.mxu0 %v2391
    %2989 = vmatmul.mubr.bf16.gmra.mxu0 %v2390
    %v2990 = vpop.f32.mrf.mxu0
    %v2991 = vadd.f32 %v2950, %v2990
    %v2992 = vpop.f32.mrf.mxu0
    %v2993 = vpop.f32.mrf.mxu0
    %v2994 = vadd.f32 %v2953, %v2993
    %v2995 = vpop.f32.mrf.mxu0
    %2996 = vdwg.mxu0
    %2997 = vmatprep.subr.bf16.mxu0 0
    %2998 = vmatpush1.bf16.msra.mxu0 %v2826
    %2999 = vmatprep.subr.bf16.mxu0 0
    %3000 = vmatpush1.bf16.msra.mxu0 %v2825
    %3001 = vmatprep.subr.bf16.mxu0 0
    %3002 = vmatpush1.bf16.msra.mxu0 %v2824
    %3003 = vmatprep.subr.bf16.mxu0 0
    %3004 = vmatpush1.bf16.msra.mxu0 %v2823
    %3005 = vmatprep.subr.bf16.mxu0 0
    %3006 = vmatpush1.bf16.msra.mxu0 %v2822
    %3007 = vmatprep.subr.bf16.mxu0 0
    %3008 = vmatpush1.bf16.msra.mxu0 %v2821
    %3009 = vmatprep.subr.bf16.mxu0 0
    %3010 = vmatpush1.bf16.msra.mxu0 %v2820
    %3011 = vmatprep.subr.bf16.mxu0 0
    %3012 = vmatpush1.bf16.msra.mxu0 %v2819
    %3013 = vmatprep.subr.bf16.mxu0 0
    %3014 = vmatpush2.bf16.msra.mxu0 %v2834
    %3015 = vmatprep.subr.bf16.mxu0 0
    %3016 = vmatpush2.bf16.msra.mxu0 %v2833
    %3017 = vmatprep.subr.bf16.mxu0 0
    %3018 = vmatpush2.bf16.msra.mxu0 %v2832
    %3019 = vmatprep.subr.bf16.mxu0 0
    %3020 = vmatpush2.bf16.msra.mxu0 %v2831
    %3021 = vmatprep.subr.bf16.mxu0 0
    %3022 = vmatpush2.bf16.msra.mxu0 %v2830
    %3023 = vmatprep.subr.bf16.mxu0 0
    %3024 = vmatpush2.bf16.msra.mxu0 %v2829
    %3025 = vmatprep.subr.bf16.mxu0 0
    %3026 = vmatpush2.bf16.msra.mxu0 %v2828
    %3027 = vmatprep.subr.bf16.mxu0 0
    %3028 = vmatpush2.bf16.msra.mxu0 %v2827
    %3029 = vmatprep.mubr.bf16.mxu0 %v2393
    %3030 = vmatmul.mubr.bf16.gmra.mxu0 %v2392
    %v3031 = vpop.f32.mrf.mxu0
    %v3032 = vadd.f32 %v2991, %v3031
    %v3033 = vpop.f32.mrf.mxu0
    %v3034 = vpop.f32.mrf.mxu0
    %v3035 = vadd.f32 %v2994, %v3034
    %v3036 = vpop.f32.mrf.mxu0
    %3037 = vdwg.mxu0
    %3038 = vmatprep.subr.bf16.mxu0 0
    %3039 = vmatpush1.bf16.msra.mxu0 %v2842
    %3040 = vmatprep.subr.bf16.mxu0 0
    %3041 = vmatpush1.bf16.msra.mxu0 %v2841
    %3042 = vmatprep.subr.bf16.mxu0 0
    %3043 = vmatpush1.bf16.msra.mxu0 %v2840
    %3044 = vmatprep.subr.bf16.mxu0 0
    %3045 = vmatpush1.bf16.msra.mxu0 %v2839
    %3046 = vmatprep.subr.bf16.mxu0 0
    %3047 = vmatpush1.bf16.msra.mxu0 %v2838
    %3048 = vmatprep.subr.bf16.mxu0 0
    %3049 = vmatpush1.bf16.msra.mxu0 %v2837
    %3050 = vmatprep.subr.bf16.mxu0 0
    %3051 = vmatpush1.bf16.msra.mxu0 %v2836
    %3052 = vmatprep.subr.bf16.mxu0 0
    %3053 = vmatpush1.bf16.msra.mxu0 %v2835
    %3054 = vmatprep.subr.bf16.mxu0 0
    %3055 = vmatpush2.bf16.msra.mxu0 %v2850
    %3056 = vmatprep.subr.bf16.mxu0 0
    %3057 = vmatpush2.bf16.msra.mxu0 %v2849
    %3058 = vmatprep.subr.bf16.mxu0 0
    %3059 = vmatpush2.bf16.msra.mxu0 %v2848
    %3060 = vmatprep.subr.bf16.mxu0 0
    %3061 = vmatpush2.bf16.msra.mxu0 %v2847
    %3062 = vmatprep.subr.bf16.mxu0 0
    %3063 = vmatpush2.bf16.msra.mxu0 %v2846
    %3064 = vmatprep.subr.bf16.mxu0 0
    %3065 = vmatpush2.bf16.msra.mxu0 %v2845
    %3066 = vmatprep.subr.bf16.mxu0 0
    %3067 = vmatpush2.bf16.msra.mxu0 %v2844
    %3068 = vmatprep.subr.bf16.mxu0 0
    %3069 = vmatpush2.bf16.msra.mxu0 %v2843
    %3070 = vmatprep.mubr.bf16.mxu0 %v2395
    %3071 = vmatmul.mubr.bf16.gmra.mxu0 %v2394
    %v3072 = vpop.f32.mrf.mxu0
    %v3073 = vadd.f32 %v3032, %v3072
    %v3074 = vpop.f32.mrf.mxu0
    %v3075 = vpop.f32.mrf.mxu0
    %v3076 = vadd.f32 %v3035, %v3075
    %v3077 = vpop.f32.mrf.mxu0
    %3078 = vdwg.mxu0
    %3079 = vst [vmem:[#allocation8] sm:$0xff] %v3073
    %3080 = vst [vmem:[#allocation8 + $0x8] sm:$0xff] %v3076
    // Predicated region
    $region50: #{tpu_custom_call.1} parent=1 // pred_check
      _
    $region51: #{tpu_custom_call.1} parent=1 // pred_check_branch
      %3082 = sbr.rel (0) target = $region53
    $region52: #{tpu_custom_call.1} parent=1 // pred_region
      %s3084 = ssub.s32 256, 256
      %3085 = vsyncadd [#allocation4], %s3084
      %s3086 = sshll.u32 [#allocation8], 4
      %s3087 = int_to_ptr.vmem [resolvable:$true] %s3086
      %3092 = dma.vmem_to_hbm [thread:$0]  %s3087, 256, %s9, [#allocation4], 128, 128, 8
    $region53: #{tpu_custom_call.1} parent=1 // pred_fallthru
      _
    // Predicated region
    $region54: #{tpu_custom_call.1} parent=1 // pred_check
      _
    $region55: #{tpu_custom_call.1} parent=1 // pred_check_branch
      %3094 = sbr.rel (0) target = $region57
    $region56: #{tpu_custom_call.1} parent=1 // pred_region
      %3095 = dma.done [#allocation4], 256
    $region57: #{tpu_custom_call.1} parent=1 // pred_fallthru
      _
    %3096 = vsyncpa [#allocation3], 1
    %3097 = vsyncpa [#allocation6], 1
    %3098 = vsyncpa [#allocation4], 1

</llo_original>
